<compile_context>
chip_gen: v5e
topology: v5e:2x2
jax: 0.10.0
libtpu: 0.0.40
codegen_flags: <defaults>
</compile_context>

<pallas_src>
import functools

import jax
import jax.numpy as jnp
from jax.experimental import pallas as pl
from jax.experimental.pallas import tpu as pltpu

_VMEM_LIMIT = 48 * 1024 * 1024   # > 32 MiB scoped default, < v7x 64 MiB physical


def _round_up(x, m):
    return (x + m - 1) // m * m


def _choose_n_tile(n):
    for tn in (256, 128):
        if n % tn == 0:
            return tn
    return n                     # narrow Cout (demo sizes): keep full extent


def _m_tiling(m):
    if m >= 1024:
        tm = 512
    elif m >= 512:
        tm = 256
    elif m >= 256:
        tm = 128
    else:
        tm = _round_up(max(m, 8), 8)
    return tm, _round_up(m, tm)


# ----------------------------- Pallas kernels ------------------------------

def _mm_bias_kernel(a_ref, w_ref, b_ref, o_ref, *, relu):
    """o = a @ w + b (1x1 conv, BN folded into w), optional ReLU."""
    y = jnp.dot(a_ref[...], w_ref[...], preferred_element_type=jnp.float32)
    y = y + b_ref[...]
    if relu:
        y = jnp.maximum(y, 0.0)
    o_ref[...] = y.astype(o_ref.dtype)


def _mm_bias_res_relu_kernel(a_ref, w_ref, b_ref, r_ref, o_ref):
    """o = relu(a @ w + b + r)   (conv3 + identity residual)."""
    y = jnp.dot(a_ref[...], w_ref[...], preferred_element_type=jnp.float32)
    y = y + b_ref[...] + r_ref[...].astype(jnp.float32)
    o_ref[...] = jnp.maximum(y, 0.0).astype(o_ref.dtype)


def _mm2_bias_relu_kernel(a_ref, w_ref, b_ref, a2_ref, w2_ref, o_ref):
    """o = relu(a @ w + a2 @ w2 + b)  (conv3 + fused downsample residual)."""
    y = jnp.dot(a_ref[...], w_ref[...], preferred_element_type=jnp.float32)
    y = y + jnp.dot(a2_ref[...], w2_ref[...], preferred_element_type=jnp.float32)
    o_ref[...] = jnp.maximum(y + b_ref[...], 0.0).astype(o_ref.dtype)


def _conv3x3_bias_relu_kernel(xf_ref, w_ref, b_ref, o_ref, *, wp, stride, m_out):
    """3x3 conv (pad=1, stride) + folded-BN bias + ReLU on one image.

    xf_ref: (1, Hp*Wp, Cin) flattened zero-padded image.  Tap (dy, dx) of the
    virtual output position m (= i*Wp + j) is xf[stride*m + dy*Wp + dx], so all
    nine taps are slices of the same VMEM block (no im2col in HBM).
    """
    cout = o_ref.shape[-1]
    acc = jnp.zeros((m_out, cout), jnp.float32)
    for dy in range(3):
        for dx in range(3):
            off = dy * wp + dx
            if stride == 1:
                tap = xf_ref[0, off:off + m_out, :]
            else:
                tap = xf_ref[0, pl.ds(off, m_out, stride), :]
            acc = acc + jnp.dot(tap, w_ref[dy, dx],
                                preferred_element_type=jnp.float32)
    o_ref[0] = jnp.maximum(acc + b_ref[...], 0.0).astype(o_ref.dtype)


# ------------------------------ Pallas wrappers -----------------------------

def fused_matmul(a, w, bias, *, relu=True, a2=None, w2=None, res=None,
                 out_dtype=None):
    """y = a @ w + bias [+ a2 @ w2 | + res], optional ReLU.

    a: (M, K) bf16; w: (K, Cout) bf16 (BN already folded in); bias: (Cout,) f32.
    Tiled over M (padded) and, when 128-aligned, Cout; both axes are parallel.
    """
    M, K = a.shape
    cout = w.shape[-1]
    tm, m_pad = _m_tiling(M)
    tn = _choose_n_tile(cout)
    pad = m_pad - M
    out_dtype = a.dtype if out_dtype is None else out_dtype

    def pad_m(t):
        return jnp.pad(t, ((0, pad), (0, 0))) if pad else t

    operands = [pad_m(a), w, bias.reshape(1, cout).astype(jnp.float32)]
    in_specs = [
        pl.BlockSpec((tm, K), lambda i, j: (i, 0)),
        pl.BlockSpec((K, tn), lambda i, j: (0, j)),
        pl.BlockSpec((1, tn), lambda i, j: (0, j)),
    ]
    if a2 is not None:
        k2 = a2.shape[-1]
        operands += [pad_m(a2), w2]
        in_specs += [pl.BlockSpec((tm, k2), lambda i, j: (i, 0)),
                     pl.BlockSpec((k2, tn), lambda i, j: (0, j))]
        kernel = _mm2_bias_relu_kernel
    elif res is not None:
        operands.append(pad_m(res))
        in_specs.append(pl.BlockSpec((tm, tn), lambda i, j: (i, j)))
        kernel = _mm_bias_res_relu_kernel
    else:
        kernel = functools.partial(_mm_bias_kernel, relu=relu)

    out = pl.pallas_call(
        kernel,
        out_shape=jax.ShapeDtypeStruct((m_pad, cout), out_dtype),
        grid=(m_pad // tm, cout // tn),
        in_specs=in_specs,
        out_specs=pl.BlockSpec((tm, tn), lambda i, j: (i, j)),
        compiler_params=pltpu.CompilerParams(
            dimension_semantics=("parallel", "parallel"),
            vmem_limit_bytes=_VMEM_LIMIT),
    )(*operands)
    return out[:M] if pad else out


def conv3x3_bn_relu(x_nhwc, w_folded, bias, *, stride=1):
    """3x3 / pad=1 / stride conv + folded-BN bias + ReLU, NHWC in/out."""
    N, H, W, cin = x_nhwc.shape
    cout = w_folded.shape[-1]
    Ho = (H - 1) // stride + 1
    Wo = (W - 1) // stride + 1
    Hp, Wp = H + 2, W + 2
    m_out = (Ho - 1) * Wp + Wo                     # gapped virtual output length

    xp = jnp.pad(x_nhwc, ((0, 0), (1, 1), (1, 1), (0, 0)))
    xf = xp.reshape(N, Hp * Wp, cin)               # passed to the kernel ONCE

    tn = _choose_n_tile(cout)
    kernel = functools.partial(_conv3x3_bias_relu_kernel,
                               wp=Wp, stride=stride, m_out=m_out)
    yf = pl.pallas_call(
        kernel,
        out_shape=jax.ShapeDtypeStruct((N, m_out, cout), x_nhwc.dtype),
        grid=(N, cout // tn),
        in_specs=[
            pl.BlockSpec((1, Hp * Wp, cin), lambda n, j: (n, 0, 0)),
            pl.BlockSpec((3, 3, cin, tn), lambda n, j: (0, 0, 0, j)),
            pl.BlockSpec((1, tn), lambda n, j: (0, j)),
        ],
        out_specs=pl.BlockSpec((1, m_out, tn), lambda n, j: (n, 0, j)),
        compiler_params=pltpu.CompilerParams(
            dimension_semantics=("parallel", "parallel"),
            vmem_limit_bytes=_VMEM_LIMIT),
    )(xf, w_folded, bias.reshape(1, cout).astype(jnp.float32))

    # un-gap: pad tail to Ho*Wp, reshape, drop the (Wp - Wo) junk columns.
    yf = jnp.pad(yf, ((0, 0), (0, Ho * Wp - m_out), (0, 0)))
    return yf.reshape(N, Ho, Wp, cout)[:, :, :Wo, :]


# ------------------------------- forward pass -------------------------------

def bottleneck_forward(x_nchw, params, *, stride=1):
    """Forward pass of the PyTorch Bottleneck block (inference-mode BN)."""
    # TODO(synk): training-mode BatchNorm (batch statistics) not implemented;
    # BN uses running stats folded into the conv weights.
    x = jnp.transpose(x_nchw, (0, 2, 3, 1)).astype(jnp.bfloat16)   # NCHW->NHWC
    N, H, W, cin = x.shape
    planes = params["w1"].shape[-1]
    cout = 4 * planes

    # Fold BN scale into the conv weights once at trace time; biases stay f32.
    w1f = (params["w1"] * params["s1"]).astype(jnp.bfloat16)
    w2f = (params["w2"] * params["s2"]).astype(jnp.bfloat16)
    w3f = (params["w3"] * params["s3"]).astype(jnp.bfloat16)

    # conv1 (1x1) + bn1 + relu
    h1 = fused_matmul(x.reshape(N * H * W, cin), w1f, params["b1"], relu=True)
    h1 = h1.reshape(N, H, W, planes)

    # conv2 (3x3, pad=1, stride) + bn2 + relu   (taps formed in-kernel)
    h2 = conv3x3_bn_relu(h1, w2f, params["b2"], stride=stride)
    Ho, Wo = h2.shape[1], h2.shape[2]
    h2f = h2.reshape(N * Ho * Wo, planes)

    # conv3 (1x1) + bn3 + residual + relu; downsample 1x1 conv fused in when
    # the projection shortcut is active.
    if stride != 1 or cin != cout:
        wdf = (params["wd"] * params["sd"]).astype(jnp.bfloat16)
        xd = x[:, ::stride, ::stride, :].reshape(N * Ho * Wo, cin)
        out = fused_matmul(h2f, w3f, params["b3"] + params["bd"], relu=True,
                           a2=xd, w2=wdf, out_dtype=jnp.float32)
    else:
        res = x.reshape(N * Ho * Wo, cin)
        out = fused_matmul(h2f, w3f, params["b3"], relu=True, res=res,
                           out_dtype=jnp.float32)

    out = out.reshape(N, Ho, Wo, cout)
    return jnp.transpose(out, (0, 3, 1, 2))                        # NHWC->NCHW


# ------------------------------ params / reference --------------------------

def init_params(key, in_planes, planes):
    """Deterministic synthetic weights; BN folded to (scale, bias), eps=1e-5."""
    exp = 4
    ks = jax.random.split(key, 20)

    def bn(kg, kb, km, kv, c):
        gamma = 1.0 + 0.1 * jax.random.normal(kg, (c,), jnp.float32)
        beta = 0.1 * jax.random.normal(kb, (c,), jnp.float32)
        mean = 0.1 * jax.random.normal(km, (c,), jnp.float32)
        var = jax.random.uniform(kv, (c,), jnp.float32, 0.5, 1.5)
        scale = gamma / jnp.sqrt(var + 1e-5)
        bias = beta - mean * scale
        return scale, bias

    p = {}
    p["w1"] = 0.2 * jax.random.normal(ks[0], (in_planes, planes), jnp.float32)
    p["s1"], p["b1"] = bn(ks[1], ks[2], ks[3], ks[4], planes)
    p["w2"] = 0.2 * jax.random.normal(ks[5], (3, 3, planes, planes), jnp.float32)
    p["s2"], p["b2"] = bn(ks[6], ks[7], ks[8], ks[9], planes)
    p["w3"] = 0.2 * jax.random.normal(ks[10], (planes, exp * planes), jnp.float32)
    p["s3"], p["b3"] = bn(ks[11], ks[12], ks[13], ks[14], exp * planes)
    p["wd"] = 0.2 * jax.random.normal(ks[15], (in_planes, exp * planes), jnp.float32)
    p["sd"], p["bd"] = bn(ks[16], ks[17], ks[18], ks[19], exp * planes)
    return p


def bottleneck_reference(x_nchw, p, *, stride=1, mixed=False):
    """lax-conv reference with folded BN.  mixed=True mirrors the kernel's
    bf16-input / f32-accumulate precision (same rounding points)."""
    cast = (lambda t: t.astype(jnp.bfloat16)) if mixed else (lambda t: t)
    x = cast(jnp.transpose(x_nchw, (0, 2, 3, 1)))

    def conv(a, w, s, pad):
        return jax.lax.conv_general_dilated(
            a, w, (s, s), pad, dimension_numbers=("NHWC", "HWIO", "NHWC"),
            preferred_element_type=jnp.float32)

    w1 = cast(p["w1"] * p["s1"])[None, None]
    w2 = cast(p["w2"] * p["s2"])
    w3 = cast(p["w3"] * p["s3"])[None, None]
    h = cast(jax.nn.relu(conv(x, w1, 1, "VALID") + p["b1"]))
    h = cast(jax.nn.relu(conv(h, w2, stride, ((1, 1), (1, 1))) + p["b2"]))
    h = conv(h, w3, 1, "VALID") + p["b3"]
    cin, cout = x.shape[-1], h.shape[-1]
    if stride != 1 or cin != cout:
        wd = cast(p["wd"] * p["sd"])[None, None]
        res = conv(x, wd, stride, "VALID") + p["bd"]
    else:
        res = x.astype(jnp.float32)
    out = jax.nn.relu(h + res)
    return jnp.transpose(out, (0, 3, 1, 2))


if __name__ == "__main__":
    key = jax.random.PRNGKey(0)
    kx, kp = jax.random.split(key)

    N, in_planes, H, W = 2, 4, 16, 16
    planes, stride = 4, 1      # expansion*planes=16 != in_planes -> downsample path active

    x = jax.random.normal(kx, (N, in_planes, H, W), jnp.float32)   # NCHW like PyTorch
    params = init_params(kp, in_planes, planes)

    fwd = jax.jit(functools.partial(bottleneck_forward, stride=stride))
    out = jax.block_until_ready(fwd(x, params))

    assert out.shape == (N, 4 * planes, H // stride, W // stride), out.shape

    ref_mixed = bottleneck_reference(x, params, stride=stride, mixed=True)
    ref_f32 = bottleneck_reference(x, params, stride=stride, mixed=False)
    assert jnp.allclose(out, ref_mixed, atol=2e-2, rtol=2e-2), \
        float(jnp.max(jnp.abs(out - ref_mixed)))
    assert jnp.allclose(out, ref_f32, atol=1e-1, rtol=1e-1), \
        float(jnp.max(jnp.abs(out - ref_f32)))
    print("KERNEL_OK")
</pallas_src>

<mosaic_0001>
module attributes {stable_mosaic.version = 11 : i64} {
  func.func @_mm_bias_kernel(%arg0: i32, %arg1: i32, %arg2: memref<256x4xbf16, #tpu.memory_space<vmem>>, %arg3: memref<4x4xbf16, #tpu.memory_space<vmem>>, %arg4: memref<1x4xf32, #tpu.memory_space<vmem>>, %arg5: memref<256x4xbf16, #tpu.memory_space<vmem>>) attributes {dimension_semantics = [#tpu.dimension_semantics<parallel>, #tpu.dimension_semantics<parallel>], iteration_bounds = array<i64: 2, 1>, scalar_prefetch = 0 : i64, scratch_operands = 0 : i64, tpu.core_type = #tpu.core_type<tc>, window_params = [{transform_indices = @transform_0, window_bounds = array<i64: 256, 4>}, {transform_indices = @transform_1, window_bounds = array<i64: 4, 4>}, {transform_indices = @transform_2, window_bounds = array<i64: 1, 4>}, {transform_indices = @transform_3, window_bounds = array<i64: 256, 4>}]} {
    %c0 = arith.constant 0 : index
    %c0_0 = arith.constant 0 : index
    %0 = vector.load %arg2[%c0, %c0_0] : memref<256x4xbf16, #tpu.memory_space<vmem>>, vector<256x4xbf16>
    %c0_1 = arith.constant 0 : index
    %c0_2 = arith.constant 0 : index
    %1 = vector.load %arg3[%c0_1, %c0_2] : memref<4x4xbf16, #tpu.memory_space<vmem>>, vector<4x4xbf16>
    %cst = arith.constant dense<0.000000e+00> : vector<256x4xf32>
    %2 = tpu.matmul %0, %1, %cst {dimension_numbers = #tpu.dot_dimension_numbers<[1], [0], [0], [1], [0, 0, 1, 1], [], []>} : vector<256x4xbf16>, vector<4x4xbf16>, vector<256x4xf32> -> vector<256x4xf32>
    %c0_3 = arith.constant 0 : index
    %c0_4 = arith.constant 0 : index
    %3 = vector.load %arg4[%c0_3, %c0_4] : memref<1x4xf32, #tpu.memory_space<vmem>>, vector<1x4xf32>
    %4 = vector.broadcast %3 : vector<1x4xf32> to vector<256x4xf32>
    %5 = arith.addf %2, %4 : vector<256x4xf32>
    %cst_5 = arith.constant 0.000000e+00 : f32
    %6 = vector.broadcast %cst_5 : f32 to vector<256x4xf32>
    %7 = arith.maximumf %5, %6 : vector<256x4xf32>
    %8 = arith.truncf %7 : vector<256x4xf32> to vector<256x4xbf16>
    %c0_6 = arith.constant 0 : index
    %c0_7 = arith.constant 0 : index
    %9 = vector.load %arg5[%c0_6, %c0_7] : memref<256x4xbf16, #tpu.memory_space<vmem>>, vector<256x4xbf16>
    tpu.vector_store %arg5[%c0_6, %c0_7], %8 {strides = array<i32>} : memref<256x4xbf16, #tpu.memory_space<vmem>>, vector<256x4xbf16>,
    return
  }
  func.func @transform_0(%arg0: i32, %arg1: i32) -> (i32, i32) {
    %c0_i32 = arith.constant 0 : i32
    %c0_i32_0 = arith.constant 0 : i32
    return %arg0, %c0_i32 : i32, i32
  }
  func.func @transform_1(%arg0: i32, %arg1: i32) -> (i32, i32) {
    %c0_i32 = arith.constant 0 : i32
    %c0_i32_0 = arith.constant 0 : i32
    return %c0_i32, %arg1 : i32, i32
  }
  func.func @transform_2(%arg0: i32, %arg1: i32) -> (i32, i32) {
    %c0_i32 = arith.constant 0 : i32
    %c0_i32_0 = arith.constant 0 : i32
    return %c0_i32, %arg1 : i32, i32
  }
  func.func @transform_3(%arg0: i32, %arg1: i32) -> (i32, i32) {
    %c0_i32 = arith.constant 0 : i32
    return %arg0, %arg1 : i32, i32
  }
}

module attributes {stable_mosaic.version = 11 : i64} {
  func.func @_conv3x3_bias_relu_kernel(%arg0: i32, %arg1: i32, %arg2: memref<1x324x4xbf16, #tpu.memory_space<vmem>>, %arg3: memref<3x3x4x4xbf16, #tpu.memory_space<vmem>>, %arg4: memref<1x4xf32, #tpu.memory_space<vmem>>, %arg5: memref<1x286x4xbf16, #tpu.memory_space<vmem>>) attributes {dimension_semantics = [#tpu.dimension_semantics<parallel>, #tpu.dimension_semantics<parallel>], iteration_bounds = array<i64: 2, 1>, scalar_prefetch = 0 : i64, scratch_operands = 0 : i64, tpu.core_type = #tpu.core_type<tc>, window_params = [{transform_indices = @transform_0, window_bounds = array<i64: 1, 324, 4>}, {transform_indices = @transform_1, window_bounds = array<i64: 3, 3, 4, 4>}, {transform_indices = @transform_2, window_bounds = array<i64: 1, 4>}, {transform_indices = @transform_3, window_bounds = array<i64: 1, 286, 4>}]} {
    %cst = arith.constant 0.000000e+00 : f32
    %0 = vector.broadcast %cst : f32 to vector<286x4xf32>
    %c0 = arith.constant 0 : index
    %c0_0 = arith.constant 0 : index
    %c0_1 = arith.constant 0 : index
    %1 = vector.load %arg2[%c0, %c0_0, %c0_1] : memref<1x324x4xbf16, #tpu.memory_space<vmem>>, vector<1x286x4xbf16>
    %2 = vector.shape_cast %1 : vector<1x286x4xbf16> to vector<286x4xbf16>
    %c0_2 = arith.constant 0 : index
    %c0_3 = arith.constant 0 : index
    %c0_4 = arith.constant 0 : index
    %c0_5 = arith.constant 0 : index
    %3 = vector.load %arg3[%c0_2, %c0_3, %c0_4, %c0_5] : memref<3x3x4x4xbf16, #tpu.memory_space<vmem>>, vector<1x1x4x4xbf16>
    %4 = vector.shape_cast %3 : vector<1x1x4x4xbf16> to vector<4x4xbf16>
    %cst_6 = arith.constant dense<0.000000e+00> : vector<286x4xf32>
    %5 = tpu.matmul %2, %4, %cst_6 {dimension_numbers = #tpu.dot_dimension_numbers<[1], [0], [0], [1], [0, 0, 1, 1], [], []>} : vector<286x4xbf16>, vector<4x4xbf16>, vector<286x4xf32> -> vector<286x4xf32>
    %6 = arith.addf %0, %5 : vector<286x4xf32>
    %c0_7 = arith.constant 0 : index
    %c1 = arith.constant 1 : index
    %c0_8 = arith.constant 0 : index
    %7 = vector.load %arg2[%c0_7, %c1, %c0_8] : memref<1x324x4xbf16, #tpu.memory_space<vmem>>, vector<1x286x4xbf16>
    %8 = vector.shape_cast %7 : vector<1x286x4xbf16> to vector<286x4xbf16>
    %c0_9 = arith.constant 0 : index
    %c1_10 = arith.constant 1 : index
    %c0_11 = arith.constant 0 : index
    %c0_12 = arith.constant 0 : index
    %9 = vector.load %arg3[%c0_9, %c1_10, %c0_11, %c0_12] : memref<3x3x4x4xbf16, #tpu.memory_space<vmem>>, vector<1x1x4x4xbf16>
    %10 = vector.shape_cast %9 : vector<1x1x4x4xbf16> to vector<4x4xbf16>
    %cst_13 = arith.constant dense<0.000000e+00> : vector<286x4xf32>
    %11 = tpu.matmul %8, %10, %cst_13 {dimension_numbers = #tpu.dot_dimension_numbers<[1], [0], [0], [1], [0, 0, 1, 1], [], []>} : vector<286x4xbf16>, vector<4x4xbf16>, vector<286x4xf32> -> vector<286x4xf32>
    %12 = arith.addf %6, %11 : vector<286x4xf32>
    %c0_14 = arith.constant 0 : index
    %c2 = arith.constant 2 : index
    %c0_15 = arith.constant 0 : index
    %13 = vector.load %arg2[%c0_14, %c2, %c0_15] : memref<1x324x4xbf16, #tpu.memory_space<vmem>>, vector<1x286x4xbf16>
    %14 = vector.shape_cast %13 : vector<1x286x4xbf16> to vector<286x4xbf16>
    %c0_16 = arith.constant 0 : index
    %c2_17 = arith.constant 2 : index
    %c0_18 = arith.constant 0 : index
    %c0_19 = arith.constant 0 : index
    %15 = vector.load %arg3[%c0_16, %c2_17, %c0_18, %c0_19] : memref<3x3x4x4xbf16, #tpu.memory_space<vmem>>, vector<1x1x4x4xbf16>
    %16 = vector.shape_cast %15 : vector<1x1x4x4xbf16> to vector<4x4xbf16>
    %cst_20 = arith.constant dense<0.000000e+00> : vector<286x4xf32>
    %17 = tpu.matmul %14, %16, %cst_20 {dimension_numbers = #tpu.dot_dimension_numbers<[1], [0], [0], [1], [0, 0, 1, 1], [], []>} : vector<286x4xbf16>, vector<4x4xbf16>, vector<286x4xf32> -> vector<286x4xf32>
    %18 = arith.addf %12, %17 : vector<286x4xf32>
    %c0_21 = arith.constant 0 : index
    %c18 = arith.constant 18 : index
    %c0_22 = arith.constant 0 : index
    %19 = vector.load %arg2[%c0_21, %c18, %c0_22] : memref<1x324x4xbf16, #tpu.memory_space<vmem>>, vector<1x286x4xbf16>
    %20 = vector.shape_cast %19 : vector<1x286x4xbf16> to vector<286x4xbf16>
    %c1_23 = arith.constant 1 : index
    %c0_24 = arith.constant 0 : index
    %c0_25 = arith.constant 0 : index
    %c0_26 = arith.constant 0 : index
    %21 = vector.load %arg3[%c1_23, %c0_24, %c0_25, %c0_26] : memref<3x3x4x4xbf16, #tpu.memory_space<vmem>>, vector<1x1x4x4xbf16>
    %22 = vector.shape_cast %21 : vector<1x1x4x4xbf16> to vector<4x4xbf16>
    %cst_27 = arith.constant dense<0.000000e+00> : vector<286x4xf32>
    %23 = tpu.matmul %20, %22, %cst_27 {dimension_numbers = #tpu.dot_dimension_numbers<[1], [0], [0], [1], [0, 0, 1, 1], [], []>} : vector<286x4xbf16>, vector<4x4xbf16>, vector<286x4xf32> -> vector<286x4xf32>
    %24 = arith.addf %18, %23 : vector<286x4xf32>
    %c0_28 = arith.constant 0 : index
    %c19 = arith.constant 19 : index
    %c0_29 = arith.constant 0 : index
    %25 = vector.load %arg2[%c0_28, %c19, %c0_29] : memref<1x324x4xbf16, #tpu.memory_space<vmem>>, vector<1x286x4xbf16>
    %26 = vector.shape_cast %25 : vector<1x286x4xbf16> to vector<286x4xbf16>
    %c1_30 = arith.constant 1 : index
    %c1_31 = arith.constant 1 : index
    %c0_32 = arith.constant 0 : index
    %c0_33 = arith.constant 0 : index
    %27 = vector.load %arg3[%c1_30, %c1_31, %c0_32, %c0_33] : memref<3x3x4x4xbf16, #tpu.memory_space<vmem>>, vector<1x1x4x4xbf16>
    %28 = vector.shape_cast %27 : vector<1x1x4x4xbf16> to vector<4x4xbf16>
    %cst_34 = arith.constant dense<0.000000e+00> : vector<286x4xf32>
    %29 = tpu.matmul %26, %28, %cst_34 {dimension_numbers = #tpu.dot_dimension_numbers<[1], [0], [0], [1], [0, 0, 1, 1], [], []>} : vector<286x4xbf16>, vector<4x4xbf16>, vector<286x4xf32> -> vector<286x4xf32>
    %30 = arith.addf %24, %29 : vector<286x4xf32>
    %c0_35 = arith.constant 0 : index
    %c20 = arith.constant 20 : index
    %c0_36 = arith.constant 0 : index
    %31 = vector.load %arg2[%c0_35, %c20, %c0_36] : memref<1x324x4xbf16, #tpu.memory_space<vmem>>, vector<1x286x4xbf16>
    %32 = vector.shape_cast %31 : vector<1x286x4xbf16> to vector<286x4xbf16>
    %c1_37 = arith.constant 1 : index
    %c2_38 = arith.constant 2 : index
    %c0_39 = arith.constant 0 : index
    %c0_40 = arith.constant 0 : index
    %33 = vector.load %arg3[%c1_37, %c2_38, %c0_39, %c0_40] : memref<3x3x4x4xbf16, #tpu.memory_space<vmem>>, vector<1x1x4x4xbf16>
    %34 = vector.shape_cast %33 : vector<1x1x4x4xbf16> to vector<4x4xbf16>
    %cst_41 = arith.constant dense<0.000000e+00> : vector<286x4xf32>
    %35 = tpu.matmul %32, %34, %cst_41 {dimension_numbers = #tpu.dot_dimension_numbers<[1], [0], [0], [1], [0, 0, 1, 1], [], []>} : vector<286x4xbf16>, vector<4x4xbf16>, vector<286x4xf32> -> vector<286x4xf32>
    %36 = arith.addf %30, %35 : vector<286x4xf32>
    %c0_42 = arith.constant 0 : index
    %c36 = arith.constant 36 : index
    %c0_43 = arith.constant 0 : index
    %37 = vector.load %arg2[%c0_42, %c36, %c0_43] : memref<1x324x4xbf16, #tpu.memory_space<vmem>>, vector<1x286x4xbf16>
    %38 = vector.shape_cast %37 : vector<1x286x4xbf16> to vector<286x4xbf16>
    %c2_44 = arith.constant 2 : index
    %c0_45 = arith.constant 0 : index
    %c0_46 = arith.constant 0 : index
    %c0_47 = arith.constant 0 : index
    %39 = vector.load %arg3[%c2_44, %c0_45, %c0_46, %c0_47] : memref<3x3x4x4xbf16, #tpu.memory_space<vmem>>, vector<1x1x4x4xbf16>
    %40 = vector.shape_cast %39 : vector<1x1x4x4xbf16> to vector<4x4xbf16>
    %cst_48 = arith.constant dense<0.000000e+00> : vector<286x4xf32>
    %41 = tpu.matmul %38, %40, %cst_48 {dimension_numbers = #tpu.dot_dimension_numbers<[1], [0], [0], [1], [0, 0, 1, 1], [], []>} : vector<286x4xbf16>, vector<4x4xbf16>, vector<286x4xf32> -> vector<286x4xf32>
    %42 = arith.addf %36, %41 : vector<286x4xf32>
    %c0_49 = arith.constant 0 : index
    %c37 = arith.constant 37 : index
    %c0_50 = arith.constant 0 : index
    %43 = vector.load %arg2[%c0_49, %c37, %c0_50] : memref<1x324x4xbf16, #tpu.memory_space<vmem>>, vector<1x286x4xbf16>
    %44 = vector.shape_cast %43 : vector<1x286x4xbf16> to vector<286x4xbf16>
    %c2_51 = arith.constant 2 : index
    %c1_52 = arith.constant 1 : index
    %c0_53 = arith.constant 0 : index
    %c0_54 = arith.constant 0 : index
    %45 = vector.load %arg3[%c2_51, %c1_52, %c0_53, %c0_54] : memref<3x3x4x4xbf16, #tpu.memory_space<vmem>>, vector<1x1x4x4xbf16>
    %46 = vector.shape_cast %45 : vector<1x1x4x4xbf16> to vector<4x4xbf16>
    %cst_55 = arith.constant dense<0.000000e+00> : vector<286x4xf32>
    %47 = tpu.matmul %44, %46, %cst_55 {dimension_numbers = #tpu.dot_dimension_numbers<[1], [0], [0], [1], [0, 0, 1, 1], [], []>} : vector<286x4xbf16>, vector<4x4xbf16>, vector<286x4xf32> -> vector<286x4xf32>
    %48 = arith.addf %42, %47 : vector<286x4xf32>
    %c0_56 = arith.constant 0 : index
    %c38 = arith.constant 38 : index
    %c0_57 = arith.constant 0 : index
    %49 = vector.load %arg2[%c0_56, %c38, %c0_57] : memref<1x324x4xbf16, #tpu.memory_space<vmem>>, vector<1x286x4xbf16>
    %50 = vector.shape_cast %49 : vector<1x286x4xbf16> to vector<286x4xbf16>
    %c2_58 = arith.constant 2 : index
    %c2_59 = arith.constant 2 : index
    %c0_60 = arith.constant 0 : index
    %c0_61 = arith.constant 0 : index
    %51 = vector.load %arg3[%c2_58, %c2_59, %c0_60, %c0_61] : memref<3x3x4x4xbf16, #tpu.memory_space<vmem>>, vector<1x1x4x4xbf16>
    %52 = vector.shape_cast %51 : vector<1x1x4x4xbf16> to vector<4x4xbf16>
    %cst_62 = arith.constant dense<0.000000e+00> : vector<286x4xf32>
    %53 = tpu.matmul %50, %52, %cst_62 {dimension_numbers = #tpu.dot_dimension_numbers<[1], [0], [0], [1], [0, 0, 1, 1], [], []>} : vector<286x4xbf16>, vector<4x4xbf16>, vector<286x4xf32> -> vector<286x4xf32>
    %54 = arith.addf %48, %53 : vector<286x4xf32>
    %c0_63 = arith.constant 0 : index
    %c0_64 = arith.constant 0 : index
    %55 = vector.load %arg4[%c0_63, %c0_64] : memref<1x4xf32, #tpu.memory_space<vmem>>, vector<1x4xf32>
    %56 = vector.broadcast %55 : vector<1x4xf32> to vector<286x4xf32>
    %57 = arith.addf %54, %56 : vector<286x4xf32>
    %cst_65 = arith.constant 0.000000e+00 : f32
    %58 = vector.broadcast %cst_65 : f32 to vector<286x4xf32>
    %59 = arith.maximumf %57, %58 : vector<286x4xf32>
    %60 = arith.truncf %59 : vector<286x4xf32> to vector<286x4xbf16>
    %c0_66 = arith.constant 0 : index
    %c0_67 = arith.constant 0 : index
    %c0_68 = arith.constant 0 : index
    %61 = vector.load %arg5[%c0_66, %c0_67, %c0_68] : memref<1x286x4xbf16, #tpu.memory_space<vmem>>, vector<1x286x4xbf16>
    %62 = vector.shape_cast %61 : vector<1x286x4xbf16> to vector<286x4xbf16>
    %63 = vector.shape_cast %60 : vector<286x4xbf16> to vector<1x286x4xbf16>
    tpu.vector_store %arg5[%c0_66, %c0_67, %c0_68], %63 {strides = array<i32>} : memref<1x286x4xbf16, #tpu.memory_space<vmem>>, vector<1x286x4xbf16>,
    return
  }
  func.func @transform_0(%arg0: i32, %arg1: i32) -> (i32, i32, i32) {
    %c0_i32 = arith.constant 0 : i32
    %c0_i32_0 = arith.constant 0 : i32
    %c0_i32_1 = arith.constant 0 : i32
    return %arg0, %c0_i32, %c0_i32_0 : i32, i32, i32
  }
  func.func @transform_1(%arg0: i32, %arg1: i32) -> (i32, i32, i32, i32) {
    %c0_i32 = arith.constant 0 : i32
    %c0_i32_0 = arith.constant 0 : i32
    %c0_i32_1 = arith.constant 0 : i32
    %c0_i32_2 = arith.constant 0 : i32
    return %c0_i32, %c0_i32_0, %c0_i32_1, %arg1 : i32, i32, i32, i32
  }
  func.func @transform_2(%arg0: i32, %arg1: i32) -> (i32, i32) {
    %c0_i32 = arith.constant 0 : i32
    %c0_i32_0 = arith.constant 0 : i32
    return %c0_i32, %arg1 : i32, i32
  }
  func.func @transform_3(%arg0: i32, %arg1: i32) -> (i32, i32, i32) {
    %c0_i32 = arith.constant 0 : i32
    %c0_i32_0 = arith.constant 0 : i32
    return %arg0, %c0_i32, %arg1 : i32, i32, i32
  }
}

module attributes {stable_mosaic.version = 11 : i64} {
  func.func @_mm2_bias_relu_kernel(%arg0: i32, %arg1: i32, %arg2: memref<256x4xbf16, #tpu.memory_space<vmem>>, %arg3: memref<4x16xbf16, #tpu.memory_space<vmem>>, %arg4: memref<1x16xf32, #tpu.memory_space<vmem>>, %arg5: memref<256x4xbf16, #tpu.memory_space<vmem>>, %arg6: memref<4x16xbf16, #tpu.memory_space<vmem>>, %arg7: memref<256x16xf32, #tpu.memory_space<vmem>>) attributes {dimension_semantics = [#tpu.dimension_semantics<parallel>, #tpu.dimension_semantics<parallel>], iteration_bounds = array<i64: 2, 1>, scalar_prefetch = 0 : i64, scratch_operands = 0 : i64, tpu.core_type = #tpu.core_type<tc>, window_params = [{transform_indices = @transform_0, window_bounds = array<i64: 256, 4>}, {transform_indices = @transform_1, window_bounds = array<i64: 4, 16>}, {transform_indices = @transform_2, window_bounds = array<i64: 1, 16>}, {transform_indices = @transform_3, window_bounds = array<i64: 256, 4>}, {transform_indices = @transform_4, window_bounds = array<i64: 4, 16>}, {transform_indices = @transform_5, window_bounds = array<i64: 256, 16>}]} {
    %c0 = arith.constant 0 : index
    %c0_0 = arith.constant 0 : index
    %0 = vector.load %arg2[%c0, %c0_0] : memref<256x4xbf16, #tpu.memory_space<vmem>>, vector<256x4xbf16>
    %c0_1 = arith.constant 0 : index
    %c0_2 = arith.constant 0 : index
    %1 = vector.load %arg3[%c0_1, %c0_2] : memref<4x16xbf16, #tpu.memory_space<vmem>>, vector<4x16xbf16>
    %cst = arith.constant dense<0.000000e+00> : vector<256x16xf32>
    %2 = tpu.matmul %0, %1, %cst {dimension_numbers = #tpu.dot_dimension_numbers<[1], [0], [0], [1], [0, 0, 1, 1], [], []>} : vector<256x4xbf16>, vector<4x16xbf16>, vector<256x16xf32> -> vector<256x16xf32>
    %c0_3 = arith.constant 0 : index
    %c0_4 = arith.constant 0 : index
    %3 = vector.load %arg5[%c0_3, %c0_4] : memref<256x4xbf16, #tpu.memory_space<vmem>>, vector<256x4xbf16>
    %c0_5 = arith.constant 0 : index
    %c0_6 = arith.constant 0 : index
    %4 = vector.load %arg6[%c0_5, %c0_6] : memref<4x16xbf16, #tpu.memory_space<vmem>>, vector<4x16xbf16>
    %cst_7 = arith.constant dense<0.000000e+00> : vector<256x16xf32>
    %5 = tpu.matmul %3, %4, %cst_7 {dimension_numbers = #tpu.dot_dimension_numbers<[1], [0], [0], [1], [0, 0, 1, 1], [], []>} : vector<256x4xbf16>, vector<4x16xbf16>, vector<256x16xf32> -> vector<256x16xf32>
    %6 = arith.addf %2, %5 : vector<256x16xf32>
    %c0_8 = arith.constant 0 : index
    %c0_9 = arith.constant 0 : index
    %7 = vector.load %arg4[%c0_8, %c0_9] : memref<1x16xf32, #tpu.memory_space<vmem>>, vector<1x16xf32>
    %8 = vector.broadcast %7 : vector<1x16xf32> to vector<256x16xf32>
    %9 = arith.addf %6, %8 : vector<256x16xf32>
    %cst_10 = arith.constant 0.000000e+00 : f32
    %10 = vector.broadcast %cst_10 : f32 to vector<256x16xf32>
    %11 = arith.maximumf %9, %10 : vector<256x16xf32>
    %c0_11 = arith.constant 0 : index
    %c0_12 = arith.constant 0 : index
    %12 = vector.load %arg7[%c0_11, %c0_12] : memref<256x16xf32, #tpu.memory_space<vmem>>, vector<256x16xf32>
    tpu.vector_store %arg7[%c0_11, %c0_12], %11 {strides = array<i32>} : memref<256x16xf32, #tpu.memory_space<vmem>>, vector<256x16xf32>,
    return
  }
  func.func @transform_0(%arg0: i32, %arg1: i32) -> (i32, i32) {
    %c0_i32 = arith.constant 0 : i32
    %c0_i32_0 = arith.constant 0 : i32
    return %arg0, %c0_i32 : i32, i32
  }
  func.func @transform_1(%arg0: i32, %arg1: i32) -> (i32, i32) {
    %c0_i32 = arith.constant 0 : i32
    %c0_i32_0 = arith.constant 0 : i32
    return %c0_i32, %arg1 : i32, i32
  }
  func.func @transform_2(%arg0: i32, %arg1: i32) -> (i32, i32) {
    %c0_i32 = arith.constant 0 : i32
    %c0_i32_0 = arith.constant 0 : i32
    return %c0_i32, %arg1 : i32, i32
  }
  func.func @transform_3(%arg0: i32, %arg1: i32) -> (i32, i32) {
    %c0_i32 = arith.constant 0 : i32
    %c0_i32_0 = arith.constant 0 : i32
    return %arg0, %c0_i32 : i32, i32
  }
  func.func @transform_4(%arg0: i32, %arg1: i32) -> (i32, i32) {
    %c0_i32 = arith.constant 0 : i32
    %c0_i32_0 = arith.constant 0 : i32
    return %c0_i32, %arg1 : i32, i32
  }
  func.func @transform_5(%arg0: i32, %arg1: i32) -> (i32, i32) {
    %c0_i32 = arith.constant 0 : i32
    return %arg0, %arg1 : i32, i32
  }
}

</mosaic_0001>

<llo_original>
// kernel: bottleneck_forward.3
$region0: #{bottleneck_forward.3}
  #allocation0 [shape = 'u32[]', space=smem, size = 0x4, offset = 0x4, fixed_abs, tag = 'smem constant byte address 0x4 - core index']
  #allocation1 [shape = 'u32[72,128]{1,0:T(1,128)}', space=vmem, size = 0x9000, scoped, tag = 'internal scratch']
  %s0 = inlined_call_operand.vmem [shape: bf16[512,4], index: 0, kind: input, shape index: {}]
  %s1 = inlined_call_operand.vmem [shape: bf16[4,4], index: 1, kind: input, shape index: {}]
  %s2 = inlined_call_operand.vmem [shape: f32[1,4], index: 2, kind: input, shape index: {}]
  %s3 = inlined_call_operand.vmem [shape: bf16[512,4], index: 3, kind: output, shape index: {}]
  %s4 = sld [smem:[#allocation0]]
  $region45: #{bottleneck_forward.3} parent=0
    _
  %s6 = ssub.s32 1, %s4
  %s7 = scalar_select 0, %s6, %s4
  loop: start=0, step=1, limit=4
  $region2: #{bottleneck_forward.3} parent=0 // loop_pre_header
    _
  $region3: #{bottleneck_forward.3} parent=0 // loop_header
    %s9 = sphi 0, %s13
    %p10 = scmp.ge.s32.totalorder %s9, 4
    %s16 = sphi 0, %s28
    %s17 = sphi 0, %s24
    %s18 = sphi 0, %s16
    %s19 = sphi 0, %s17
    %s20 = sphi 0, %s18
    %s21 = sphi 0, %s19
    %s31 = sphi 0, %s33
    %s34 = sphi 0, %s31
    %s35 = sphi 0, %s34
    %s51 = sphi 0, %s35
    %s57 = sphi 0, %s59
    %s60 = sphi 0, %s57
    %s61 = sphi 0, %s60
    %s77 = sphi 0, %s61
    %s83 = sphi 0, %s85
    %s86 = sphi 0, %s83
    %s87 = sphi 0, %s86
    %s103 = sphi 0, %s87
    %s111 = sphi 0, %s113
    %s114 = sphi 0, %s111
    %s115 = sphi 0, %s114
    %s131 = sphi 0, %s115
  $region4: #{bottleneck_forward.3} parent=0 // loop_header_branch
    %12 = sbr.rel (%p10) target = $region8
  $region5: #{bottleneck_forward.3} parent=0 // loop_body
    %s14 = ssub.s32 %s9, 1
    %s15 = ssub.s32 %s9, 2
    %s22 = sadd.s32 1, %s17
    %p23 = scmp.ge.s32.totalorder %s22, 1
    %s24 = scalar_select %p23, 0, %s22
    %s25 = sadd.s32 1, %s16
    %s26 = scalar_select %p23, %s25, %s16
    %p27 = scmp.ge.s32.totalorder %s26, 2
    %s28 = scalar_select %p27, 0, %s26
    %s29 = ssub.s32 %s16, %s28
    %p30 = scmp.eq.s32.totalorder %s29, 0
    %s32 = sadd.s32 %s31, 1
    %s33 = scalar_select %p30, %s31, %s32
    %p36 = pneg %p30
    %p37 = scmp.eq.s32.totalorder %s9, 1
    %p38 = por %p36, %p37
    %p39 = scmp.ne.s32.totalorder %s31, %s34
    %p40 = scmp.eq.s32.totalorder %s9, 0
    %p41 = por %p39, %p40
    %p42 = scmp.ne.s32.totalorder %s31, %s34
    %p43 = scmp.eq.s32.totalorder %s14, 1
    %p44 = por %p42, %p43
    %p45 = scmp.ne.s32.totalorder %s34, %s35
    %p46 = scmp.eq.s32.totalorder %s14, 0
    %p47 = por %p45, %p46
    %p48 = scmp.ne.s32.totalorder %s34, %s35
    %p49 = scmp.eq.s32.totalorder %s15, 1
    %p50 = por %p48, %p49
    %p52 = scmp.ne.s32.totalorder %s35, %s51
    %p53 = scmp.eq.s32.totalorder %s15, 0
    %p54 = por %p52, %p53
    %s55 = ssub.s32 %s17, %s24
    %p56 = scmp.eq.s32.totalorder %s55, 0
    %s58 = sadd.s32 %s57, 1
    %s59 = scalar_select %p56, %s57, %s58
    %p62 = pneg %p56
    %p63 = scmp.eq.s32.totalorder %s9, 1
    %p64 = por %p62, %p63
    %p65 = scmp.ne.s32.totalorder %s57, %s60
    %p66 = scmp.eq.s32.totalorder %s9, 0
    %p67 = por %p65, %p66
    %p68 = scmp.ne.s32.totalorder %s57, %s60
    %p69 = scmp.eq.s32.totalorder %s14, 1
    %p70 = por %p68, %p69
    %p71 = scmp.ne.s32.totalorder %s60, %s61
    %p72 = scmp.eq.s32.totalorder %s14, 0
    %p73 = por %p71, %p72
    %p74 = scmp.ne.s32.totalorder %s60, %s61
    %p75 = scmp.eq.s32.totalorder %s15, 1
    %p76 = por %p74, %p75
    %p78 = scmp.ne.s32.totalorder %s61, %s77
    %p79 = scmp.eq.s32.totalorder %s15, 0
    %p80 = por %p78, %p79
    %s81 = ssub.s32 %s17, %s24
    %p82 = scmp.eq.s32.totalorder %s81, 0
    %s84 = sadd.s32 %s83, 1
    %s85 = scalar_select %p82, %s83, %s84
    %p88 = pneg %p82
    %p89 = scmp.eq.s32.totalorder %s9, 1
    %p90 = por %p88, %p89
    %p91 = scmp.ne.s32.totalorder %s83, %s86
    %p92 = scmp.eq.s32.totalorder %s9, 0
    %p93 = por %p91, %p92
    %p94 = scmp.ne.s32.totalorder %s83, %s86
    %p95 = scmp.eq.s32.totalorder %s14, 1
    %p96 = por %p94, %p95
    %p97 = scmp.ne.s32.totalorder %s86, %s87
    %p98 = scmp.eq.s32.totalorder %s14, 0
    %p99 = por %p97, %p98
    %p100 = scmp.ne.s32.totalorder %s86, %s87
    %p101 = scmp.eq.s32.totalorder %s15, 1
    %p102 = por %p100, %p101
    %p104 = scmp.ne.s32.totalorder %s87, %s103
    %p105 = scmp.eq.s32.totalorder %s15, 0
    %p106 = por %p104, %p105
    %s107 = ssub.s32 %s16, %s28
    %s108 = ssub.s32 %s17, %s24
    %s109 = sor.u32 %s107, %s108
    %p110 = scmp.eq.s32.totalorder %s109, 0
    %s112 = sadd.s32 %s111, 1
    %s113 = scalar_select %p110, %s111, %s112
    %p116 = pneg %p110
    %p117 = scmp.eq.s32.totalorder %s9, 1
    %p118 = por %p116, %p117
    %p119 = scmp.ne.s32.totalorder %s111, %s114
    %p120 = scmp.eq.s32.totalorder %s9, 0
    %p121 = por %p119, %p120
    %p122 = scmp.ne.s32.totalorder %s111, %s114
    %p123 = scmp.eq.s32.totalorder %s14, 1
    %p124 = por %p122, %p123
    %p125 = scmp.ne.s32.totalorder %s114, %s115
    %p126 = scmp.eq.s32.totalorder %s14, 0
    %p127 = por %p125, %p126
    %p128 = scmp.ne.s32.totalorder %s114, %s115
    %p129 = scmp.eq.s32.totalorder %s15, 1
    %p130 = por %p128, %p129
    %p132 = scmp.ne.s32.totalorder %s115, %s131
    %p133 = scmp.eq.s32.totalorder %s15, 0
    %p134 = por %p132, %p133
    %p135 = scmp.le.s32.totalorder 1, %s9
    %p136 = scmp.lt.s32.totalorder %s9, 3
    %p137 = pnand %p135, %p136
    %p138 = pneg %p137
    // Predicated region
    $region9: #{bottleneck_forward.3} parent=5 // pred_check
      _
    $region10: #{bottleneck_forward.3} parent=5 // pred_check_branch
      %140 = sbr.rel (%p137) target = $region12
    $region11: #{bottleneck_forward.3} parent=5 // pred_region
      %s141 = ssub.s32 %s9, 1
      // Predicated region
      $region13: #{bottleneck_forward.3} parent=11 // pred_check
        %p142 = pneg %p73
      $region14: #{bottleneck_forward.3} parent=11 // pred_check_branch
        %144 = sbr.rel (%p142) target = $region16
      $region15: #{bottleneck_forward.3} parent=11 // pred_region
        %p145 = scmp.lt.s32.totalorder %s19, 0
        %s146 = scalar_select %p145, %s19, 0
        %s147 = smul.addr %s146, 2
        %s148 = scalar_lea.vmem %s1, %s147
      $region16: #{bottleneck_forward.3} parent=11 // pred_fallthru
        _
      // Predicated region
      $region17: #{bottleneck_forward.3} parent=11 // pred_check
        %p149 = pneg %p99
      $region18: #{bottleneck_forward.3} parent=11 // pred_check_branch
        %151 = sbr.rel (%p149) target = $region20
      $region19: #{bottleneck_forward.3} parent=11 // pred_region
        %p152 = scmp.lt.s32.totalorder %s19, 0
        %s153 = scalar_select %p152, %s19, 0
        %s154 = scalar_lea.vmem %s2, %s153
      $region20: #{bottleneck_forward.3} parent=11 // pred_fallthru
        _
    $region12: #{bottleneck_forward.3} parent=5 // pred_fallthru
      _
    %p155 = scmp.lt.s32.totalorder %s9, 2
    // Predicated region
    $region21: #{bottleneck_forward.3} parent=5 // pred_check
      %p156 = pneg %p155
    $region22: #{bottleneck_forward.3} parent=5 // pred_check_branch
      %158 = sbr.rel (%p156) target = $region24
    $region23: #{bottleneck_forward.3} parent=5 // pred_region
      // Predicated region
      $region25: #{bottleneck_forward.3} parent=23 // pred_check
        %p159 = pneg %p41
      $region26: #{bottleneck_forward.3} parent=23 // pred_check_branch
        %161 = sbr.rel (%p159) target = $region28
      $region27: #{bottleneck_forward.3} parent=23 // pred_region
        %s162 = smul.u32 32, %s16
        %p163 = scmp.lt.s32.totalorder %s162, 63
        %s164 = scalar_select %p163, %s162, 63
        %s165 = smul.addr %s164, 4
        %s166 = scalar_lea.vmem %s0, %s165
        %s167 = smul.u32 32, %s16
      $region28: #{bottleneck_forward.3} parent=23 // pred_fallthru
        _
    $region24: #{bottleneck_forward.3} parent=5 // pred_fallthru
      _
    %p168 = scmp.le.s32.totalorder 1, %s9
    %p169 = scmp.lt.s32.totalorder %s9, 3
    %p170 = pnand %p168, %p169
    %p171 = pneg %p170
    // Predicated region
    $region29: #{bottleneck_forward.3} parent=5 // pred_check
      _
    $region30: #{bottleneck_forward.3} parent=5 // pred_check_branch
      %173 = sbr.rel (%p170) target = $region32
    $region31: #{bottleneck_forward.3} parent=5 // pred_region
      %s174 = ssub.s32 %s9, 1
      %s175 = smul.u32 32, %s18
      %p176 = scmp.lt.s32.totalorder %s175, 63
      %s177 = scalar_select %p176, %s175, 63
      %s178 = smul.addr %s177, 4
      %s179 = scalar_lea.vmem %s0, %s178
      %p180 = pneg %p47
      %p181 = pneg %p44
      %p182 = scmp.lt.s32.totalorder %s19, 0
      %s183 = scalar_select %p182, %s19, 0
      %s184 = smul.addr %s183, 2
      %s185 = scalar_lea.vmem %s1, %s184
      %p186 = pneg %p73
      %p187 = pneg %p70
      %p188 = scmp.lt.s32.totalorder %s19, 0
      %s189 = scalar_select %p188, %s19, 0
      %s190 = scalar_lea.vmem %s2, %s189
      %p191 = pneg %p99
      %p192 = pneg %p96
      %p193 = pneg %p127
      %p194 = pneg %p124
      %s195 = smul.u32 32, %s18
      %p196 = scmp.lt.s32.totalorder %s195, 63
      %s197 = scalar_select %p196, %s195, 63
      %p198 = scmp.lt.s32.totalorder %s19, 0
      %s199 = scalar_select %p198, %s19, 0
      %s200 = sadd.s32 %s199, %s197
      %s201 = smul.addr %s200, 4
      %s202 = scalar_lea.vmem %s3, %s201
      %s203 = smul.u32 32, %s18
      %p204 = scmp.lt.s32.totalorder %s203, 63
      %s205 = scalar_select %p204, %s203, 63
      %s206 = smul.addr %s205, 4
      %s207 = scalar_lea.vmem %s0, %s206
      %s208 = smul.u32 32, %s18
      %p209 = scmp.lt.s32.totalorder %s19, 0
      %s210 = scalar_select %p209, %s19, 0
      %s211 = smul.addr %s210, 2
      %s212 = scalar_lea.vmem %s1, %s211
      %p213 = scmp.lt.s32.totalorder %s19, 0
      %s214 = scalar_select %p213, %s19, 0
      %s215 = scalar_lea.vmem %s2, %s214
      %s216 = smul.u32 32, %s18
      %p217 = scmp.lt.s32.totalorder %s216, 63
      %s218 = scalar_select %p217, %s216, 63
      %p219 = scmp.lt.s32.totalorder %s19, 0
      %s220 = scalar_select %p219, %s19, 0
      %s221 = sadd.s32 %s220, %s218
      %s222 = smul.addr %s221, 4
      %s223 = scalar_lea.vmem %s3, %s222
      %s224 = smul.u32 32, %s18
      %v226 = vld [vmem:[%s207] sm:$0xf]
      %v227 = vld [vmem:[%s207 + $0x4] sm:$0xf]
      %v228 = vld [vmem:[%s207 + $0x8] sm:$0xf]
      %v229 = vld [vmem:[%s207 + $0xc] sm:$0xf]
      %v230 = vld [vmem:[%s207 + $0x10] sm:$0xf]
      %v231 = vld [vmem:[%s207 + $0x14] sm:$0xf]
      %v232 = vld [vmem:[%s207 + $0x18] sm:$0xf]
      %v233 = vld [vmem:[%s207 + $0x1c] sm:$0xf]
      %v234 = vld [vmem:[%s207 + $0x20] sm:$0xf]
      %v235 = vld [vmem:[%s207 + $0x24] sm:$0xf]
      %v236 = vld [vmem:[%s207 + $0x28] sm:$0xf]
      %v237 = vld [vmem:[%s207 + $0x2c] sm:$0xf]
      %v238 = vld [vmem:[%s207 + $0x30] sm:$0xf]
      %v239 = vld [vmem:[%s207 + $0x34] sm:$0xf]
      %v240 = vld [vmem:[%s207 + $0x38] sm:$0xf]
      %v241 = vld [vmem:[%s207 + $0x3c] sm:$0xf]
      %v242 = vld [vmem:[%s207 + $0x40] sm:$0xf]
      %v243 = vld [vmem:[%s207 + $0x44] sm:$0xf]
      %v244 = vld [vmem:[%s207 + $0x48] sm:$0xf]
      %v245 = vld [vmem:[%s207 + $0x4c] sm:$0xf]
      %v246 = vld [vmem:[%s207 + $0x50] sm:$0xf]
      %v247 = vld [vmem:[%s207 + $0x54] sm:$0xf]
      %v248 = vld [vmem:[%s207 + $0x58] sm:$0xf]
      %v249 = vld [vmem:[%s207 + $0x5c] sm:$0xf]
      %v250 = vld [vmem:[%s207 + $0x60] sm:$0xf]
      %v251 = vld [vmem:[%s207 + $0x64] sm:$0xf]
      %v252 = vld [vmem:[%s207 + $0x68] sm:$0xf]
      %v253 = vld [vmem:[%s207 + $0x6c] sm:$0xf]
      %v254 = vld [vmem:[%s207 + $0x70] sm:$0xf]
      %v255 = vld [vmem:[%s207 + $0x74] sm:$0xf]
      %v256 = vld [vmem:[%s207 + $0x78] sm:$0xf]
      %v257 = vld [vmem:[%s207 + $0x7c] sm:$0xf]
      %v258 = vld [vmem:[%s212] sm:$0x3]
      %v259 = vld [vmem:[%s215] sm:$0x1]
      %v261 = vperm.slane %v259, 0
      %v295 = vunpack.c.l.b16 %v226
      %v296 = vunpack.c.l.b16 %v227
      %v297 = vunpack.c.l.b16 %v228
      %v298 = vunpack.c.l.b16 %v229
      %v299 = vunpack.c.l.b16 %v230
      %v300 = vunpack.c.l.b16 %v231
      %v301 = vunpack.c.l.b16 %v232
      %v302 = vunpack.c.l.b16 %v233
      %v303 = vunpack.c.l.b16 %v234
      %v304 = vunpack.c.l.b16 %v235
      %v305 = vunpack.c.l.b16 %v236
      %v306 = vunpack.c.l.b16 %v237
      %v307 = vunpack.c.l.b16 %v238
      %v308 = vunpack.c.l.b16 %v239
      %v309 = vunpack.c.l.b16 %v240
      %v310 = vunpack.c.l.b16 %v241
      %v311 = vunpack.c.l.b16 %v242
      %v312 = vunpack.c.l.b16 %v243
      %v313 = vunpack.c.l.b16 %v244
      %v314 = vunpack.c.l.b16 %v245
      %v315 = vunpack.c.l.b16 %v246
      %v316 = vunpack.c.l.b16 %v247
      %v317 = vunpack.c.l.b16 %v248
      %v318 = vunpack.c.l.b16 %v249
      %v319 = vunpack.c.l.b16 %v250
      %v320 = vunpack.c.l.b16 %v251
      %v321 = vunpack.c.l.b16 %v252
      %v322 = vunpack.c.l.b16 %v253
      %v323 = vunpack.c.l.b16 %v254
      %v324 = vunpack.c.l.b16 %v255
      %v325 = vunpack.c.l.b16 %v256
      %v326 = vunpack.c.l.b16 %v257
      %v327 = vpack.c.b16 %v296, %v295
      %v328 = vpack.c.b16 %v298, %v297
      %v329 = vpack.c.b16 %v300, %v299
      %v330 = vpack.c.b16 %v302, %v301
      %v331 = vpack.c.b16 %v304, %v303
      %v332 = vpack.c.b16 %v306, %v305
      %v333 = vpack.c.b16 %v308, %v307
      %v334 = vpack.c.b16 %v310, %v309
      %v335 = vpack.c.b16 %v312, %v311
      %v336 = vpack.c.b16 %v314, %v313
      %v337 = vpack.c.b16 %v316, %v315
      %v338 = vpack.c.b16 %v318, %v317
      %v339 = vpack.c.b16 %v320, %v319
      %v340 = vpack.c.b16 %v322, %v321
      %v341 = vpack.c.b16 %v324, %v323
      %v342 = vpack.c.b16 %v326, %v325
      %vm343 = vcmask 31744
      %v345 = vsel %vm343, %v327, 0
      %v348 = vsel %vm343, %v328, 0
      %v351 = vsel %vm343, %v329, 0
      %v354 = vsel %vm343, %v330, 0
      %v357 = vsel %vm343, %v331, 0
      %v360 = vsel %vm343, %v332, 0
      %v363 = vsel %vm343, %v333, 0
      %v366 = vsel %vm343, %v334, 0
      %v369 = vsel %vm343, %v335, 0
      %v372 = vsel %vm343, %v336, 0
      %v375 = vsel %vm343, %v337, 0
      %v378 = vsel %vm343, %v338, 0
      %v381 = vsel %vm343, %v339, 0
      %v384 = vsel %vm343, %v340, 0
      %v387 = vsel %vm343, %v341, 0
      %v390 = vsel %vm343, %v342, 0
      %vm392 = vcmask 1041408
      %v394 = vsel %vm392, %v258, 0
      %396 = vmatpush.bf16.msra.mxu0 0
      %397 = vmatpush.bf16.msra.mxu0 0
      %398 = vmatpush.bf16.msra.mxu0 0
      %399 = vmatpush.bf16.msra.mxu0 0
      %400 = vmatpush.bf16.msra.mxu0 0
      %401 = vmatpush.bf16.msra.mxu0 0
      %402 = vmatpush.bf16.msra.mxu0 0
      %403 = vmatpush.bf16.msra.mxu0 %v394
      %404 = vmatmul.bf16.gmra.mxu0 %v345
      %v405 = vpop.f32.mrf.mxu0
      %v406 = vadd.f32 %v261, %v405
      %v407 = vpop.f32.mrf.mxu0
      %v408 = vadd.f32 %v261, %v407
      %409 = vmatmul.bf16.gmra.mxu0 %v348
      %v410 = vpop.f32.mrf.mxu0
      %v411 = vadd.f32 %v261, %v410
      %v412 = vpop.f32.mrf.mxu0
      %v413 = vadd.f32 %v261, %v412
      %414 = vmatmul.bf16.gmra.mxu0 %v351
      %v415 = vpop.f32.mrf.mxu0
      %v416 = vadd.f32 %v261, %v415
      %v417 = vpop.f32.mrf.mxu0
      %v418 = vadd.f32 %v261, %v417
      %419 = vmatmul.bf16.gmra.mxu0 %v354
      %v420 = vpop.f32.mrf.mxu0
      %v421 = vadd.f32 %v261, %v420
      %v422 = vpop.f32.mrf.mxu0
      %v423 = vadd.f32 %v261, %v422
      %424 = vmatmul.bf16.gmra.mxu0 %v357
      %v425 = vpop.f32.mrf.mxu0
      %v426 = vadd.f32 %v261, %v425
      %v427 = vpop.f32.mrf.mxu0
      %v428 = vadd.f32 %v261, %v427
      %429 = vmatmul.bf16.gmra.mxu0 %v360
      %v430 = vpop.f32.mrf.mxu0
      %v431 = vadd.f32 %v261, %v430
      %v432 = vpop.f32.mrf.mxu0
      %v433 = vadd.f32 %v261, %v432
      %434 = vmatmul.bf16.gmra.mxu0 %v363
      %v435 = vpop.f32.mrf.mxu0
      %v436 = vadd.f32 %v261, %v435
      %v437 = vpop.f32.mrf.mxu0
      %v438 = vadd.f32 %v261, %v437
      %439 = vmatmul.bf16.gmra.mxu0 %v366
      %v440 = vpop.f32.mrf.mxu0
      %v441 = vadd.f32 %v261, %v440
      %v442 = vpop.f32.mrf.mxu0
      %v443 = vadd.f32 %v261, %v442
      %444 = vmatmul.bf16.gmra.mxu0 %v369
      %v445 = vpop.f32.mrf.mxu0
      %v446 = vadd.f32 %v261, %v445
      %v447 = vpop.f32.mrf.mxu0
      %v448 = vadd.f32 %v261, %v447
      %449 = vmatmul.bf16.gmra.mxu0 %v372
      %v450 = vpop.f32.mrf.mxu0
      %v451 = vadd.f32 %v261, %v450
      %v452 = vpop.f32.mrf.mxu0
      %v453 = vadd.f32 %v261, %v452
      %454 = vmatmul.bf16.gmra.mxu0 %v375
      %v455 = vpop.f32.mrf.mxu0
      %v456 = vadd.f32 %v261, %v455
      %v457 = vpop.f32.mrf.mxu0
      %v458 = vadd.f32 %v261, %v457
      %459 = vmatmul.bf16.gmra.mxu0 %v378
      %v460 = vpop.f32.mrf.mxu0
      %v461 = vadd.f32 %v261, %v460
      %v462 = vpop.f32.mrf.mxu0
      %v463 = vadd.f32 %v261, %v462
      %464 = vmatmul.bf16.gmra.mxu0 %v381
      %v465 = vpop.f32.mrf.mxu0
      %v466 = vadd.f32 %v261, %v465
      %v467 = vpop.f32.mrf.mxu0
      %v468 = vadd.f32 %v261, %v467
      %469 = vmatmul.bf16.gmra.mxu0 %v384
      %v470 = vpop.f32.mrf.mxu0
      %v471 = vadd.f32 %v261, %v470
      %v472 = vpop.f32.mrf.mxu0
      %v473 = vadd.f32 %v261, %v472
      %474 = vmatmul.bf16.gmra.mxu0 %v387
      %v475 = vpop.f32.mrf.mxu0
      %v476 = vadd.f32 %v261, %v475
      %v477 = vpop.f32.mrf.mxu0
      %v478 = vadd.f32 %v261, %v477
      %479 = vmatmul.bf16.gmra.mxu0 %v390
      %v480 = vpop.f32.mrf.mxu0
      %v481 = vadd.f32 %v261, %v480
      %v482 = vpop.f32.mrf.mxu0
      %v483 = vadd.f32 %v261, %v482
      %484 = vdwg.mxu0
      %v485 = vmax.f32 %v406, 0.0
      %v486 = vmax.f32 %v408, 0.0
      %v487 = vmax.f32 %v411, 0.0
      %v488 = vmax.f32 %v413, 0.0
      %v489 = vmax.f32 %v416, 0.0
      %v490 = vmax.f32 %v418, 0.0
      %v491 = vmax.f32 %v421, 0.0
      %v492 = vmax.f32 %v423, 0.0
      %v493 = vmax.f32 %v426, 0.0
      %v494 = vmax.f32 %v428, 0.0
      %v495 = vmax.f32 %v431, 0.0
      %v496 = vmax.f32 %v433, 0.0
      %v497 = vmax.f32 %v436, 0.0
      %v498 = vmax.f32 %v438, 0.0
      %v499 = vmax.f32 %v441, 0.0
      %v500 = vmax.f32 %v443, 0.0
      %v501 = vmax.f32 %v446, 0.0
      %v502 = vmax.f32 %v448, 0.0
      %v503 = vmax.f32 %v451, 0.0
      %v504 = vmax.f32 %v453, 0.0
      %v505 = vmax.f32 %v456, 0.0
      %v506 = vmax.f32 %v458, 0.0
      %v507 = vmax.f32 %v461, 0.0
      %v508 = vmax.f32 %v463, 0.0
      %v509 = vmax.f32 %v466, 0.0
      %v510 = vmax.f32 %v468, 0.0
      %v511 = vmax.f32 %v471, 0.0
      %v512 = vmax.f32 %v473, 0.0
      %v513 = vmax.f32 %v476, 0.0
      %v514 = vmax.f32 %v478, 0.0
      %v515 = vmax.f32 %v481, 0.0
      %v516 = vmax.f32 %v483, 0.0
      %v517 = vpack.c.bf16 %v485, %v485
      %v518 = vpack.c.bf16 %v486, %v486
      %v519 = vpack.c.bf16 %v487, %v487
      %v520 = vpack.c.bf16 %v488, %v488
      %v521 = vpack.c.bf16 %v489, %v489
      %v522 = vpack.c.bf16 %v490, %v490
      %v523 = vpack.c.bf16 %v491, %v491
      %v524 = vpack.c.bf16 %v492, %v492
      %v525 = vpack.c.bf16 %v493, %v493
      %v526 = vpack.c.bf16 %v494, %v494
      %v527 = vpack.c.bf16 %v495, %v495
      %v528 = vpack.c.bf16 %v496, %v496
      %v529 = vpack.c.bf16 %v497, %v497
      %v530 = vpack.c.bf16 %v498, %v498
      %v531 = vpack.c.bf16 %v499, %v499
      %v532 = vpack.c.bf16 %v500, %v500
      %v533 = vpack.c.bf16 %v501, %v501
      %v534 = vpack.c.bf16 %v502, %v502
      %v535 = vpack.c.bf16 %v503, %v503
      %v536 = vpack.c.bf16 %v504, %v504
      %v537 = vpack.c.bf16 %v505, %v505
      %v538 = vpack.c.bf16 %v506, %v506
      %v539 = vpack.c.bf16 %v507, %v507
      %v540 = vpack.c.bf16 %v508, %v508
      %v541 = vpack.c.bf16 %v509, %v509
      %v542 = vpack.c.bf16 %v510, %v510
      %v543 = vpack.c.bf16 %v511, %v511
      %v544 = vpack.c.bf16 %v512, %v512
      %v545 = vpack.c.bf16 %v513, %v513
      %v546 = vpack.c.bf16 %v514, %v514
      %v547 = vpack.c.bf16 %v515, %v515
      %v548 = vpack.c.bf16 %v516, %v516
      %vm549 = vcmask 27648
      %550 = vst.msk [vmem:[%s223] sm:$0xf] %vm549, %v517
      %551 = vst.msk [vmem:[%s223 + $0x4] sm:$0xf] %vm549, %v518
      %552 = vst.msk [vmem:[%s223 + $0x8] sm:$0xf] %vm549, %v519
      %553 = vst.msk [vmem:[%s223 + $0xc] sm:$0xf] %vm549, %v520
      %554 = vst.msk [vmem:[%s223 + $0x10] sm:$0xf] %vm549, %v521
      %555 = vst.msk [vmem:[%s223 + $0x14] sm:$0xf] %vm549, %v522
      %556 = vst.msk [vmem:[%s223 + $0x18] sm:$0xf] %vm549, %v523
      %557 = vst.msk [vmem:[%s223 + $0x1c] sm:$0xf] %vm549, %v524
      %558 = vst.msk [vmem:[%s223 + $0x20] sm:$0xf] %vm549, %v525
      %559 = vst.msk [vmem:[%s223 + $0x24] sm:$0xf] %vm549, %v526
      %560 = vst.msk [vmem:[%s223 + $0x28] sm:$0xf] %vm549, %v527
      %561 = vst.msk [vmem:[%s223 + $0x2c] sm:$0xf] %vm549, %v528
      %562 = vst.msk [vmem:[%s223 + $0x30] sm:$0xf] %vm549, %v529
      %563 = vst.msk [vmem:[%s223 + $0x34] sm:$0xf] %vm549, %v530
      %564 = vst.msk [vmem:[%s223 + $0x38] sm:$0xf] %vm549, %v531
      %565 = vst.msk [vmem:[%s223 + $0x3c] sm:$0xf] %vm549, %v532
      %566 = vst.msk [vmem:[%s223 + $0x40] sm:$0xf] %vm549, %v533
      %567 = vst.msk [vmem:[%s223 + $0x44] sm:$0xf] %vm549, %v534
      %568 = vst.msk [vmem:[%s223 + $0x48] sm:$0xf] %vm549, %v535
      %569 = vst.msk [vmem:[%s223 + $0x4c] sm:$0xf] %vm549, %v536
      %570 = vst.msk [vmem:[%s223 + $0x50] sm:$0xf] %vm549, %v537
      %571 = vst.msk [vmem:[%s223 + $0x54] sm:$0xf] %vm549, %v538
      %572 = vst.msk [vmem:[%s223 + $0x58] sm:$0xf] %vm549, %v539
      %573 = vst.msk [vmem:[%s223 + $0x5c] sm:$0xf] %vm549, %v540
      %574 = vst.msk [vmem:[%s223 + $0x60] sm:$0xf] %vm549, %v541
      %575 = vst.msk [vmem:[%s223 + $0x64] sm:$0xf] %vm549, %v542
      %576 = vst.msk [vmem:[%s223 + $0x68] sm:$0xf] %vm549, %v543
      %577 = vst.msk [vmem:[%s223 + $0x6c] sm:$0xf] %vm549, %v544
      %578 = vst.msk [vmem:[%s223 + $0x70] sm:$0xf] %vm549, %v545
      %579 = vst.msk [vmem:[%s223 + $0x74] sm:$0xf] %vm549, %v546
      %580 = vst.msk [vmem:[%s223 + $0x78] sm:$0xf] %vm549, %v547
      %581 = vst.msk [vmem:[%s223 + $0x7c] sm:$0xf] %vm549, %v548
      %s582 = smul.u32 32, %s18
      %p583 = scmp.lt.s32.totalorder %s582, 63
      %s584 = scalar_select %p583, %s582, 63
      %p585 = scmp.lt.s32.totalorder %s19, 0
      %s586 = scalar_select %p585, %s19, 0
      %s587 = sadd.s32 %s586, %s584
      %s588 = smul.addr %s587, 4
      %s589 = scalar_lea.vmem %s3, %s588
      // Predicated region
      $region33: #{bottleneck_forward.3} parent=31 // pred_check
        %p590 = pneg %p124
      $region34: #{bottleneck_forward.3} parent=31 // pred_check_branch
        %592 = sbr.rel (%p590) target = $region36
      $region35: #{bottleneck_forward.3} parent=31 // pred_region
        %s593 = smul.u32 32, %s18
      $region36: #{bottleneck_forward.3} parent=31 // pred_fallthru
        _
    $region32: #{bottleneck_forward.3} parent=5 // pred_fallthru
      _
    %p594 = scmp.le.s32.totalorder 2, %s9
    // Predicated region
    $region37: #{bottleneck_forward.3} parent=5 // pred_check
      %p595 = pneg %p594
    $region38: #{bottleneck_forward.3} parent=5 // pred_check_branch
      %597 = sbr.rel (%p595) target = $region40
    $region39: #{bottleneck_forward.3} parent=5 // pred_region
      %s598 = ssub.s32 %s9, 2
      // Predicated region
      $region41: #{bottleneck_forward.3} parent=39 // pred_check
        %p599 = pneg %p130
      $region42: #{bottleneck_forward.3} parent=39 // pred_check_branch
        %601 = sbr.rel (%p599) target = $region44
      $region43: #{bottleneck_forward.3} parent=39 // pred_region
        %s602 = smul.u32 32, %s20
        %p603 = scmp.lt.s32.totalorder %s602, 63
        %s604 = scalar_select %p603, %s602, 63
        %p605 = scmp.lt.s32.totalorder %s21, 0
        %s606 = scalar_select %p605, %s21, 0
        %s607 = sadd.s32 %s606, %s604
        %s608 = smul.addr %s607, 4
        %s609 = scalar_lea.vmem %s3, %s608
      $region44: #{bottleneck_forward.3} parent=39 // pred_fallthru
        _
    $region40: #{bottleneck_forward.3} parent=5 // pred_fallthru
      _
  $region6: #{bottleneck_forward.3} parent=0 // loop_footer
    %s13 = sadd.s32 1, %s9
  $region7: #{bottleneck_forward.3} parent=0 // loop_footer_branch
    %8 = sbr.rel target = $region3
  $region8: #{bottleneck_forward.3} parent=0 // loop_exit
    _

// kernel: bottleneck_forward.5
$region0: #{bottleneck_forward.5}
  #allocation0 [shape = 'u32[]', space=smem, size = 0x4, offset = 0x4, fixed_abs, tag = 'smem constant byte address 0x4 - core index']
  #allocation1 [shape = 'u32[72,128]{1,0:T(1,128)}', space=vmem, size = 0x9000, scoped, tag = 'internal scratch']
  %s0 = inlined_call_operand.vmem [shape: bf16[512,4], index: 0, kind: input, shape index: {}]
  %s1 = inlined_call_operand.vmem [shape: bf16[4,16], index: 1, kind: input, shape index: {}]
  %s2 = inlined_call_operand.vmem [shape: f32[1,16], index: 2, kind: input, shape index: {}]
  %s3 = inlined_call_operand.vmem [shape: bf16[512,4], index: 3, kind: input, shape index: {}]
  %s4 = inlined_call_operand.vmem [shape: bf16[4,16], index: 4, kind: input, shape index: {}]
  %s5 = inlined_call_operand.vmem [shape: f32[512,16], index: 5, kind: output, shape index: {}]
  %s6 = sld [smem:[#allocation0]]
  $region53: #{bottleneck_forward.5} parent=0
    _
  %s8 = ssub.s32 1, %s6
  %s9 = scalar_select 0, %s8, %s6
  loop: start=0, step=1, limit=4
  $region2: #{bottleneck_forward.5} parent=0 // loop_pre_header
    _
  $region3: #{bottleneck_forward.5} parent=0 // loop_header
    %s11 = sphi 0, %s15
    %p12 = scmp.ge.s32.totalorder %s11, 4
    %s18 = sphi 0, %s30
    %s19 = sphi 0, %s26
    %s20 = sphi 0, %s18
    %s21 = sphi 0, %s19
    %s22 = sphi 0, %s20
    %s23 = sphi 0, %s21
    %s33 = sphi 0, %s35
    %s36 = sphi 0, %s33
    %s37 = sphi 0, %s36
    %s53 = sphi 0, %s37
    %s59 = sphi 0, %s61
    %s62 = sphi 0, %s59
    %s63 = sphi 0, %s62
    %s79 = sphi 0, %s63
    %s85 = sphi 0, %s87
    %s88 = sphi 0, %s85
    %s89 = sphi 0, %s88
    %s105 = sphi 0, %s89
    %s111 = sphi 0, %s113
    %s114 = sphi 0, %s111
    %s115 = sphi 0, %s114
    %s131 = sphi 0, %s115
    %s137 = sphi 0, %s139
    %s140 = sphi 0, %s137
    %s141 = sphi 0, %s140
    %s157 = sphi 0, %s141
    %s165 = sphi 0, %s167
    %s168 = sphi 0, %s165
    %s169 = sphi 0, %s168
    %s185 = sphi 0, %s169
  $region4: #{bottleneck_forward.5} parent=0 // loop_header_branch
    %14 = sbr.rel (%p12) target = $region8
  $region5: #{bottleneck_forward.5} parent=0 // loop_body
    %s16 = ssub.s32 %s11, 1
    %s17 = ssub.s32 %s11, 2
    %s24 = sadd.s32 1, %s19
    %p25 = scmp.ge.s32.totalorder %s24, 1
    %s26 = scalar_select %p25, 0, %s24
    %s27 = sadd.s32 1, %s18
    %s28 = scalar_select %p25, %s27, %s18
    %p29 = scmp.ge.s32.totalorder %s28, 2
    %s30 = scalar_select %p29, 0, %s28
    %s31 = ssub.s32 %s18, %s30
    %p32 = scmp.eq.s32.totalorder %s31, 0
    %s34 = sadd.s32 %s33, 1
    %s35 = scalar_select %p32, %s33, %s34
    %p38 = pneg %p32
    %p39 = scmp.eq.s32.totalorder %s11, 1
    %p40 = por %p38, %p39
    %p41 = scmp.ne.s32.totalorder %s33, %s36
    %p42 = scmp.eq.s32.totalorder %s11, 0
    %p43 = por %p41, %p42
    %p44 = scmp.ne.s32.totalorder %s33, %s36
    %p45 = scmp.eq.s32.totalorder %s16, 1
    %p46 = por %p44, %p45
    %p47 = scmp.ne.s32.totalorder %s36, %s37
    %p48 = scmp.eq.s32.totalorder %s16, 0
    %p49 = por %p47, %p48
    %p50 = scmp.ne.s32.totalorder %s36, %s37
    %p51 = scmp.eq.s32.totalorder %s17, 1
    %p52 = por %p50, %p51
    %p54 = scmp.ne.s32.totalorder %s37, %s53
    %p55 = scmp.eq.s32.totalorder %s17, 0
    %p56 = por %p54, %p55
    %s57 = ssub.s32 %s19, %s26
    %p58 = scmp.eq.s32.totalorder %s57, 0
    %s60 = sadd.s32 %s59, 1
    %s61 = scalar_select %p58, %s59, %s60
    %p64 = pneg %p58
    %p65 = scmp.eq.s32.totalorder %s11, 1
    %p66 = por %p64, %p65
    %p67 = scmp.ne.s32.totalorder %s59, %s62
    %p68 = scmp.eq.s32.totalorder %s11, 0
    %p69 = por %p67, %p68
    %p70 = scmp.ne.s32.totalorder %s59, %s62
    %p71 = scmp.eq.s32.totalorder %s16, 1
    %p72 = por %p70, %p71
    %p73 = scmp.ne.s32.totalorder %s62, %s63
    %p74 = scmp.eq.s32.totalorder %s16, 0
    %p75 = por %p73, %p74
    %p76 = scmp.ne.s32.totalorder %s62, %s63
    %p77 = scmp.eq.s32.totalorder %s17, 1
    %p78 = por %p76, %p77
    %p80 = scmp.ne.s32.totalorder %s63, %s79
    %p81 = scmp.eq.s32.totalorder %s17, 0
    %p82 = por %p80, %p81
    %s83 = ssub.s32 %s19, %s26
    %p84 = scmp.eq.s32.totalorder %s83, 0
    %s86 = sadd.s32 %s85, 1
    %s87 = scalar_select %p84, %s85, %s86
    %p90 = pneg %p84
    %p91 = scmp.eq.s32.totalorder %s11, 1
    %p92 = por %p90, %p91
    %p93 = scmp.ne.s32.totalorder %s85, %s88
    %p94 = scmp.eq.s32.totalorder %s11, 0
    %p95 = por %p93, %p94
    %p96 = scmp.ne.s32.totalorder %s85, %s88
    %p97 = scmp.eq.s32.totalorder %s16, 1
    %p98 = por %p96, %p97
    %p99 = scmp.ne.s32.totalorder %s88, %s89
    %p100 = scmp.eq.s32.totalorder %s16, 0
    %p101 = por %p99, %p100
    %p102 = scmp.ne.s32.totalorder %s88, %s89
    %p103 = scmp.eq.s32.totalorder %s17, 1
    %p104 = por %p102, %p103
    %p106 = scmp.ne.s32.totalorder %s89, %s105
    %p107 = scmp.eq.s32.totalorder %s17, 0
    %p108 = por %p106, %p107
    %s109 = ssub.s32 %s18, %s30
    %p110 = scmp.eq.s32.totalorder %s109, 0
    %s112 = sadd.s32 %s111, 1
    %s113 = scalar_select %p110, %s111, %s112
    %p116 = pneg %p110
    %p117 = scmp.eq.s32.totalorder %s11, 1
    %p118 = por %p116, %p117
    %p119 = scmp.ne.s32.totalorder %s111, %s114
    %p120 = scmp.eq.s32.totalorder %s11, 0
    %p121 = por %p119, %p120
    %p122 = scmp.ne.s32.totalorder %s111, %s114
    %p123 = scmp.eq.s32.totalorder %s16, 1
    %p124 = por %p122, %p123
    %p125 = scmp.ne.s32.totalorder %s114, %s115
    %p126 = scmp.eq.s32.totalorder %s16, 0
    %p127 = por %p125, %p126
    %p128 = scmp.ne.s32.totalorder %s114, %s115
    %p129 = scmp.eq.s32.totalorder %s17, 1
    %p130 = por %p128, %p129
    %p132 = scmp.ne.s32.totalorder %s115, %s131
    %p133 = scmp.eq.s32.totalorder %s17, 0
    %p134 = por %p132, %p133
    %s135 = ssub.s32 %s19, %s26
    %p136 = scmp.eq.s32.totalorder %s135, 0
    %s138 = sadd.s32 %s137, 1
    %s139 = scalar_select %p136, %s137, %s138
    %p142 = pneg %p136
    %p143 = scmp.eq.s32.totalorder %s11, 1
    %p144 = por %p142, %p143
    %p145 = scmp.ne.s32.totalorder %s137, %s140
    %p146 = scmp.eq.s32.totalorder %s11, 0
    %p147 = por %p145, %p146
    %p148 = scmp.ne.s32.totalorder %s137, %s140
    %p149 = scmp.eq.s32.totalorder %s16, 1
    %p150 = por %p148, %p149
    %p151 = scmp.ne.s32.totalorder %s140, %s141
    %p152 = scmp.eq.s32.totalorder %s16, 0
    %p153 = por %p151, %p152
    %p154 = scmp.ne.s32.totalorder %s140, %s141
    %p155 = scmp.eq.s32.totalorder %s17, 1
    %p156 = por %p154, %p155
    %p158 = scmp.ne.s32.totalorder %s141, %s157
    %p159 = scmp.eq.s32.totalorder %s17, 0
    %p160 = por %p158, %p159
    %s161 = ssub.s32 %s18, %s30
    %s162 = ssub.s32 %s19, %s26
    %s163 = sor.u32 %s161, %s162
    %p164 = scmp.eq.s32.totalorder %s163, 0
    %s166 = sadd.s32 %s165, 1
    %s167 = scalar_select %p164, %s165, %s166
    %p170 = pneg %p164
    %p171 = scmp.eq.s32.totalorder %s11, 1
    %p172 = por %p170, %p171
    %p173 = scmp.ne.s32.totalorder %s165, %s168
    %p174 = scmp.eq.s32.totalorder %s11, 0
    %p175 = por %p173, %p174
    %p176 = scmp.ne.s32.totalorder %s165, %s168
    %p177 = scmp.eq.s32.totalorder %s16, 1
    %p178 = por %p176, %p177
    %p179 = scmp.ne.s32.totalorder %s168, %s169
    %p180 = scmp.eq.s32.totalorder %s16, 0
    %p181 = por %p179, %p180
    %p182 = scmp.ne.s32.totalorder %s168, %s169
    %p183 = scmp.eq.s32.totalorder %s17, 1
    %p184 = por %p182, %p183
    %p186 = scmp.ne.s32.totalorder %s169, %s185
    %p187 = scmp.eq.s32.totalorder %s17, 0
    %p188 = por %p186, %p187
    %p189 = scmp.le.s32.totalorder 1, %s11
    %p190 = scmp.lt.s32.totalorder %s11, 3
    %p191 = pnand %p189, %p190
    %p192 = pneg %p191
    // Predicated region
    $region9: #{bottleneck_forward.5} parent=5 // pred_check
      _
    $region10: #{bottleneck_forward.5} parent=5 // pred_check_branch
      %194 = sbr.rel (%p191) target = $region12
    $region11: #{bottleneck_forward.5} parent=5 // pred_region
      %s195 = ssub.s32 %s11, 1
      // Predicated region
      $region13: #{bottleneck_forward.5} parent=11 // pred_check
        %p196 = pneg %p75
      $region14: #{bottleneck_forward.5} parent=11 // pred_check_branch
        %198 = sbr.rel (%p196) target = $region16
      $region15: #{bottleneck_forward.5} parent=11 // pred_region
        %p199 = scmp.lt.s32.totalorder %s21, 0
        %s200 = scalar_select %p199, %s21, 0
        %s201 = smul.addr %s200, 2
        %s202 = scalar_lea.vmem %s1, %s201
      $region16: #{bottleneck_forward.5} parent=11 // pred_fallthru
        _
      // Predicated region
      $region17: #{bottleneck_forward.5} parent=11 // pred_check
        %p203 = pneg %p101
      $region18: #{bottleneck_forward.5} parent=11 // pred_check_branch
        %205 = sbr.rel (%p203) target = $region20
      $region19: #{bottleneck_forward.5} parent=11 // pred_region
        %p206 = scmp.lt.s32.totalorder %s21, 0
        %s207 = scalar_select %p206, %s21, 0
        %s208 = scalar_lea.vmem %s2, %s207
      $region20: #{bottleneck_forward.5} parent=11 // pred_fallthru
        _
      // Predicated region
      $region21: #{bottleneck_forward.5} parent=11 // pred_check
        %p209 = pneg %p153
      $region22: #{bottleneck_forward.5} parent=11 // pred_check_branch
        %211 = sbr.rel (%p209) target = $region24
      $region23: #{bottleneck_forward.5} parent=11 // pred_region
        %p212 = scmp.lt.s32.totalorder %s21, 0
        %s213 = scalar_select %p212, %s21, 0
        %s214 = smul.addr %s213, 2
        %s215 = scalar_lea.vmem %s4, %s214
      $region24: #{bottleneck_forward.5} parent=11 // pred_fallthru
        _
    $region12: #{bottleneck_forward.5} parent=5 // pred_fallthru
      _
    %p216 = scmp.lt.s32.totalorder %s11, 2
    // Predicated region
    $region25: #{bottleneck_forward.5} parent=5 // pred_check
      %p217 = pneg %p216
    $region26: #{bottleneck_forward.5} parent=5 // pred_check_branch
      %219 = sbr.rel (%p217) target = $region28
    $region27: #{bottleneck_forward.5} parent=5 // pred_region
      // Predicated region
      $region29: #{bottleneck_forward.5} parent=27 // pred_check
        %p220 = pneg %p43
      $region30: #{bottleneck_forward.5} parent=27 // pred_check_branch
        %222 = sbr.rel (%p220) target = $region32
      $region31: #{bottleneck_forward.5} parent=27 // pred_region
        %s223 = smul.u32 32, %s18
        %p224 = scmp.lt.s32.totalorder %s223, 63
        %s225 = scalar_select %p224, %s223, 63
        %s226 = smul.addr %s225, 4
        %s227 = scalar_lea.vmem %s0, %s226
        %s228 = smul.u32 32, %s18
      $region32: #{bottleneck_forward.5} parent=27 // pred_fallthru
        _
      // Predicated region
      $region33: #{bottleneck_forward.5} parent=27 // pred_check
        %p229 = pneg %p121
      $region34: #{bottleneck_forward.5} parent=27 // pred_check_branch
        %231 = sbr.rel (%p229) target = $region36
      $region35: #{bottleneck_forward.5} parent=27 // pred_region
        %s232 = smul.u32 32, %s18
        %p233 = scmp.lt.s32.totalorder %s232, 63
        %s234 = scalar_select %p233, %s232, 63
        %s235 = smul.addr %s234, 4
        %s236 = scalar_lea.vmem %s3, %s235
        %s237 = smul.u32 32, %s18
      $region36: #{bottleneck_forward.5} parent=27 // pred_fallthru
        _
    $region28: #{bottleneck_forward.5} parent=5 // pred_fallthru
      _
    %p238 = scmp.le.s32.totalorder 1, %s11
    %p239 = scmp.lt.s32.totalorder %s11, 3
    %p240 = pnand %p238, %p239
    %p241 = pneg %p240
    // Predicated region
    $region37: #{bottleneck_forward.5} parent=5 // pred_check
      _
    $region38: #{bottleneck_forward.5} parent=5 // pred_check_branch
      %243 = sbr.rel (%p240) target = $region40
    $region39: #{bottleneck_forward.5} parent=5 // pred_region
      %s244 = ssub.s32 %s11, 1
      %s245 = smul.u32 32, %s20
      %p246 = scmp.lt.s32.totalorder %s245, 63
      %s247 = scalar_select %p246, %s245, 63
      %s248 = smul.addr %s247, 4
      %s249 = scalar_lea.vmem %s0, %s248
      %p250 = pneg %p49
      %p251 = pneg %p46
      %p252 = scmp.lt.s32.totalorder %s21, 0
      %s253 = scalar_select %p252, %s21, 0
      %s254 = smul.addr %s253, 2
      %s255 = scalar_lea.vmem %s1, %s254
      %p256 = pneg %p75
      %p257 = pneg %p72
      %p258 = scmp.lt.s32.totalorder %s21, 0
      %s259 = scalar_select %p258, %s21, 0
      %s260 = scalar_lea.vmem %s2, %s259
      %p261 = pneg %p101
      %p262 = pneg %p98
      %s263 = smul.u32 32, %s20
      %p264 = scmp.lt.s32.totalorder %s263, 63
      %s265 = scalar_select %p264, %s263, 63
      %s266 = smul.addr %s265, 4
      %s267 = scalar_lea.vmem %s3, %s266
      %p268 = pneg %p127
      %p269 = pneg %p124
      %p270 = scmp.lt.s32.totalorder %s21, 0
      %s271 = scalar_select %p270, %s21, 0
      %s272 = smul.addr %s271, 2
      %s273 = scalar_lea.vmem %s4, %s272
      %p274 = pneg %p153
      %p275 = pneg %p150
      %p276 = pneg %p181
      %p277 = pneg %p178
      %s278 = smul.u32 32, %s20
      %p279 = scmp.lt.s32.totalorder %s278, 63
      %s280 = scalar_select %p279, %s278, 63
      %p281 = scmp.lt.s32.totalorder %s21, 0
      %s282 = scalar_select %p281, %s21, 0
      %s283 = sadd.s32 %s282, %s280
      %s284 = smul.addr %s283, 8
      %s285 = scalar_lea.vmem %s5, %s284
      %s286 = smul.u32 32, %s20
      %p287 = scmp.lt.s32.totalorder %s286, 63
      %s288 = scalar_select %p287, %s286, 63
      %s289 = smul.addr %s288, 4
      %s290 = scalar_lea.vmem %s0, %s289
      %s291 = smul.u32 32, %s20
      %p292 = scmp.lt.s32.totalorder %s21, 0
      %s293 = scalar_select %p292, %s21, 0
      %s294 = smul.addr %s293, 2
      %s295 = scalar_lea.vmem %s1, %s294
      %p296 = scmp.lt.s32.totalorder %s21, 0
      %s297 = scalar_select %p296, %s21, 0
      %s298 = scalar_lea.vmem %s2, %s297
      %s299 = smul.u32 32, %s20
      %p300 = scmp.lt.s32.totalorder %s299, 63
      %s301 = scalar_select %p300, %s299, 63
      %s302 = smul.addr %s301, 4
      %s303 = scalar_lea.vmem %s3, %s302
      %s304 = smul.u32 32, %s20
      %p305 = scmp.lt.s32.totalorder %s21, 0
      %s306 = scalar_select %p305, %s21, 0
      %s307 = smul.addr %s306, 2
      %s308 = scalar_lea.vmem %s4, %s307
      %s309 = smul.u32 32, %s20
      %p310 = scmp.lt.s32.totalorder %s309, 63
      %s311 = scalar_select %p310, %s309, 63
      %p312 = scmp.lt.s32.totalorder %s21, 0
      %s313 = scalar_select %p312, %s21, 0
      %s314 = sadd.s32 %s313, %s311
      %s315 = smul.addr %s314, 8
      %s316 = scalar_lea.vmem %s5, %s315
      %s317 = smul.u32 32, %s20
      %v319 = vld [vmem:[%s290] sm:$0xf]
      %v320 = vld [vmem:[%s290 + $0x4] sm:$0xf]
      %v321 = vld [vmem:[%s290 + $0x8] sm:$0xf]
      %v322 = vld [vmem:[%s290 + $0xc] sm:$0xf]
      %v323 = vld [vmem:[%s290 + $0x10] sm:$0xf]
      %v324 = vld [vmem:[%s290 + $0x14] sm:$0xf]
      %v325 = vld [vmem:[%s290 + $0x18] sm:$0xf]
      %v326 = vld [vmem:[%s290 + $0x1c] sm:$0xf]
      %v327 = vld [vmem:[%s290 + $0x20] sm:$0xf]
      %v328 = vld [vmem:[%s290 + $0x24] sm:$0xf]
      %v329 = vld [vmem:[%s290 + $0x28] sm:$0xf]
      %v330 = vld [vmem:[%s290 + $0x2c] sm:$0xf]
      %v331 = vld [vmem:[%s290 + $0x30] sm:$0xf]
      %v332 = vld [vmem:[%s290 + $0x34] sm:$0xf]
      %v333 = vld [vmem:[%s290 + $0x38] sm:$0xf]
      %v334 = vld [vmem:[%s290 + $0x3c] sm:$0xf]
      %v335 = vld [vmem:[%s290 + $0x40] sm:$0xf]
      %v336 = vld [vmem:[%s290 + $0x44] sm:$0xf]
      %v337 = vld [vmem:[%s290 + $0x48] sm:$0xf]
      %v338 = vld [vmem:[%s290 + $0x4c] sm:$0xf]
      %v339 = vld [vmem:[%s290 + $0x50] sm:$0xf]
      %v340 = vld [vmem:[%s290 + $0x54] sm:$0xf]
      %v341 = vld [vmem:[%s290 + $0x58] sm:$0xf]
      %v342 = vld [vmem:[%s290 + $0x5c] sm:$0xf]
      %v343 = vld [vmem:[%s290 + $0x60] sm:$0xf]
      %v344 = vld [vmem:[%s290 + $0x64] sm:$0xf]
      %v345 = vld [vmem:[%s290 + $0x68] sm:$0xf]
      %v346 = vld [vmem:[%s290 + $0x6c] sm:$0xf]
      %v347 = vld [vmem:[%s290 + $0x70] sm:$0xf]
      %v348 = vld [vmem:[%s290 + $0x74] sm:$0xf]
      %v349 = vld [vmem:[%s290 + $0x78] sm:$0xf]
      %v350 = vld [vmem:[%s290 + $0x7c] sm:$0xf]
      %v351 = vld [vmem:[%s295] sm:$0x3]
      %v352 = vld [vmem:[%s303] sm:$0xf]
      %v353 = vld [vmem:[%s303 + $0x4] sm:$0xf]
      %v354 = vld [vmem:[%s303 + $0x8] sm:$0xf]
      %v355 = vld [vmem:[%s303 + $0xc] sm:$0xf]
      %v356 = vld [vmem:[%s303 + $0x10] sm:$0xf]
      %v357 = vld [vmem:[%s303 + $0x14] sm:$0xf]
      %v358 = vld [vmem:[%s303 + $0x18] sm:$0xf]
      %v359 = vld [vmem:[%s303 + $0x1c] sm:$0xf]
      %v360 = vld [vmem:[%s303 + $0x20] sm:$0xf]
      %v361 = vld [vmem:[%s303 + $0x24] sm:$0xf]
      %v362 = vld [vmem:[%s303 + $0x28] sm:$0xf]
      %v363 = vld [vmem:[%s303 + $0x2c] sm:$0xf]
      %v364 = vld [vmem:[%s303 + $0x30] sm:$0xf]
      %v365 = vld [vmem:[%s303 + $0x34] sm:$0xf]
      %v366 = vld [vmem:[%s303 + $0x38] sm:$0xf]
      %v367 = vld [vmem:[%s303 + $0x3c] sm:$0xf]
      %v368 = vld [vmem:[%s303 + $0x40] sm:$0xf]
      %v369 = vld [vmem:[%s303 + $0x44] sm:$0xf]
      %v370 = vld [vmem:[%s303 + $0x48] sm:$0xf]
      %v371 = vld [vmem:[%s303 + $0x4c] sm:$0xf]
      %v372 = vld [vmem:[%s303 + $0x50] sm:$0xf]
      %v373 = vld [vmem:[%s303 + $0x54] sm:$0xf]
      %v374 = vld [vmem:[%s303 + $0x58] sm:$0xf]
      %v375 = vld [vmem:[%s303 + $0x5c] sm:$0xf]
      %v376 = vld [vmem:[%s303 + $0x60] sm:$0xf]
      %v377 = vld [vmem:[%s303 + $0x64] sm:$0xf]
      %v378 = vld [vmem:[%s303 + $0x68] sm:$0xf]
      %v379 = vld [vmem:[%s303 + $0x6c] sm:$0xf]
      %v380 = vld [vmem:[%s303 + $0x70] sm:$0xf]
      %v381 = vld [vmem:[%s303 + $0x74] sm:$0xf]
      %v382 = vld [vmem:[%s303 + $0x78] sm:$0xf]
      %v383 = vld [vmem:[%s303 + $0x7c] sm:$0xf]
      %v384 = vld [vmem:[%s308] sm:$0x3]
      %v417 = vunpack.c.l.b16 %v352
      %v418 = vunpack.c.l.b16 %v353
      %v419 = vunpack.c.l.b16 %v354
      %v420 = vunpack.c.l.b16 %v355
      %v421 = vunpack.c.l.b16 %v356
      %v422 = vunpack.c.l.b16 %v357
      %v423 = vunpack.c.l.b16 %v358
      %v424 = vunpack.c.l.b16 %v359
      %v425 = vunpack.c.l.b16 %v360
      %v426 = vunpack.c.l.b16 %v361
      %v427 = vunpack.c.l.b16 %v362
      %v428 = vunpack.c.l.b16 %v363
      %v429 = vunpack.c.l.b16 %v364
      %v430 = vunpack.c.l.b16 %v365
      %v431 = vunpack.c.l.b16 %v366
      %v432 = vunpack.c.l.b16 %v367
      %v433 = vunpack.c.l.b16 %v368
      %v434 = vunpack.c.l.b16 %v369
      %v435 = vunpack.c.l.b16 %v370
      %v436 = vunpack.c.l.b16 %v371
      %v437 = vunpack.c.l.b16 %v372
      %v438 = vunpack.c.l.b16 %v373
      %v439 = vunpack.c.l.b16 %v374
      %v440 = vunpack.c.l.b16 %v375
      %v441 = vunpack.c.l.b16 %v376
      %v442 = vunpack.c.l.b16 %v377
      %v443 = vunpack.c.l.b16 %v378
      %v444 = vunpack.c.l.b16 %v379
      %v445 = vunpack.c.l.b16 %v380
      %v446 = vunpack.c.l.b16 %v381
      %v447 = vunpack.c.l.b16 %v382
      %v448 = vunpack.c.l.b16 %v383
      %v449 = vpack.c.b16 %v418, %v417
      %v450 = vpack.c.b16 %v420, %v419
      %v451 = vpack.c.b16 %v422, %v421
      %v452 = vpack.c.b16 %v424, %v423
      %v453 = vpack.c.b16 %v426, %v425
      %v454 = vpack.c.b16 %v428, %v427
      %v455 = vpack.c.b16 %v430, %v429
      %v456 = vpack.c.b16 %v432, %v431
      %v457 = vpack.c.b16 %v434, %v433
      %v458 = vpack.c.b16 %v436, %v435
      %v459 = vpack.c.b16 %v438, %v437
      %v460 = vpack.c.b16 %v440, %v439
      %v461 = vpack.c.b16 %v442, %v441
      %v462 = vpack.c.b16 %v444, %v443
      %v463 = vpack.c.b16 %v446, %v445
      %v464 = vpack.c.b16 %v448, %v447
      %vm465 = vcmask 31744
      %v467 = vsel %vm465, %v449, 0
      %v470 = vsel %vm465, %v450, 0
      %v473 = vsel %vm465, %v451, 0
      %v476 = vsel %vm465, %v452, 0
      %v479 = vsel %vm465, %v453, 0
      %v482 = vsel %vm465, %v454, 0
      %v485 = vsel %vm465, %v455, 0
      %v488 = vsel %vm465, %v456, 0
      %v491 = vsel %vm465, %v457, 0
      %v494 = vsel %vm465, %v458, 0
      %v497 = vsel %vm465, %v459, 0
      %v500 = vsel %vm465, %v460, 0
      %v503 = vsel %vm465, %v461, 0
      %v506 = vsel %vm465, %v462, 0
      %v509 = vsel %vm465, %v463, 0
      %v512 = vsel %vm465, %v464, 0
      %vm514 = vcmask 1041408
      %v516 = vsel %vm514, %v384, 0
      %518 = vmatpush.bf16.msra.mxu0 0
      %519 = vmatpush.bf16.msra.mxu0 0
      %520 = vmatpush.bf16.msra.mxu0 0
      %521 = vmatpush.bf16.msra.mxu0 0
      %522 = vmatpush.bf16.msra.mxu0 0
      %523 = vmatpush.bf16.msra.mxu0 0
      %524 = vmatpush.bf16.msra.mxu0 0
      %525 = vmatpush.bf16.msra.mxu0 %v516
      %526 = vmatmul.bf16.gmra.mxu0 %v467
      %v527 = vpop.f32.mrf.mxu0
      %v528 = vadd.f32 0.0, %v527
      %v529 = vpop.f32.mrf.mxu0
      %v530 = vadd.f32 0.0, %v529
      %531 = vmatmul.bf16.gmra.mxu0 %v470
      %v532 = vpop.f32.mrf.mxu0
      %v533 = vadd.f32 0.0, %v532
      %v534 = vpop.f32.mrf.mxu0
      %v535 = vadd.f32 0.0, %v534
      %536 = vmatmul.bf16.gmra.mxu0 %v473
      %v537 = vpop.f32.mrf.mxu0
      %v538 = vadd.f32 0.0, %v537
      %v539 = vpop.f32.mrf.mxu0
      %v540 = vadd.f32 0.0, %v539
      %541 = vmatmul.bf16.gmra.mxu0 %v476
      %v542 = vpop.f32.mrf.mxu0
      %v543 = vadd.f32 0.0, %v542
      %v544 = vpop.f32.mrf.mxu0
      %v545 = vadd.f32 0.0, %v544
      %546 = vmatmul.bf16.gmra.mxu0 %v479
      %v547 = vpop.f32.mrf.mxu0
      %v548 = vadd.f32 0.0, %v547
      %v549 = vpop.f32.mrf.mxu0
      %v550 = vadd.f32 0.0, %v549
      %551 = vmatmul.bf16.gmra.mxu0 %v482
      %v552 = vpop.f32.mrf.mxu0
      %v553 = vadd.f32 0.0, %v552
      %v554 = vpop.f32.mrf.mxu0
      %v555 = vadd.f32 0.0, %v554
      %556 = vmatmul.bf16.gmra.mxu0 %v485
      %v557 = vpop.f32.mrf.mxu0
      %v558 = vadd.f32 0.0, %v557
      %v559 = vpop.f32.mrf.mxu0
      %v560 = vadd.f32 0.0, %v559
      %561 = vmatmul.bf16.gmra.mxu0 %v488
      %v562 = vpop.f32.mrf.mxu0
      %v563 = vadd.f32 0.0, %v562
      %v564 = vpop.f32.mrf.mxu0
      %v565 = vadd.f32 0.0, %v564
      %566 = vmatmul.bf16.gmra.mxu0 %v491
      %v567 = vpop.f32.mrf.mxu0
      %v568 = vadd.f32 0.0, %v567
      %v569 = vpop.f32.mrf.mxu0
      %v570 = vadd.f32 0.0, %v569
      %571 = vmatmul.bf16.gmra.mxu0 %v494
      %v572 = vpop.f32.mrf.mxu0
      %v573 = vadd.f32 0.0, %v572
      %v574 = vpop.f32.mrf.mxu0
      %v575 = vadd.f32 0.0, %v574
      %576 = vmatmul.bf16.gmra.mxu0 %v497
      %v577 = vpop.f32.mrf.mxu0
      %v578 = vadd.f32 0.0, %v577
      %v579 = vpop.f32.mrf.mxu0
      %v580 = vadd.f32 0.0, %v579
      %581 = vmatmul.bf16.gmra.mxu0 %v500
      %v582 = vpop.f32.mrf.mxu0
      %v583 = vadd.f32 0.0, %v582
      %v584 = vpop.f32.mrf.mxu0
      %v585 = vadd.f32 0.0, %v584
      %586 = vmatmul.bf16.gmra.mxu0 %v503
      %v587 = vpop.f32.mrf.mxu0
      %v588 = vadd.f32 0.0, %v587
      %v589 = vpop.f32.mrf.mxu0
      %v590 = vadd.f32 0.0, %v589
      %591 = vmatmul.bf16.gmra.mxu0 %v506
      %v592 = vpop.f32.mrf.mxu0
      %v593 = vadd.f32 0.0, %v592
      %v594 = vpop.f32.mrf.mxu0
      %v595 = vadd.f32 0.0, %v594
      %596 = vmatmul.bf16.gmra.mxu0 %v509
      %v597 = vpop.f32.mrf.mxu0
      %v598 = vadd.f32 0.0, %v597
      %v599 = vpop.f32.mrf.mxu0
      %v600 = vadd.f32 0.0, %v599
      %601 = vmatmul.bf16.gmra.mxu0 %v512
      %v602 = vpop.f32.mrf.mxu0
      %v603 = vadd.f32 0.0, %v602
      %v604 = vpop.f32.mrf.mxu0
      %v605 = vadd.f32 0.0, %v604
      %606 = vdwg.mxu0
      %v639 = vunpack.c.l.b16 %v319
      %v640 = vunpack.c.l.b16 %v320
      %v641 = vunpack.c.l.b16 %v321
      %v642 = vunpack.c.l.b16 %v322
      %v643 = vunpack.c.l.b16 %v323
      %v644 = vunpack.c.l.b16 %v324
      %v645 = vunpack.c.l.b16 %v325
      %v646 = vunpack.c.l.b16 %v326
      %v647 = vunpack.c.l.b16 %v327
      %v648 = vunpack.c.l.b16 %v328
      %v649 = vunpack.c.l.b16 %v329
      %v650 = vunpack.c.l.b16 %v330
      %v651 = vunpack.c.l.b16 %v331
      %v652 = vunpack.c.l.b16 %v332
      %v653 = vunpack.c.l.b16 %v333
      %v654 = vunpack.c.l.b16 %v334
      %v655 = vunpack.c.l.b16 %v335
      %v656 = vunpack.c.l.b16 %v336
      %v657 = vunpack.c.l.b16 %v337
      %v658 = vunpack.c.l.b16 %v338
      %v659 = vunpack.c.l.b16 %v339
      %v660 = vunpack.c.l.b16 %v340
      %v661 = vunpack.c.l.b16 %v341
      %v662 = vunpack.c.l.b16 %v342
      %v663 = vunpack.c.l.b16 %v343
      %v664 = vunpack.c.l.b16 %v344
      %v665 = vunpack.c.l.b16 %v345
      %v666 = vunpack.c.l.b16 %v346
      %v667 = vunpack.c.l.b16 %v347
      %v668 = vunpack.c.l.b16 %v348
      %v669 = vunpack.c.l.b16 %v349
      %v670 = vunpack.c.l.b16 %v350
      %v671 = vpack.c.b16 %v640, %v639
      %v672 = vpack.c.b16 %v642, %v641
      %v673 = vpack.c.b16 %v644, %v643
      %v674 = vpack.c.b16 %v646, %v645
      %v675 = vpack.c.b16 %v648, %v647
      %v676 = vpack.c.b16 %v650, %v649
      %v677 = vpack.c.b16 %v652, %v651
      %v678 = vpack.c.b16 %v654, %v653
      %v679 = vpack.c.b16 %v656, %v655
      %v680 = vpack.c.b16 %v658, %v657
      %v681 = vpack.c.b16 %v660, %v659
      %v682 = vpack.c.b16 %v662, %v661
      %v683 = vpack.c.b16 %v664, %v663
      %v684 = vpack.c.b16 %v666, %v665
      %v685 = vpack.c.b16 %v668, %v667
      %v686 = vpack.c.b16 %v670, %v669
      %v688 = vsel %vm465, %v671, 0
      %v691 = vsel %vm465, %v672, 0
      %v694 = vsel %vm465, %v673, 0
      %v697 = vsel %vm465, %v674, 0
      %v700 = vsel %vm465, %v675, 0
      %v703 = vsel %vm465, %v676, 0
      %v706 = vsel %vm465, %v677, 0
      %v709 = vsel %vm465, %v678, 0
      %v712 = vsel %vm465, %v679, 0
      %v715 = vsel %vm465, %v680, 0
      %v718 = vsel %vm465, %v681, 0
      %v721 = vsel %vm465, %v682, 0
      %v724 = vsel %vm465, %v683, 0
      %v727 = vsel %vm465, %v684, 0
      %v730 = vsel %vm465, %v685, 0
      %v733 = vsel %vm465, %v686, 0
      %v736 = vsel %vm514, %v351, 0
      %738 = vmatpush.bf16.msra.mxu0 0
      %739 = vmatpush.bf16.msra.mxu0 0
      %740 = vmatpush.bf16.msra.mxu0 0
      %741 = vmatpush.bf16.msra.mxu0 0
      %742 = vmatpush.bf16.msra.mxu0 0
      %743 = vmatpush.bf16.msra.mxu0 0
      %744 = vmatpush.bf16.msra.mxu0 0
      %745 = vmatpush.bf16.msra.mxu0 %v736
      %746 = vmatmul.bf16.gmra.mxu0 %v688
      %v747 = vpop.f32.mrf.mxu0
      %v748 = vadd.f32 %v528, %v747
      %v749 = vpop.f32.mrf.mxu0
      %v750 = vadd.f32 %v530, %v749
      %751 = vmatmul.bf16.gmra.mxu0 %v691
      %v752 = vpop.f32.mrf.mxu0
      %v753 = vadd.f32 %v533, %v752
      %v754 = vpop.f32.mrf.mxu0
      %v755 = vadd.f32 %v535, %v754
      %756 = vmatmul.bf16.gmra.mxu0 %v694
      %v757 = vpop.f32.mrf.mxu0
      %v758 = vadd.f32 %v538, %v757
      %v759 = vpop.f32.mrf.mxu0
      %v760 = vadd.f32 %v540, %v759
      %761 = vmatmul.bf16.gmra.mxu0 %v697
      %v762 = vpop.f32.mrf.mxu0
      %v763 = vadd.f32 %v543, %v762
      %v764 = vpop.f32.mrf.mxu0
      %v765 = vadd.f32 %v545, %v764
      %766 = vmatmul.bf16.gmra.mxu0 %v700
      %v767 = vpop.f32.mrf.mxu0
      %v768 = vadd.f32 %v548, %v767
      %v769 = vpop.f32.mrf.mxu0
      %v770 = vadd.f32 %v550, %v769
      %771 = vmatmul.bf16.gmra.mxu0 %v703
      %v772 = vpop.f32.mrf.mxu0
      %v773 = vadd.f32 %v553, %v772
      %v774 = vpop.f32.mrf.mxu0
      %v775 = vadd.f32 %v555, %v774
      %776 = vmatmul.bf16.gmra.mxu0 %v706
      %v777 = vpop.f32.mrf.mxu0
      %v778 = vadd.f32 %v558, %v777
      %v779 = vpop.f32.mrf.mxu0
      %v780 = vadd.f32 %v560, %v779
      %781 = vmatmul.bf16.gmra.mxu0 %v709
      %v782 = vpop.f32.mrf.mxu0
      %v783 = vadd.f32 %v563, %v782
      %v784 = vpop.f32.mrf.mxu0
      %v785 = vadd.f32 %v565, %v784
      %786 = vmatmul.bf16.gmra.mxu0 %v712
      %v787 = vpop.f32.mrf.mxu0
      %v788 = vadd.f32 %v568, %v787
      %v789 = vpop.f32.mrf.mxu0
      %v790 = vadd.f32 %v570, %v789
      %791 = vmatmul.bf16.gmra.mxu0 %v715
      %v792 = vpop.f32.mrf.mxu0
      %v793 = vadd.f32 %v573, %v792
      %v794 = vpop.f32.mrf.mxu0
      %v795 = vadd.f32 %v575, %v794
      %796 = vmatmul.bf16.gmra.mxu0 %v718
      %v797 = vpop.f32.mrf.mxu0
      %v798 = vadd.f32 %v578, %v797
      %v799 = vpop.f32.mrf.mxu0
      %v800 = vadd.f32 %v580, %v799
      %801 = vmatmul.bf16.gmra.mxu0 %v721
      %v802 = vpop.f32.mrf.mxu0
      %v803 = vadd.f32 %v583, %v802
      %v804 = vpop.f32.mrf.mxu0
      %v805 = vadd.f32 %v585, %v804
      %806 = vmatmul.bf16.gmra.mxu0 %v724
      %v807 = vpop.f32.mrf.mxu0
      %v808 = vadd.f32 %v588, %v807
      %v809 = vpop.f32.mrf.mxu0
      %v810 = vadd.f32 %v590, %v809
      %811 = vmatmul.bf16.gmra.mxu0 %v727
      %v812 = vpop.f32.mrf.mxu0
      %v813 = vadd.f32 %v593, %v812
      %v814 = vpop.f32.mrf.mxu0
      %v815 = vadd.f32 %v595, %v814
      %816 = vmatmul.bf16.gmra.mxu0 %v730
      %v817 = vpop.f32.mrf.mxu0
      %v818 = vadd.f32 %v598, %v817
      %v819 = vpop.f32.mrf.mxu0
      %v820 = vadd.f32 %v600, %v819
      %821 = vmatmul.bf16.gmra.mxu0 %v733
      %v822 = vpop.f32.mrf.mxu0
      %v823 = vadd.f32 %v603, %v822
      %v824 = vpop.f32.mrf.mxu0
      %v825 = vadd.f32 %v605, %v824
      %826 = vdwg.mxu0
      %v827 = vld [vmem:[%s298] sm:$0x1]
      %v829 = vperm.slane %v827, 0
      %v831 = vadd.f32 %v748, %v829
      %v832 = vadd.f32 %v750, %v829
      %v833 = vadd.f32 %v753, %v829
      %v834 = vadd.f32 %v755, %v829
      %v835 = vadd.f32 %v758, %v829
      %v836 = vadd.f32 %v760, %v829
      %v837 = vadd.f32 %v763, %v829
      %v838 = vadd.f32 %v765, %v829
      %v839 = vadd.f32 %v768, %v829
      %v840 = vadd.f32 %v770, %v829
      %v841 = vadd.f32 %v773, %v829
      %v842 = vadd.f32 %v775, %v829
      %v843 = vadd.f32 %v778, %v829
      %v844 = vadd.f32 %v780, %v829
      %v845 = vadd.f32 %v783, %v829
      %v846 = vadd.f32 %v785, %v829
      %v847 = vadd.f32 %v788, %v829
      %v848 = vadd.f32 %v790, %v829
      %v849 = vadd.f32 %v793, %v829
      %v850 = vadd.f32 %v795, %v829
      %v851 = vadd.f32 %v798, %v829
      %v852 = vadd.f32 %v800, %v829
      %v853 = vadd.f32 %v803, %v829
      %v854 = vadd.f32 %v805, %v829
      %v855 = vadd.f32 %v808, %v829
      %v856 = vadd.f32 %v810, %v829
      %v857 = vadd.f32 %v813, %v829
      %v858 = vadd.f32 %v815, %v829
      %v859 = vadd.f32 %v818, %v829
      %v860 = vadd.f32 %v820, %v829
      %v861 = vadd.f32 %v823, %v829
      %v862 = vadd.f32 %v825, %v829
      %v863 = vmax.f32 %v831, 0.0
      %v864 = vmax.f32 %v832, 0.0
      %v865 = vmax.f32 %v833, 0.0
      %v866 = vmax.f32 %v834, 0.0
      %v867 = vmax.f32 %v835, 0.0
      %v868 = vmax.f32 %v836, 0.0
      %v869 = vmax.f32 %v837, 0.0
      %v870 = vmax.f32 %v838, 0.0
      %v871 = vmax.f32 %v839, 0.0
      %v872 = vmax.f32 %v840, 0.0
      %v873 = vmax.f32 %v841, 0.0
      %v874 = vmax.f32 %v842, 0.0
      %v875 = vmax.f32 %v843, 0.0
      %v876 = vmax.f32 %v844, 0.0
      %v877 = vmax.f32 %v845, 0.0
      %v878 = vmax.f32 %v846, 0.0
      %v879 = vmax.f32 %v847, 0.0
      %v880 = vmax.f32 %v848, 0.0
      %v881 = vmax.f32 %v849, 0.0
      %v882 = vmax.f32 %v850, 0.0
      %v883 = vmax.f32 %v851, 0.0
      %v884 = vmax.f32 %v852, 0.0
      %v885 = vmax.f32 %v853, 0.0
      %v886 = vmax.f32 %v854, 0.0
      %v887 = vmax.f32 %v855, 0.0
      %v888 = vmax.f32 %v856, 0.0
      %v889 = vmax.f32 %v857, 0.0
      %v890 = vmax.f32 %v858, 0.0
      %v891 = vmax.f32 %v859, 0.0
      %v892 = vmax.f32 %v860, 0.0
      %v893 = vmax.f32 %v861, 0.0
      %v894 = vmax.f32 %v862, 0.0
      %vm895 = vcmask 130048
      %896 = vst.msk [vmem:[%s316] sm:$0xff] %vm895, %v863
      %897 = vst.msk [vmem:[%s316 + $0x8] sm:$0xff] %vm895, %v864
      %898 = vst.msk [vmem:[%s316 + $0x10] sm:$0xff] %vm895, %v865
      %899 = vst.msk [vmem:[%s316 + $0x18] sm:$0xff] %vm895, %v866
      %900 = vst.msk [vmem:[%s316 + $0x20] sm:$0xff] %vm895, %v867
      %901 = vst.msk [vmem:[%s316 + $0x28] sm:$0xff] %vm895, %v868
      %902 = vst.msk [vmem:[%s316 + $0x30] sm:$0xff] %vm895, %v869
      %903 = vst.msk [vmem:[%s316 + $0x38] sm:$0xff] %vm895, %v870
      %904 = vst.msk [vmem:[%s316 + $0x40] sm:$0xff] %vm895, %v871
      %905 = vst.msk [vmem:[%s316 + $0x48] sm:$0xff] %vm895, %v872
      %906 = vst.msk [vmem:[%s316 + $0x50] sm:$0xff] %vm895, %v873
      %907 = vst.msk [vmem:[%s316 + $0x58] sm:$0xff] %vm895, %v874
      %908 = vst.msk [vmem:[%s316 + $0x60] sm:$0xff] %vm895, %v875
      %909 = vst.msk [vmem:[%s316 + $0x68] sm:$0xff] %vm895, %v876
      %910 = vst.msk [vmem:[%s316 + $0x70] sm:$0xff] %vm895, %v877
      %911 = vst.msk [vmem:[%s316 + $0x78] sm:$0xff] %vm895, %v878
      %912 = vst.msk [vmem:[%s316 + $0x80] sm:$0xff] %vm895, %v879
      %913 = vst.msk [vmem:[%s316 + $0x88] sm:$0xff] %vm895, %v880
      %914 = vst.msk [vmem:[%s316 + $0x90] sm:$0xff] %vm895, %v881
      %915 = vst.msk [vmem:[%s316 + $0x98] sm:$0xff] %vm895, %v882
      %916 = vst.msk [vmem:[%s316 + $0xa0] sm:$0xff] %vm895, %v883
      %917 = vst.msk [vmem:[%s316 + $0xa8] sm:$0xff] %vm895, %v884
      %918 = vst.msk [vmem:[%s316 + $0xb0] sm:$0xff] %vm895, %v885
      %919 = vst.msk [vmem:[%s316 + $0xb8] sm:$0xff] %vm895, %v886
      %920 = vst.msk [vmem:[%s316 + $0xc0] sm:$0xff] %vm895, %v887
      %921 = vst.msk [vmem:[%s316 + $0xc8] sm:$0xff] %vm895, %v888
      %922 = vst.msk [vmem:[%s316 + $0xd0] sm:$0xff] %vm895, %v889
      %923 = vst.msk [vmem:[%s316 + $0xd8] sm:$0xff] %vm895, %v890
      %924 = vst.msk [vmem:[%s316 + $0xe0] sm:$0xff] %vm895, %v891
      %925 = vst.msk [vmem:[%s316 + $0xe8] sm:$0xff] %vm895, %v892
      %926 = vst.msk [vmem:[%s316 + $0xf0] sm:$0xff] %vm895, %v893
      %927 = vst.msk [vmem:[%s316 + $0xf8] sm:$0xff] %vm895, %v894
      %s928 = smul.u32 32, %s20
      %p929 = scmp.lt.s32.totalorder %s928, 63
      %s930 = scalar_select %p929, %s928, 63
      %p931 = scmp.lt.s32.totalorder %s21, 0
      %s932 = scalar_select %p931, %s21, 0
      %s933 = sadd.s32 %s932, %s930
      %s934 = smul.addr %s933, 8
      %s935 = scalar_lea.vmem %s5, %s934
      // Predicated region
      $region41: #{bottleneck_forward.5} parent=39 // pred_check
        %p936 = pneg %p178
      $region42: #{bottleneck_forward.5} parent=39 // pred_check_branch
        %938 = sbr.rel (%p936) target = $region44
      $region43: #{bottleneck_forward.5} parent=39 // pred_region
        %s939 = smul.u32 32, %s20
      $region44: #{bottleneck_forward.5} parent=39 // pred_fallthru
        _
    $region40: #{bottleneck_forward.5} parent=5 // pred_fallthru
      _
    %p940 = scmp.le.s32.totalorder 2, %s11
    // Predicated region
    $region45: #{bottleneck_forward.5} parent=5 // pred_check
      %p941 = pneg %p940
    $region46: #{bottleneck_forward.5} parent=5 // pred_check_branch
      %943 = sbr.rel (%p941) target = $region48
    $region47: #{bottleneck_forward.5} parent=5 // pred_region
      %s944 = ssub.s32 %s11, 2
      // Predicated region
      $region49: #{bottleneck_forward.5} parent=47 // pred_check
        %p945 = pneg %p184
      $region50: #{bottleneck_forward.5} parent=47 // pred_check_branch
        %947 = sbr.rel (%p945) target = $region52
      $region51: #{bottleneck_forward.5} parent=47 // pred_region
        %s948 = smul.u32 32, %s22
        %p949 = scmp.lt.s32.totalorder %s948, 63
        %s950 = scalar_select %p949, %s948, 63
        %p951 = scmp.lt.s32.totalorder %s23, 0
        %s952 = scalar_select %p951, %s23, 0
        %s953 = sadd.s32 %s952, %s950
        %s954 = smul.addr %s953, 8
        %s955 = scalar_lea.vmem %s5, %s954
      $region52: #{bottleneck_forward.5} parent=47 // pred_fallthru
        _
    $region48: #{bottleneck_forward.5} parent=5 // pred_fallthru
      _
  $region6: #{bottleneck_forward.5} parent=0 // loop_footer
    %s15 = sadd.s32 1, %s11
  $region7: #{bottleneck_forward.5} parent=0 // loop_footer_branch
    %10 = sbr.rel target = $region3
  $region8: #{bottleneck_forward.5} parent=0 // loop_exit
    _

// kernel: bottleneck_forward.4
$region0: #{bottleneck_forward.4}
  #allocation0 [shape = 'u32[]', space=smem, size = 0x4, offset = 0x4, fixed_abs, tag = 'smem constant byte address 0x4 - core index']
  #allocation1 [shape = 'u32[72,128]{1,0:T(1,128)}', space=vmem, size = 0x9000, scoped, tag = 'internal scratch']
  %s0 = inlined_call_operand.vmem [shape: bf16[2,324,4], index: 0, kind: input, shape index: {}]
  %s1 = inlined_call_operand.vmem [shape: bf16[3,3,4,4], index: 1, kind: input, shape index: {}]
  %s2 = inlined_call_operand.vmem [shape: f32[1,4], index: 2, kind: input, shape index: {}]
  %s3 = inlined_call_operand.vmem [shape: bf16[2,286,4], index: 3, kind: output, shape index: {}]
  %s4 = sld [smem:[#allocation0]]
  $region45: #{bottleneck_forward.4} parent=0
    _
  %s6 = ssub.s32 1, %s4
  %s7 = scalar_select 0, %s6, %s4
  loop: start=0, step=1, limit=4
  $region2: #{bottleneck_forward.4} parent=0 // loop_pre_header
    _
  $region3: #{bottleneck_forward.4} parent=0 // loop_header
    %s9 = sphi 0, %s13
    %p10 = scmp.ge.s32.totalorder %s9, 4
    %s16 = sphi 0, %s28
    %s17 = sphi 0, %s24
    %s18 = sphi 0, %s16
    %s19 = sphi 0, %s17
    %s20 = sphi 0, %s18
    %s21 = sphi 0, %s19
    %s31 = sphi 0, %s33
    %s34 = sphi 0, %s31
    %s35 = sphi 0, %s34
    %s51 = sphi 0, %s35
    %s57 = sphi 0, %s59
    %s60 = sphi 0, %s57
    %s61 = sphi 0, %s60
    %s77 = sphi 0, %s61
    %s83 = sphi 0, %s85
    %s86 = sphi 0, %s83
    %s87 = sphi 0, %s86
    %s103 = sphi 0, %s87
    %s111 = sphi 0, %s113
    %s114 = sphi 0, %s111
    %s115 = sphi 0, %s114
    %s131 = sphi 0, %s115
  $region4: #{bottleneck_forward.4} parent=0 // loop_header_branch
    %12 = sbr.rel (%p10) target = $region8
  $region5: #{bottleneck_forward.4} parent=0 // loop_body
    %s14 = ssub.s32 %s9, 1
    %s15 = ssub.s32 %s9, 2
    %s22 = sadd.s32 1, %s17
    %p23 = scmp.ge.s32.totalorder %s22, 1
    %s24 = scalar_select %p23, 0, %s22
    %s25 = sadd.s32 1, %s16
    %s26 = scalar_select %p23, %s25, %s16
    %p27 = scmp.ge.s32.totalorder %s26, 2
    %s28 = scalar_select %p27, 0, %s26
    %s29 = ssub.s32 %s16, %s28
    %p30 = scmp.eq.s32.totalorder %s29, 0
    %s32 = sadd.s32 %s31, 1
    %s33 = scalar_select %p30, %s31, %s32
    %p36 = pneg %p30
    %p37 = scmp.eq.s32.totalorder %s9, 1
    %p38 = por %p36, %p37
    %p39 = scmp.ne.s32.totalorder %s31, %s34
    %p40 = scmp.eq.s32.totalorder %s9, 0
    %p41 = por %p39, %p40
    %p42 = scmp.ne.s32.totalorder %s31, %s34
    %p43 = scmp.eq.s32.totalorder %s14, 1
    %p44 = por %p42, %p43
    %p45 = scmp.ne.s32.totalorder %s34, %s35
    %p46 = scmp.eq.s32.totalorder %s14, 0
    %p47 = por %p45, %p46
    %p48 = scmp.ne.s32.totalorder %s34, %s35
    %p49 = scmp.eq.s32.totalorder %s15, 1
    %p50 = por %p48, %p49
    %p52 = scmp.ne.s32.totalorder %s35, %s51
    %p53 = scmp.eq.s32.totalorder %s15, 0
    %p54 = por %p52, %p53
    %s55 = ssub.s32 %s17, %s24
    %p56 = scmp.eq.s32.totalorder %s55, 0
    %s58 = sadd.s32 %s57, 1
    %s59 = scalar_select %p56, %s57, %s58
    %p62 = pneg %p56
    %p63 = scmp.eq.s32.totalorder %s9, 1
    %p64 = por %p62, %p63
    %p65 = scmp.ne.s32.totalorder %s57, %s60
    %p66 = scmp.eq.s32.totalorder %s9, 0
    %p67 = por %p65, %p66
    %p68 = scmp.ne.s32.totalorder %s57, %s60
    %p69 = scmp.eq.s32.totalorder %s14, 1
    %p70 = por %p68, %p69
    %p71 = scmp.ne.s32.totalorder %s60, %s61
    %p72 = scmp.eq.s32.totalorder %s14, 0
    %p73 = por %p71, %p72
    %p74 = scmp.ne.s32.totalorder %s60, %s61
    %p75 = scmp.eq.s32.totalorder %s15, 1
    %p76 = por %p74, %p75
    %p78 = scmp.ne.s32.totalorder %s61, %s77
    %p79 = scmp.eq.s32.totalorder %s15, 0
    %p80 = por %p78, %p79
    %s81 = ssub.s32 %s17, %s24
    %p82 = scmp.eq.s32.totalorder %s81, 0
    %s84 = sadd.s32 %s83, 1
    %s85 = scalar_select %p82, %s83, %s84
    %p88 = pneg %p82
    %p89 = scmp.eq.s32.totalorder %s9, 1
    %p90 = por %p88, %p89
    %p91 = scmp.ne.s32.totalorder %s83, %s86
    %p92 = scmp.eq.s32.totalorder %s9, 0
    %p93 = por %p91, %p92
    %p94 = scmp.ne.s32.totalorder %s83, %s86
    %p95 = scmp.eq.s32.totalorder %s14, 1
    %p96 = por %p94, %p95
    %p97 = scmp.ne.s32.totalorder %s86, %s87
    %p98 = scmp.eq.s32.totalorder %s14, 0
    %p99 = por %p97, %p98
    %p100 = scmp.ne.s32.totalorder %s86, %s87
    %p101 = scmp.eq.s32.totalorder %s15, 1
    %p102 = por %p100, %p101
    %p104 = scmp.ne.s32.totalorder %s87, %s103
    %p105 = scmp.eq.s32.totalorder %s15, 0
    %p106 = por %p104, %p105
    %s107 = ssub.s32 %s16, %s28
    %s108 = ssub.s32 %s17, %s24
    %s109 = sor.u32 %s107, %s108
    %p110 = scmp.eq.s32.totalorder %s109, 0
    %s112 = sadd.s32 %s111, 1
    %s113 = scalar_select %p110, %s111, %s112
    %p116 = pneg %p110
    %p117 = scmp.eq.s32.totalorder %s9, 1
    %p118 = por %p116, %p117
    %p119 = scmp.ne.s32.totalorder %s111, %s114
    %p120 = scmp.eq.s32.totalorder %s9, 0
    %p121 = por %p119, %p120
    %p122 = scmp.ne.s32.totalorder %s111, %s114
    %p123 = scmp.eq.s32.totalorder %s14, 1
    %p124 = por %p122, %p123
    %p125 = scmp.ne.s32.totalorder %s114, %s115
    %p126 = scmp.eq.s32.totalorder %s14, 0
    %p127 = por %p125, %p126
    %p128 = scmp.ne.s32.totalorder %s114, %s115
    %p129 = scmp.eq.s32.totalorder %s15, 1
    %p130 = por %p128, %p129
    %p132 = scmp.ne.s32.totalorder %s115, %s131
    %p133 = scmp.eq.s32.totalorder %s15, 0
    %p134 = por %p132, %p133
    %p135 = scmp.le.s32.totalorder 1, %s9
    %p136 = scmp.lt.s32.totalorder %s9, 3
    %p137 = pnand %p135, %p136
    %p138 = pneg %p137
    // Predicated region
    $region9: #{bottleneck_forward.4} parent=5 // pred_check
      _
    $region10: #{bottleneck_forward.4} parent=5 // pred_check_branch
      %140 = sbr.rel (%p137) target = $region12
    $region11: #{bottleneck_forward.4} parent=5 // pred_region
      %s141 = ssub.s32 %s9, 1
      // Predicated region
      $region13: #{bottleneck_forward.4} parent=11 // pred_check
        %p142 = pneg %p73
      $region14: #{bottleneck_forward.4} parent=11 // pred_check_branch
        %144 = sbr.rel (%p142) target = $region16
      $region15: #{bottleneck_forward.4} parent=11 // pred_region
        %p145 = scmp.lt.s32.totalorder %s19, 0
        %s146 = scalar_select %p145, %s19, 0
        %s147 = smul.addr %s146, 2
        %s148 = scalar_lea.vmem %s1, %s147
      $region16: #{bottleneck_forward.4} parent=11 // pred_fallthru
        _
      // Predicated region
      $region17: #{bottleneck_forward.4} parent=11 // pred_check
        %p149 = pneg %p99
      $region18: #{bottleneck_forward.4} parent=11 // pred_check_branch
        %151 = sbr.rel (%p149) target = $region20
      $region19: #{bottleneck_forward.4} parent=11 // pred_region
        %p152 = scmp.lt.s32.totalorder %s19, 0
        %s153 = scalar_select %p152, %s19, 0
        %s154 = scalar_lea.vmem %s2, %s153
      $region20: #{bottleneck_forward.4} parent=11 // pred_fallthru
        _
    $region12: #{bottleneck_forward.4} parent=5 // pred_fallthru
      _
    %p155 = scmp.lt.s32.totalorder %s9, 2
    // Predicated region
    $region21: #{bottleneck_forward.4} parent=5 // pred_check
      %p156 = pneg %p155
    $region22: #{bottleneck_forward.4} parent=5 // pred_check_branch
      %158 = sbr.rel (%p156) target = $region24
    $region23: #{bottleneck_forward.4} parent=5 // pred_region
      // Predicated region
      $region25: #{bottleneck_forward.4} parent=23 // pred_check
        %p159 = pneg %p41
      $region26: #{bottleneck_forward.4} parent=23 // pred_check_branch
        %161 = sbr.rel (%p159) target = $region28
      $region27: #{bottleneck_forward.4} parent=23 // pred_region
        %p162 = scmp.lt.s32.totalorder %s16, 1
        %s163 = scalar_select %p162, %s16, 1
        %s164 = smul.addr %s163, 41
        %s165 = smul.addr %s164, 4
        %s166 = scalar_lea.vmem %s0, %s165
      $region28: #{bottleneck_forward.4} parent=23 // pred_fallthru
        _
    $region24: #{bottleneck_forward.4} parent=5 // pred_fallthru
      _
    %p167 = scmp.le.s32.totalorder 1, %s9
    %p168 = scmp.lt.s32.totalorder %s9, 3
    %p169 = pnand %p167, %p168
    %p170 = pneg %p169
    // Predicated region
    $region29: #{bottleneck_forward.4} parent=5 // pred_check
      _
    $region30: #{bottleneck_forward.4} parent=5 // pred_check_branch
      %172 = sbr.rel (%p169) target = $region32
    $region31: #{bottleneck_forward.4} parent=5 // pred_region
      %s173 = ssub.s32 %s9, 1
      %p174 = scmp.lt.s32.totalorder %s18, 1
      %s175 = scalar_select %p174, %s18, 1
      %s176 = smul.addr %s175, 41
      %s177 = smul.addr %s176, 4
      %s178 = scalar_lea.vmem %s0, %s177
      %p179 = pneg %p47
      %p180 = pneg %p44
      %p181 = scmp.lt.s32.totalorder %s19, 0
      %s182 = scalar_select %p181, %s19, 0
      %s183 = smul.addr %s182, 2
      %s184 = scalar_lea.vmem %s1, %s183
      %p185 = pneg %p73
      %p186 = pneg %p70
      %p187 = scmp.lt.s32.totalorder %s19, 0
      %s188 = scalar_select %p187, %s19, 0
      %s189 = scalar_lea.vmem %s2, %s188
      %p190 = pneg %p99
      %p191 = pneg %p96
      %p192 = pneg %p127
      %p193 = pneg %p124
      %p194 = scmp.lt.s32.totalorder %s18, 1
      %s195 = scalar_select %p194, %s18, 1
      %p196 = scmp.lt.s32.totalorder %s19, 0
      %s197 = scalar_select %p196, %s19, 0
      %s198 = smul.addr %s195, 36
      %s199 = sadd.s32 %s197, %s198
      %s200 = smul.addr %s199, 4
      %s201 = scalar_lea.vmem %s3, %s200
      %p202 = scmp.lt.s32.totalorder %s18, 1
      %s203 = scalar_select %p202, %s18, 1
      %s204 = smul.addr %s203, 41
      %s205 = smul.addr %s204, 4
      %s206 = scalar_lea.vmem %s0, %s205
      %p207 = scmp.lt.s32.totalorder %s19, 0
      %s208 = scalar_select %p207, %s19, 0
      %s209 = smul.addr %s208, 2
      %s210 = scalar_lea.vmem %s1, %s209
      %p211 = scmp.lt.s32.totalorder %s19, 0
      %s212 = scalar_select %p211, %s19, 0
      %s213 = scalar_lea.vmem %s2, %s212
      %p214 = scmp.lt.s32.totalorder %s18, 1
      %s215 = scalar_select %p214, %s18, 1
      %p216 = scmp.lt.s32.totalorder %s19, 0
      %s217 = scalar_select %p216, %s19, 0
      %s218 = smul.addr %s215, 36
      %s219 = sadd.s32 %s217, %s218
      %s220 = smul.addr %s219, 4
      %s221 = scalar_lea.vmem %s3, %s220
      %v223 = vld [vmem:[%s206] sm:$0xf]
      %v224 = vld [vmem:[%s206 + $0x4] sm:$0xf]
      %v225 = vld [vmem:[%s206 + $0x8] sm:$0xf]
      %v226 = vld [vmem:[%s206 + $0xc] sm:$0xf]
      %v227 = vld [vmem:[%s206 + $0x10] sm:$0xf]
      %v228 = vld [vmem:[%s206 + $0x14] sm:$0xf]
      %v229 = vld [vmem:[%s206 + $0x18] sm:$0xf]
      %v230 = vld [vmem:[%s206 + $0x1c] sm:$0xf]
      %v231 = vld [vmem:[%s206 + $0x20] sm:$0xf]
      %v232 = vld [vmem:[%s206 + $0x24] sm:$0xf]
      %v233 = vld [vmem:[%s206 + $0x28] sm:$0xf]
      %v234 = vld [vmem:[%s206 + $0x2c] sm:$0xf]
      %v235 = vld [vmem:[%s206 + $0x30] sm:$0xf]
      %v236 = vld [vmem:[%s206 + $0x34] sm:$0xf]
      %v237 = vld [vmem:[%s206 + $0x38] sm:$0xf]
      %v238 = vld [vmem:[%s206 + $0x3c] sm:$0xf]
      %v239 = vld [vmem:[%s206 + $0x40] sm:$0xf]
      %v240 = vld [vmem:[%s206 + $0x44] sm:$0xf]
      %v241 = vld [vmem:[%s206 + $0x48] sm:$0xf]
      %v242 = vld [vmem:[%s206 + $0x4c] sm:$0xf]
      %v243 = vld [vmem:[%s206 + $0x50] sm:$0xf]
      %v244 = vld [vmem:[%s206 + $0x54] sm:$0xf]
      %v245 = vld [vmem:[%s206 + $0x58] sm:$0xf]
      %v246 = vld [vmem:[%s206 + $0x5c] sm:$0xf]
      %v247 = vld [vmem:[%s206 + $0x60] sm:$0xf]
      %v248 = vld [vmem:[%s206 + $0x64] sm:$0xf]
      %v249 = vld [vmem:[%s206 + $0x68] sm:$0xf]
      %v250 = vld [vmem:[%s206 + $0x6c] sm:$0xf]
      %v251 = vld [vmem:[%s206 + $0x70] sm:$0xf]
      %v252 = vld [vmem:[%s206 + $0x74] sm:$0xf]
      %v253 = vld [vmem:[%s206 + $0x78] sm:$0xf]
      %v254 = vld [vmem:[%s206 + $0x7c] sm:$0xf]
      %v255 = vld [vmem:[%s206 + $0x80] sm:$0xf]
      %v256 = vld [vmem:[%s206 + $0x84] sm:$0xf]
      %v257 = vld [vmem:[%s206 + $0x88] sm:$0xf]
      %v258 = vld [vmem:[%s206 + $0x8c] sm:$0x7]
      %v259 = vld [vmem:[%s210] sm:$0x3]
      %v260 = vld [vmem:[%s206 + $0x8c] sm:$0xf]
      %s261 = scalar_lea.vmem %s210, 2
      %v262 = vld [vmem:[%s261] sm:$0x3]
      %v299 = vunpack.c.l.b16 %v223
      %v300 = vunpack.c.l.b16 %v224
      %v301 = vunpack.c.l.b16 %v225
      %v302 = vunpack.c.l.b16 %v226
      %v303 = vunpack.c.l.b16 %v227
      %v304 = vunpack.c.l.b16 %v228
      %v305 = vunpack.c.l.b16 %v229
      %v306 = vunpack.c.l.b16 %v230
      %v307 = vunpack.c.l.b16 %v231
      %v308 = vunpack.c.l.b16 %v232
      %v309 = vunpack.c.l.b16 %v233
      %v310 = vunpack.c.l.b16 %v234
      %v311 = vunpack.c.l.b16 %v235
      %v312 = vunpack.c.l.b16 %v236
      %v313 = vunpack.c.l.b16 %v237
      %v314 = vunpack.c.l.b16 %v238
      %v315 = vunpack.c.l.b16 %v239
      %v316 = vunpack.c.l.b16 %v240
      %v317 = vunpack.c.l.b16 %v241
      %v318 = vunpack.c.l.b16 %v242
      %v319 = vunpack.c.l.b16 %v243
      %v320 = vunpack.c.l.b16 %v244
      %v321 = vunpack.c.l.b16 %v245
      %v322 = vunpack.c.l.b16 %v246
      %v323 = vunpack.c.l.b16 %v247
      %v324 = vunpack.c.l.b16 %v248
      %v325 = vunpack.c.l.b16 %v249
      %v326 = vunpack.c.l.b16 %v250
      %v327 = vunpack.c.l.b16 %v251
      %v328 = vunpack.c.l.b16 %v252
      %v329 = vunpack.c.l.b16 %v253
      %v330 = vunpack.c.l.b16 %v254
      %v331 = vunpack.c.l.b16 %v255
      %v332 = vunpack.c.l.b16 %v256
      %v333 = vunpack.c.l.b16 %v257
      %v334 = vunpack.c.l.b16 %v260
      %v335 = vpack.c.b16 %v300, %v299
      %v336 = vpack.c.b16 %v302, %v301
      %v337 = vpack.c.b16 %v304, %v303
      %v338 = vpack.c.b16 %v306, %v305
      %v339 = vpack.c.b16 %v308, %v307
      %v340 = vpack.c.b16 %v310, %v309
      %v341 = vpack.c.b16 %v312, %v311
      %v342 = vpack.c.b16 %v314, %v313
      %v343 = vpack.c.b16 %v316, %v315
      %v344 = vpack.c.b16 %v318, %v317
      %v345 = vpack.c.b16 %v320, %v319
      %v346 = vpack.c.b16 %v322, %v321
      %v347 = vpack.c.b16 %v324, %v323
      %v348 = vpack.c.b16 %v326, %v325
      %v349 = vpack.c.b16 %v328, %v327
      %v350 = vpack.c.b16 %v330, %v329
      %v351 = vpack.c.b16 %v332, %v331
      %v352 = vpack.c.b16 %v334, %v333
      %vm353 = vsmask.f32 7424
      %v355 = vshrl.u32 %v335, 16
      %v357 = vshll.u32 %v335, 16
      %v359 = vrot.slane %v357, 1
      %v360 = vor.u32 %v355, %v359
      %v362 = vshll.u32 %v336, 16
      %v364 = vrot.slane %v362, 1
      %v365 = vsel %vm353, %v360, %v364
      %v366 = vshrl.u32 %v336, 16
      %v368 = vor.u32 %v366, %v364
      %v370 = vshll.u32 %v337, 16
      %v372 = vrot.slane %v370, 1
      %v373 = vsel %vm353, %v368, %v372
      %v374 = vshrl.u32 %v337, 16
      %v376 = vor.u32 %v374, %v372
      %v378 = vshll.u32 %v338, 16
      %v380 = vrot.slane %v378, 1
      %v381 = vsel %vm353, %v376, %v380
      %v382 = vshrl.u32 %v338, 16
      %v384 = vor.u32 %v382, %v380
      %v386 = vshll.u32 %v339, 16
      %v388 = vrot.slane %v386, 1
      %v389 = vsel %vm353, %v384, %v388
      %v390 = vshrl.u32 %v339, 16
      %v392 = vor.u32 %v390, %v388
      %v394 = vshll.u32 %v340, 16
      %v396 = vrot.slane %v394, 1
      %v397 = vsel %vm353, %v392, %v396
      %v398 = vshrl.u32 %v340, 16
      %v400 = vor.u32 %v398, %v396
      %v402 = vshll.u32 %v341, 16
      %v404 = vrot.slane %v402, 1
      %v405 = vsel %vm353, %v400, %v404
      %v406 = vshrl.u32 %v341, 16
      %v408 = vor.u32 %v406, %v404
      %v410 = vshll.u32 %v342, 16
      %v412 = vrot.slane %v410, 1
      %v413 = vsel %vm353, %v408, %v412
      %v414 = vshrl.u32 %v342, 16
      %v416 = vor.u32 %v414, %v412
      %v418 = vshll.u32 %v343, 16
      %v420 = vrot.slane %v418, 1
      %v421 = vsel %vm353, %v416, %v420
      %v422 = vshrl.u32 %v343, 16
      %v424 = vor.u32 %v422, %v420
      %v426 = vshll.u32 %v344, 16
      %v428 = vrot.slane %v426, 1
      %v429 = vsel %vm353, %v424, %v428
      %v430 = vshrl.u32 %v344, 16
      %v432 = vor.u32 %v430, %v428
      %v434 = vshll.u32 %v345, 16
      %v436 = vrot.slane %v434, 1
      %v437 = vsel %vm353, %v432, %v436
      %v438 = vshrl.u32 %v345, 16
      %v440 = vor.u32 %v438, %v436
      %v442 = vshll.u32 %v346, 16
      %v444 = vrot.slane %v442, 1
      %v445 = vsel %vm353, %v440, %v444
      %v446 = vshrl.u32 %v346, 16
      %v448 = vor.u32 %v446, %v444
      %v450 = vshll.u32 %v347, 16
      %v452 = vrot.slane %v450, 1
      %v453 = vsel %vm353, %v448, %v452
      %v454 = vshrl.u32 %v347, 16
      %v456 = vor.u32 %v454, %v452
      %v458 = vshll.u32 %v348, 16
      %v460 = vrot.slane %v458, 1
      %v461 = vsel %vm353, %v456, %v460
      %v462 = vshrl.u32 %v348, 16
      %v464 = vor.u32 %v462, %v460
      %v466 = vshll.u32 %v349, 16
      %v468 = vrot.slane %v466, 1
      %v469 = vsel %vm353, %v464, %v468
      %v470 = vshrl.u32 %v349, 16
      %v472 = vor.u32 %v470, %v468
      %v474 = vshll.u32 %v350, 16
      %v476 = vrot.slane %v474, 1
      %v477 = vsel %vm353, %v472, %v476
      %v478 = vshrl.u32 %v350, 16
      %v480 = vor.u32 %v478, %v476
      %v482 = vshll.u32 %v351, 16
      %v484 = vrot.slane %v482, 1
      %v485 = vsel %vm353, %v480, %v484
      %v486 = vshrl.u32 %v351, 16
      %v488 = vor.u32 %v486, %v484
      %v490 = vshll.u32 %v352, 16
      %v492 = vrot.slane %v490, 1
      %v493 = vsel %vm353, %v488, %v492
      %v494 = vshrl.u32 %v352, 16
      %v496 = vor.u32 %v494, %v492
      %vm497 = vcmask 31744
      %v499 = vsel %vm497, %v365, 0
      %v502 = vsel %vm497, %v373, 0
      %v505 = vsel %vm497, %v381, 0
      %v508 = vsel %vm497, %v389, 0
      %v511 = vsel %vm497, %v397, 0
      %v514 = vsel %vm497, %v405, 0
      %v517 = vsel %vm497, %v413, 0
      %v520 = vsel %vm497, %v421, 0
      %v523 = vsel %vm497, %v429, 0
      %v526 = vsel %vm497, %v437, 0
      %v529 = vsel %vm497, %v445, 0
      %v532 = vsel %vm497, %v453, 0
      %v535 = vsel %vm497, %v461, 0
      %v538 = vsel %vm497, %v469, 0
      %v541 = vsel %vm497, %v477, 0
      %v544 = vsel %vm497, %v485, 0
      %v547 = vsel %vm497, %v493, 0
      %v550 = vsel %vm497, %v496, 0
      %vm552 = vcmask 1041408
      %v554 = vsel %vm552, %v262, 0
      %556 = vmatpush.bf16.msra.mxu0 0
      %557 = vmatpush.bf16.msra.mxu0 0
      %558 = vmatpush.bf16.msra.mxu0 0
      %559 = vmatpush.bf16.msra.mxu0 0
      %560 = vmatpush.bf16.msra.mxu0 0
      %561 = vmatpush.bf16.msra.mxu0 0
      %562 = vmatpush.bf16.msra.mxu0 0
      %563 = vmatpush.bf16.msra.mxu0 %v554
      %564 = vmatmul.bf16.gmra.mxu0 %v499
      %v565 = vpop.f32.mrf.mxu0
      %v566 = vadd.f32 0.0, %v565
      %v567 = vpop.f32.mrf.mxu0
      %v568 = vadd.f32 0.0, %v567
      %569 = vmatmul.bf16.gmra.mxu0 %v502
      %v570 = vpop.f32.mrf.mxu0
      %v571 = vadd.f32 0.0, %v570
      %v572 = vpop.f32.mrf.mxu0
      %v573 = vadd.f32 0.0, %v572
      %574 = vmatmul.bf16.gmra.mxu0 %v505
      %v575 = vpop.f32.mrf.mxu0
      %v576 = vadd.f32 0.0, %v575
      %v577 = vpop.f32.mrf.mxu0
      %v578 = vadd.f32 0.0, %v577
      %579 = vmatmul.bf16.gmra.mxu0 %v508
      %v580 = vpop.f32.mrf.mxu0
      %v581 = vadd.f32 0.0, %v580
      %v582 = vpop.f32.mrf.mxu0
      %v583 = vadd.f32 0.0, %v582
      %584 = vmatmul.bf16.gmra.mxu0 %v511
      %v585 = vpop.f32.mrf.mxu0
      %v586 = vadd.f32 0.0, %v585
      %v587 = vpop.f32.mrf.mxu0
      %v588 = vadd.f32 0.0, %v587
      %589 = vmatmul.bf16.gmra.mxu0 %v514
      %v590 = vpop.f32.mrf.mxu0
      %v591 = vadd.f32 0.0, %v590
      %v592 = vpop.f32.mrf.mxu0
      %v593 = vadd.f32 0.0, %v592
      %594 = vmatmul.bf16.gmra.mxu0 %v517
      %v595 = vpop.f32.mrf.mxu0
      %v596 = vadd.f32 0.0, %v595
      %v597 = vpop.f32.mrf.mxu0
      %v598 = vadd.f32 0.0, %v597
      %599 = vmatmul.bf16.gmra.mxu0 %v520
      %v600 = vpop.f32.mrf.mxu0
      %v601 = vadd.f32 0.0, %v600
      %v602 = vpop.f32.mrf.mxu0
      %v603 = vadd.f32 0.0, %v602
      %604 = vmatmul.bf16.gmra.mxu0 %v523
      %v605 = vpop.f32.mrf.mxu0
      %v606 = vadd.f32 0.0, %v605
      %v607 = vpop.f32.mrf.mxu0
      %v608 = vadd.f32 0.0, %v607
      %609 = vmatmul.bf16.gmra.mxu0 %v526
      %v610 = vpop.f32.mrf.mxu0
      %v611 = vadd.f32 0.0, %v610
      %v612 = vpop.f32.mrf.mxu0
      %v613 = vadd.f32 0.0, %v612
      %614 = vmatmul.bf16.gmra.mxu0 %v529
      %v615 = vpop.f32.mrf.mxu0
      %v616 = vadd.f32 0.0, %v615
      %v617 = vpop.f32.mrf.mxu0
      %v618 = vadd.f32 0.0, %v617
      %619 = vmatmul.bf16.gmra.mxu0 %v532
      %v620 = vpop.f32.mrf.mxu0
      %v621 = vadd.f32 0.0, %v620
      %v622 = vpop.f32.mrf.mxu0
      %v623 = vadd.f32 0.0, %v622
      %624 = vmatmul.bf16.gmra.mxu0 %v535
      %v625 = vpop.f32.mrf.mxu0
      %v626 = vadd.f32 0.0, %v625
      %v627 = vpop.f32.mrf.mxu0
      %v628 = vadd.f32 0.0, %v627
      %629 = vmatmul.bf16.gmra.mxu0 %v538
      %v630 = vpop.f32.mrf.mxu0
      %v631 = vadd.f32 0.0, %v630
      %v632 = vpop.f32.mrf.mxu0
      %v633 = vadd.f32 0.0, %v632
      %634 = vmatmul.bf16.gmra.mxu0 %v541
      %v635 = vpop.f32.mrf.mxu0
      %v636 = vadd.f32 0.0, %v635
      %v637 = vpop.f32.mrf.mxu0
      %v638 = vadd.f32 0.0, %v637
      %639 = vmatmul.bf16.gmra.mxu0 %v544
      %v640 = vpop.f32.mrf.mxu0
      %v641 = vadd.f32 0.0, %v640
      %v642 = vpop.f32.mrf.mxu0
      %v643 = vadd.f32 0.0, %v642
      %644 = vmatmul.bf16.gmra.mxu0 %v547
      %v645 = vpop.f32.mrf.mxu0
      %v646 = vadd.f32 0.0, %v645
      %v647 = vpop.f32.mrf.mxu0
      %v648 = vadd.f32 0.0, %v647
      %649 = vmatmul.bf16.gmra.mxu0 %v550
      %v650 = vpop.f32.mrf.mxu0
      %v651 = vadd.f32 0.0, %v650
      %v652 = vpop.f32.mrf.mxu0
      %v653 = vadd.f32 0.0, %v652
      %654 = vdwg.mxu0
      %v656 = vunpack.c.l.b16 %v258
      %v657 = vpack.c.b16 %v656, %v333
      %v658 = vsel %vm497, %v335, 0
      %v660 = vsel %vm497, %v336, 0
      %v662 = vsel %vm497, %v337, 0
      %v664 = vsel %vm497, %v338, 0
      %v666 = vsel %vm497, %v339, 0
      %v668 = vsel %vm497, %v340, 0
      %v670 = vsel %vm497, %v341, 0
      %v672 = vsel %vm497, %v342, 0
      %v674 = vsel %vm497, %v343, 0
      %v676 = vsel %vm497, %v344, 0
      %v678 = vsel %vm497, %v345, 0
      %v680 = vsel %vm497, %v346, 0
      %v682 = vsel %vm497, %v347, 0
      %v684 = vsel %vm497, %v348, 0
      %v686 = vsel %vm497, %v349, 0
      %v688 = vsel %vm497, %v350, 0
      %v690 = vsel %vm497, %v351, 0
      %v693 = vsel %vm497, %v657, 0
      %v696 = vsel %vm552, %v259, 0
      %698 = vmatpush.bf16.msra.mxu0 0
      %699 = vmatpush.bf16.msra.mxu0 0
      %700 = vmatpush.bf16.msra.mxu0 0
      %701 = vmatpush.bf16.msra.mxu0 0
      %702 = vmatpush.bf16.msra.mxu0 0
      %703 = vmatpush.bf16.msra.mxu0 0
      %704 = vmatpush.bf16.msra.mxu0 0
      %705 = vmatpush.bf16.msra.mxu0 %v696
      %706 = vmatmul.bf16.gmra.mxu0 %v658
      %v707 = vpop.f32.mrf.mxu0
      %v708 = vadd.f32 %v566, %v707
      %v709 = vpop.f32.mrf.mxu0
      %v710 = vadd.f32 %v568, %v709
      %711 = vmatmul.bf16.gmra.mxu0 %v660
      %v712 = vpop.f32.mrf.mxu0
      %v713 = vadd.f32 %v571, %v712
      %v714 = vpop.f32.mrf.mxu0
      %v715 = vadd.f32 %v573, %v714
      %716 = vmatmul.bf16.gmra.mxu0 %v662
      %v717 = vpop.f32.mrf.mxu0
      %v718 = vadd.f32 %v576, %v717
      %v719 = vpop.f32.mrf.mxu0
      %v720 = vadd.f32 %v578, %v719
      %721 = vmatmul.bf16.gmra.mxu0 %v664
      %v722 = vpop.f32.mrf.mxu0
      %v723 = vadd.f32 %v581, %v722
      %v724 = vpop.f32.mrf.mxu0
      %v725 = vadd.f32 %v583, %v724
      %726 = vmatmul.bf16.gmra.mxu0 %v666
      %v727 = vpop.f32.mrf.mxu0
      %v728 = vadd.f32 %v586, %v727
      %v729 = vpop.f32.mrf.mxu0
      %v730 = vadd.f32 %v588, %v729
      %731 = vmatmul.bf16.gmra.mxu0 %v668
      %v732 = vpop.f32.mrf.mxu0
      %v733 = vadd.f32 %v591, %v732
      %v734 = vpop.f32.mrf.mxu0
      %v735 = vadd.f32 %v593, %v734
      %736 = vmatmul.bf16.gmra.mxu0 %v670
      %v737 = vpop.f32.mrf.mxu0
      %v738 = vadd.f32 %v596, %v737
      %v739 = vpop.f32.mrf.mxu0
      %v740 = vadd.f32 %v598, %v739
      %741 = vmatmul.bf16.gmra.mxu0 %v672
      %v742 = vpop.f32.mrf.mxu0
      %v743 = vadd.f32 %v601, %v742
      %v744 = vpop.f32.mrf.mxu0
      %v745 = vadd.f32 %v603, %v744
      %746 = vmatmul.bf16.gmra.mxu0 %v674
      %v747 = vpop.f32.mrf.mxu0
      %v748 = vadd.f32 %v606, %v747
      %v749 = vpop.f32.mrf.mxu0
      %v750 = vadd.f32 %v608, %v749
      %751 = vmatmul.bf16.gmra.mxu0 %v676
      %v752 = vpop.f32.mrf.mxu0
      %v753 = vadd.f32 %v611, %v752
      %v754 = vpop.f32.mrf.mxu0
      %v755 = vadd.f32 %v613, %v754
      %756 = vmatmul.bf16.gmra.mxu0 %v678
      %v757 = vpop.f32.mrf.mxu0
      %v758 = vadd.f32 %v616, %v757
      %v759 = vpop.f32.mrf.mxu0
      %v760 = vadd.f32 %v618, %v759
      %761 = vmatmul.bf16.gmra.mxu0 %v680
      %v762 = vpop.f32.mrf.mxu0
      %v763 = vadd.f32 %v621, %v762
      %v764 = vpop.f32.mrf.mxu0
      %v765 = vadd.f32 %v623, %v764
      %766 = vmatmul.bf16.gmra.mxu0 %v682
      %v767 = vpop.f32.mrf.mxu0
      %v768 = vadd.f32 %v626, %v767
      %v769 = vpop.f32.mrf.mxu0
      %v770 = vadd.f32 %v628, %v769
      %771 = vmatmul.bf16.gmra.mxu0 %v684
      %v772 = vpop.f32.mrf.mxu0
      %v773 = vadd.f32 %v631, %v772
      %v774 = vpop.f32.mrf.mxu0
      %v775 = vadd.f32 %v633, %v774
      %776 = vmatmul.bf16.gmra.mxu0 %v686
      %v777 = vpop.f32.mrf.mxu0
      %v778 = vadd.f32 %v636, %v777
      %v779 = vpop.f32.mrf.mxu0
      %v780 = vadd.f32 %v638, %v779
      %781 = vmatmul.bf16.gmra.mxu0 %v688
      %v782 = vpop.f32.mrf.mxu0
      %v783 = vadd.f32 %v641, %v782
      %v784 = vpop.f32.mrf.mxu0
      %v785 = vadd.f32 %v643, %v784
      %786 = vmatmul.bf16.gmra.mxu0 %v690
      %v787 = vpop.f32.mrf.mxu0
      %v788 = vadd.f32 %v646, %v787
      %v789 = vpop.f32.mrf.mxu0
      %v790 = vadd.f32 %v648, %v789
      %791 = vmatmul.bf16.gmra.mxu0 %v693
      %v792 = vpop.f32.mrf.mxu0
      %v793 = vadd.f32 %v651, %v792
      %v794 = vpop.f32.mrf.mxu0
      %v795 = vadd.f32 %v653, %v794
      %796 = vdwg.mxu0
      %v797 = vld [vmem:[%s206] sm:$0xe]
      %s798 = scalar_lea.vmem %s210, 4
      %v799 = vld [vmem:[%s798] sm:$0x3]
      %v801 = vunpack.c.l.b16 %v797
      %v802 = vpack.c.b16 %v300, %v801
      %vm803 = vcmask 1046528
      %v804 = vrot.slane %v802, 1
      %v805 = vrot.slane %v336, 1
      %v806 = vsel %vm803, %v804, %v805
      %v807 = vrot.slane %v337, 1
      %v808 = vsel %vm803, %v805, %v807
      %v809 = vrot.slane %v338, 1
      %v810 = vsel %vm803, %v807, %v809
      %v811 = vrot.slane %v339, 1
      %v812 = vsel %vm803, %v809, %v811
      %v813 = vrot.slane %v340, 1
      %v814 = vsel %vm803, %v811, %v813
      %v815 = vrot.slane %v341, 1
      %v816 = vsel %vm803, %v813, %v815
      %v817 = vrot.slane %v342, 1
      %v818 = vsel %vm803, %v815, %v817
      %v819 = vrot.slane %v343, 1
      %v820 = vsel %vm803, %v817, %v819
      %v821 = vrot.slane %v344, 1
      %v822 = vsel %vm803, %v819, %v821
      %v823 = vrot.slane %v345, 1
      %v824 = vsel %vm803, %v821, %v823
      %v825 = vrot.slane %v346, 1
      %v826 = vsel %vm803, %v823, %v825
      %v827 = vrot.slane %v347, 1
      %v828 = vsel %vm803, %v825, %v827
      %v829 = vrot.slane %v348, 1
      %v830 = vsel %vm803, %v827, %v829
      %v831 = vrot.slane %v349, 1
      %v832 = vsel %vm803, %v829, %v831
      %v833 = vrot.slane %v350, 1
      %v834 = vsel %vm803, %v831, %v833
      %v835 = vrot.slane %v351, 1
      %v836 = vsel %vm803, %v833, %v835
      %v837 = vrot.slane %v352, 1
      %v838 = vsel %vm803, %v835, %v837
      %v840 = vsel %vm497, %v806, 0
      %v843 = vsel %vm497, %v808, 0
      %v846 = vsel %vm497, %v810, 0
      %v849 = vsel %vm497, %v812, 0
      %v852 = vsel %vm497, %v814, 0
      %v855 = vsel %vm497, %v816, 0
      %v858 = vsel %vm497, %v818, 0
      %v861 = vsel %vm497, %v820, 0
      %v864 = vsel %vm497, %v822, 0
      %v867 = vsel %vm497, %v824, 0
      %v870 = vsel %vm497, %v826, 0
      %v873 = vsel %vm497, %v828, 0
      %v876 = vsel %vm497, %v830, 0
      %v879 = vsel %vm497, %v832, 0
      %v882 = vsel %vm497, %v834, 0
      %v885 = vsel %vm497, %v836, 0
      %v888 = vsel %vm497, %v838, 0
      %v891 = vsel %vm497, %v837, 0
      %v894 = vsel %vm552, %v799, 0
      %896 = vmatpush.bf16.msra.mxu0 0
      %897 = vmatpush.bf16.msra.mxu0 0
      %898 = vmatpush.bf16.msra.mxu0 0
      %899 = vmatpush.bf16.msra.mxu0 0
      %900 = vmatpush.bf16.msra.mxu0 0
      %901 = vmatpush.bf16.msra.mxu0 0
      %902 = vmatpush.bf16.msra.mxu0 0
      %903 = vmatpush.bf16.msra.mxu0 %v894
      %904 = vmatmul.bf16.gmra.mxu0 %v840
      %v905 = vpop.f32.mrf.mxu0
      %v906 = vadd.f32 0.0, %v905
      %v907 = vpop.f32.mrf.mxu0
      %v908 = vadd.f32 0.0, %v907
      %909 = vmatmul.bf16.gmra.mxu0 %v843
      %v910 = vpop.f32.mrf.mxu0
      %v911 = vadd.f32 0.0, %v910
      %v912 = vpop.f32.mrf.mxu0
      %v913 = vadd.f32 0.0, %v912
      %914 = vmatmul.bf16.gmra.mxu0 %v846
      %v915 = vpop.f32.mrf.mxu0
      %v916 = vadd.f32 0.0, %v915
      %v917 = vpop.f32.mrf.mxu0
      %v918 = vadd.f32 0.0, %v917
      %919 = vmatmul.bf16.gmra.mxu0 %v849
      %v920 = vpop.f32.mrf.mxu0
      %v921 = vadd.f32 0.0, %v920
      %v922 = vpop.f32.mrf.mxu0
      %v923 = vadd.f32 0.0, %v922
      %924 = vmatmul.bf16.gmra.mxu0 %v852
      %v925 = vpop.f32.mrf.mxu0
      %v926 = vadd.f32 0.0, %v925
      %v927 = vpop.f32.mrf.mxu0
      %v928 = vadd.f32 0.0, %v927
      %929 = vmatmul.bf16.gmra.mxu0 %v855
      %v930 = vpop.f32.mrf.mxu0
      %v931 = vadd.f32 0.0, %v930
      %v932 = vpop.f32.mrf.mxu0
      %v933 = vadd.f32 0.0, %v932
      %934 = vmatmul.bf16.gmra.mxu0 %v858
      %v935 = vpop.f32.mrf.mxu0
      %v936 = vadd.f32 0.0, %v935
      %v937 = vpop.f32.mrf.mxu0
      %v938 = vadd.f32 0.0, %v937
      %939 = vmatmul.bf16.gmra.mxu0 %v861
      %v940 = vpop.f32.mrf.mxu0
      %v941 = vadd.f32 0.0, %v940
      %v942 = vpop.f32.mrf.mxu0
      %v943 = vadd.f32 0.0, %v942
      %944 = vmatmul.bf16.gmra.mxu0 %v864
      %v945 = vpop.f32.mrf.mxu0
      %v946 = vadd.f32 0.0, %v945
      %v947 = vpop.f32.mrf.mxu0
      %v948 = vadd.f32 0.0, %v947
      %949 = vmatmul.bf16.gmra.mxu0 %v867
      %v950 = vpop.f32.mrf.mxu0
      %v951 = vadd.f32 0.0, %v950
      %v952 = vpop.f32.mrf.mxu0
      %v953 = vadd.f32 0.0, %v952
      %954 = vmatmul.bf16.gmra.mxu0 %v870
      %v955 = vpop.f32.mrf.mxu0
      %v956 = vadd.f32 0.0, %v955
      %v957 = vpop.f32.mrf.mxu0
      %v958 = vadd.f32 0.0, %v957
      %959 = vmatmul.bf16.gmra.mxu0 %v873
      %v960 = vpop.f32.mrf.mxu0
      %v961 = vadd.f32 0.0, %v960
      %v962 = vpop.f32.mrf.mxu0
      %v963 = vadd.f32 0.0, %v962
      %964 = vmatmul.bf16.gmra.mxu0 %v876
      %v965 = vpop.f32.mrf.mxu0
      %v966 = vadd.f32 0.0, %v965
      %v967 = vpop.f32.mrf.mxu0
      %v968 = vadd.f32 0.0, %v967
      %969 = vmatmul.bf16.gmra.mxu0 %v879
      %v970 = vpop.f32.mrf.mxu0
      %v971 = vadd.f32 0.0, %v970
      %v972 = vpop.f32.mrf.mxu0
      %v973 = vadd.f32 0.0, %v972
      %974 = vmatmul.bf16.gmra.mxu0 %v882
      %v975 = vpop.f32.mrf.mxu0
      %v976 = vadd.f32 0.0, %v975
      %v977 = vpop.f32.mrf.mxu0
      %v978 = vadd.f32 0.0, %v977
      %979 = vmatmul.bf16.gmra.mxu0 %v885
      %v980 = vpop.f32.mrf.mxu0
      %v981 = vadd.f32 0.0, %v980
      %v982 = vpop.f32.mrf.mxu0
      %v983 = vadd.f32 0.0, %v982
      %984 = vmatmul.bf16.gmra.mxu0 %v888
      %v985 = vpop.f32.mrf.mxu0
      %v986 = vadd.f32 0.0, %v985
      %v987 = vpop.f32.mrf.mxu0
      %v988 = vadd.f32 0.0, %v987
      %989 = vmatmul.bf16.gmra.mxu0 %v891
      %v990 = vpop.f32.mrf.mxu0
      %v991 = vadd.f32 0.0, %v990
      %v992 = vpop.f32.mrf.mxu0
      %v993 = vadd.f32 0.0, %v992
      %994 = vdwg.mxu0
      %v995 = vadd.f32 %v708, %v906
      %v996 = vadd.f32 %v710, %v908
      %v997 = vadd.f32 %v713, %v911
      %v998 = vadd.f32 %v715, %v913
      %v999 = vadd.f32 %v718, %v916
      %v1000 = vadd.f32 %v720, %v918
      %v1001 = vadd.f32 %v723, %v921
      %v1002 = vadd.f32 %v725, %v923
      %v1003 = vadd.f32 %v728, %v926
      %v1004 = vadd.f32 %v730, %v928
      %v1005 = vadd.f32 %v733, %v931
      %v1006 = vadd.f32 %v735, %v933
      %v1007 = vadd.f32 %v738, %v936
      %v1008 = vadd.f32 %v740, %v938
      %v1009 = vadd.f32 %v743, %v941
      %v1010 = vadd.f32 %v745, %v943
      %v1011 = vadd.f32 %v748, %v946
      %v1012 = vadd.f32 %v750, %v948
      %v1013 = vadd.f32 %v753, %v951
      %v1014 = vadd.f32 %v755, %v953
      %v1015 = vadd.f32 %v758, %v956
      %v1016 = vadd.f32 %v760, %v958
      %v1017 = vadd.f32 %v763, %v961
      %v1018 = vadd.f32 %v765, %v963
      %v1019 = vadd.f32 %v768, %v966
      %v1020 = vadd.f32 %v770, %v968
      %v1021 = vadd.f32 %v773, %v971
      %v1022 = vadd.f32 %v775, %v973
      %v1023 = vadd.f32 %v778, %v976
      %v1024 = vadd.f32 %v780, %v978
      %v1025 = vadd.f32 %v783, %v981
      %v1026 = vadd.f32 %v785, %v983
      %v1027 = vadd.f32 %v788, %v986
      %v1028 = vadd.f32 %v790, %v988
      %v1029 = vadd.f32 %v793, %v991
      %v1030 = vadd.f32 %v795, %v993
      %v1031 = vld [vmem:[%s206 + $0x8] sm:$0xe]
      %v1032 = vld [vmem:[%s206 + $0xc] sm:$0xf]
      %v1033 = vld [vmem:[%s206 + $0x10] sm:$0xf]
      %v1034 = vld [vmem:[%s206 + $0x14] sm:$0xf]
      %v1035 = vld [vmem:[%s206 + $0x18] sm:$0xf]
      %v1036 = vld [vmem:[%s206 + $0x1c] sm:$0xf]
      %v1037 = vld [vmem:[%s206 + $0x20] sm:$0xf]
      %v1038 = vld [vmem:[%s206 + $0x24] sm:$0xf]
      %v1039 = vld [vmem:[%s206 + $0x28] sm:$0xf]
      %v1040 = vld [vmem:[%s206 + $0x2c] sm:$0xf]
      %v1041 = vld [vmem:[%s206 + $0x30] sm:$0xf]
      %v1042 = vld [vmem:[%s206 + $0x34] sm:$0xf]
      %v1043 = vld [vmem:[%s206 + $0x38] sm:$0xf]
      %v1044 = vld [vmem:[%s206 + $0x3c] sm:$0xf]
      %v1045 = vld [vmem:[%s206 + $0x40] sm:$0xf]
      %v1046 = vld [vmem:[%s206 + $0x44] sm:$0xf]
      %v1047 = vld [vmem:[%s206 + $0x48] sm:$0xf]
      %v1048 = vld [vmem:[%s206 + $0x4c] sm:$0xf]
      %v1049 = vld [vmem:[%s206 + $0x50] sm:$0xf]
      %v1050 = vld [vmem:[%s206 + $0x54] sm:$0xf]
      %v1051 = vld [vmem:[%s206 + $0x58] sm:$0xf]
      %v1052 = vld [vmem:[%s206 + $0x5c] sm:$0xf]
      %v1053 = vld [vmem:[%s206 + $0x60] sm:$0xf]
      %v1054 = vld [vmem:[%s206 + $0x64] sm:$0xf]
      %v1055 = vld [vmem:[%s206 + $0x68] sm:$0xf]
      %v1056 = vld [vmem:[%s206 + $0x6c] sm:$0xf]
      %v1057 = vld [vmem:[%s206 + $0x70] sm:$0xf]
      %v1058 = vld [vmem:[%s206 + $0x74] sm:$0xf]
      %v1059 = vld [vmem:[%s206 + $0x78] sm:$0xf]
      %v1060 = vld [vmem:[%s206 + $0x7c] sm:$0xf]
      %v1061 = vld [vmem:[%s206 + $0x80] sm:$0xf]
      %v1062 = vld [vmem:[%s206 + $0x84] sm:$0xf]
      %v1063 = vld [vmem:[%s206 + $0x88] sm:$0xf]
      %v1064 = vld [vmem:[%s206 + $0x8c] sm:$0xf]
      %v1065 = vld [vmem:[%s206 + $0x90] sm:$0xf]
      %v1066 = vld [vmem:[%s206 + $0x94] sm:$0xf]
      %s1067 = scalar_lea.vmem %s210, 6
      %v1068 = vld [vmem:[%s1067] sm:$0x3]
      %v1105 = vunpack.c.l.b16 %v1031
      %v1106 = vunpack.c.l.b16 %v1032
      %v1107 = vunpack.c.l.b16 %v1033
      %v1108 = vunpack.c.l.b16 %v1034
      %v1109 = vunpack.c.l.b16 %v1035
      %v1110 = vunpack.c.l.b16 %v1036
      %v1111 = vunpack.c.l.b16 %v1037
      %v1112 = vunpack.c.l.b16 %v1038
      %v1113 = vunpack.c.l.b16 %v1039
      %v1114 = vunpack.c.l.b16 %v1040
      %v1115 = vunpack.c.l.b16 %v1041
      %v1116 = vunpack.c.l.b16 %v1042
      %v1117 = vunpack.c.l.b16 %v1043
      %v1118 = vunpack.c.l.b16 %v1044
      %v1119 = vunpack.c.l.b16 %v1045
      %v1120 = vunpack.c.l.b16 %v1046
      %v1121 = vunpack.c.l.b16 %v1047
      %v1122 = vunpack.c.l.b16 %v1048
      %v1123 = vunpack.c.l.b16 %v1049
      %v1124 = vunpack.c.l.b16 %v1050
      %v1125 = vunpack.c.l.b16 %v1051
      %v1126 = vunpack.c.l.b16 %v1052
      %v1127 = vunpack.c.l.b16 %v1053
      %v1128 = vunpack.c.l.b16 %v1054
      %v1129 = vunpack.c.l.b16 %v1055
      %v1130 = vunpack.c.l.b16 %v1056
      %v1131 = vunpack.c.l.b16 %v1057
      %v1132 = vunpack.c.l.b16 %v1058
      %v1133 = vunpack.c.l.b16 %v1059
      %v1134 = vunpack.c.l.b16 %v1060
      %v1135 = vunpack.c.l.b16 %v1061
      %v1136 = vunpack.c.l.b16 %v1062
      %v1137 = vunpack.c.l.b16 %v1063
      %v1138 = vunpack.c.l.b16 %v1064
      %v1139 = vunpack.c.l.b16 %v1065
      %v1140 = vunpack.c.l.b16 %v1066
      %v1141 = vpack.c.b16 %v1106, %v1105
      %v1142 = vpack.c.b16 %v1108, %v1107
      %v1143 = vpack.c.b16 %v1110, %v1109
      %v1144 = vpack.c.b16 %v1112, %v1111
      %v1145 = vpack.c.b16 %v1114, %v1113
      %v1146 = vpack.c.b16 %v1116, %v1115
      %v1147 = vpack.c.b16 %v1118, %v1117
      %v1148 = vpack.c.b16 %v1120, %v1119
      %v1149 = vpack.c.b16 %v1122, %v1121
      %v1150 = vpack.c.b16 %v1124, %v1123
      %v1151 = vpack.c.b16 %v1126, %v1125
      %v1152 = vpack.c.b16 %v1128, %v1127
      %v1153 = vpack.c.b16 %v1130, %v1129
      %v1154 = vpack.c.b16 %v1132, %v1131
      %v1155 = vpack.c.b16 %v1134, %v1133
      %v1156 = vpack.c.b16 %v1136, %v1135
      %v1157 = vpack.c.b16 %v1138, %v1137
      %v1158 = vpack.c.b16 %v1140, %v1139
      %v1159 = vrot.slane %v1141, 1
      %v1160 = vrot.slane %v1142, 1
      %v1161 = vsel %vm803, %v1159, %v1160
      %v1162 = vrot.slane %v1143, 1
      %v1163 = vsel %vm803, %v1160, %v1162
      %v1164 = vrot.slane %v1144, 1
      %v1165 = vsel %vm803, %v1162, %v1164
      %v1166 = vrot.slane %v1145, 1
      %v1167 = vsel %vm803, %v1164, %v1166
      %v1168 = vrot.slane %v1146, 1
      %v1169 = vsel %vm803, %v1166, %v1168
      %v1170 = vrot.slane %v1147, 1
      %v1171 = vsel %vm803, %v1168, %v1170
      %v1172 = vrot.slane %v1148, 1
      %v1173 = vsel %vm803, %v1170, %v1172
      %v1174 = vrot.slane %v1149, 1
      %v1175 = vsel %vm803, %v1172, %v1174
      %v1176 = vrot.slane %v1150, 1
      %v1177 = vsel %vm803, %v1174, %v1176
      %v1178 = vrot.slane %v1151, 1
      %v1179 = vsel %vm803, %v1176, %v1178
      %v1180 = vrot.slane %v1152, 1
      %v1181 = vsel %vm803, %v1178, %v1180
      %v1182 = vrot.slane %v1153, 1
      %v1183 = vsel %vm803, %v1180, %v1182
      %v1184 = vrot.slane %v1154, 1
      %v1185 = vsel %vm803, %v1182, %v1184
      %v1186 = vrot.slane %v1155, 1
      %v1187 = vsel %vm803, %v1184, %v1186
      %v1188 = vrot.slane %v1156, 1
      %v1189 = vsel %vm803, %v1186, %v1188
      %v1190 = vrot.slane %v1157, 1
      %v1191 = vsel %vm803, %v1188, %v1190
      %v1192 = vrot.slane %v1158, 1
      %v1193 = vsel %vm803, %v1190, %v1192
      %v1195 = vsel %vm497, %v1161, 0
      %v1198 = vsel %vm497, %v1163, 0
      %v1201 = vsel %vm497, %v1165, 0
      %v1204 = vsel %vm497, %v1167, 0
      %v1207 = vsel %vm497, %v1169, 0
      %v1210 = vsel %vm497, %v1171, 0
      %v1213 = vsel %vm497, %v1173, 0
      %v1216 = vsel %vm497, %v1175, 0
      %v1219 = vsel %vm497, %v1177, 0
      %v1222 = vsel %vm497, %v1179, 0
      %v1225 = vsel %vm497, %v1181, 0
      %v1228 = vsel %vm497, %v1183, 0
      %v1231 = vsel %vm497, %v1185, 0
      %v1234 = vsel %vm497, %v1187, 0
      %v1237 = vsel %vm497, %v1189, 0
      %v1240 = vsel %vm497, %v1191, 0
      %v1243 = vsel %vm497, %v1193, 0
      %v1246 = vsel %vm497, %v1192, 0
      %v1249 = vsel %vm552, %v1068, 0
      %1251 = vmatpush.bf16.msra.mxu0 0
      %1252 = vmatpush.bf16.msra.mxu0 0
      %1253 = vmatpush.bf16.msra.mxu0 0
      %1254 = vmatpush.bf16.msra.mxu0 0
      %1255 = vmatpush.bf16.msra.mxu0 0
      %1256 = vmatpush.bf16.msra.mxu0 0
      %1257 = vmatpush.bf16.msra.mxu0 0
      %1258 = vmatpush.bf16.msra.mxu0 %v1249
      %1259 = vmatmul.bf16.gmra.mxu0 %v1195
      %v1260 = vpop.f32.mrf.mxu0
      %v1261 = vadd.f32 0.0, %v1260
      %v1262 = vpop.f32.mrf.mxu0
      %v1263 = vadd.f32 0.0, %v1262
      %1264 = vmatmul.bf16.gmra.mxu0 %v1198
      %v1265 = vpop.f32.mrf.mxu0
      %v1266 = vadd.f32 0.0, %v1265
      %v1267 = vpop.f32.mrf.mxu0
      %v1268 = vadd.f32 0.0, %v1267
      %1269 = vmatmul.bf16.gmra.mxu0 %v1201
      %v1270 = vpop.f32.mrf.mxu0
      %v1271 = vadd.f32 0.0, %v1270
      %v1272 = vpop.f32.mrf.mxu0
      %v1273 = vadd.f32 0.0, %v1272
      %1274 = vmatmul.bf16.gmra.mxu0 %v1204
      %v1275 = vpop.f32.mrf.mxu0
      %v1276 = vadd.f32 0.0, %v1275
      %v1277 = vpop.f32.mrf.mxu0
      %v1278 = vadd.f32 0.0, %v1277
      %1279 = vmatmul.bf16.gmra.mxu0 %v1207
      %v1280 = vpop.f32.mrf.mxu0
      %v1281 = vadd.f32 0.0, %v1280
      %v1282 = vpop.f32.mrf.mxu0
      %v1283 = vadd.f32 0.0, %v1282
      %1284 = vmatmul.bf16.gmra.mxu0 %v1210
      %v1285 = vpop.f32.mrf.mxu0
      %v1286 = vadd.f32 0.0, %v1285
      %v1287 = vpop.f32.mrf.mxu0
      %v1288 = vadd.f32 0.0, %v1287
      %1289 = vmatmul.bf16.gmra.mxu0 %v1213
      %v1290 = vpop.f32.mrf.mxu0
      %v1291 = vadd.f32 0.0, %v1290
      %v1292 = vpop.f32.mrf.mxu0
      %v1293 = vadd.f32 0.0, %v1292
      %1294 = vmatmul.bf16.gmra.mxu0 %v1216
      %v1295 = vpop.f32.mrf.mxu0
      %v1296 = vadd.f32 0.0, %v1295
      %v1297 = vpop.f32.mrf.mxu0
      %v1298 = vadd.f32 0.0, %v1297
      %1299 = vmatmul.bf16.gmra.mxu0 %v1219
      %v1300 = vpop.f32.mrf.mxu0
      %v1301 = vadd.f32 0.0, %v1300
      %v1302 = vpop.f32.mrf.mxu0
      %v1303 = vadd.f32 0.0, %v1302
      %1304 = vmatmul.bf16.gmra.mxu0 %v1222
      %v1305 = vpop.f32.mrf.mxu0
      %v1306 = vadd.f32 0.0, %v1305
      %v1307 = vpop.f32.mrf.mxu0
      %v1308 = vadd.f32 0.0, %v1307
      %1309 = vmatmul.bf16.gmra.mxu0 %v1225
      %v1310 = vpop.f32.mrf.mxu0
      %v1311 = vadd.f32 0.0, %v1310
      %v1312 = vpop.f32.mrf.mxu0
      %v1313 = vadd.f32 0.0, %v1312
      %1314 = vmatmul.bf16.gmra.mxu0 %v1228
      %v1315 = vpop.f32.mrf.mxu0
      %v1316 = vadd.f32 0.0, %v1315
      %v1317 = vpop.f32.mrf.mxu0
      %v1318 = vadd.f32 0.0, %v1317
      %1319 = vmatmul.bf16.gmra.mxu0 %v1231
      %v1320 = vpop.f32.mrf.mxu0
      %v1321 = vadd.f32 0.0, %v1320
      %v1322 = vpop.f32.mrf.mxu0
      %v1323 = vadd.f32 0.0, %v1322
      %1324 = vmatmul.bf16.gmra.mxu0 %v1234
      %v1325 = vpop.f32.mrf.mxu0
      %v1326 = vadd.f32 0.0, %v1325
      %v1327 = vpop.f32.mrf.mxu0
      %v1328 = vadd.f32 0.0, %v1327
      %1329 = vmatmul.bf16.gmra.mxu0 %v1237
      %v1330 = vpop.f32.mrf.mxu0
      %v1331 = vadd.f32 0.0, %v1330
      %v1332 = vpop.f32.mrf.mxu0
      %v1333 = vadd.f32 0.0, %v1332
      %1334 = vmatmul.bf16.gmra.mxu0 %v1240
      %v1335 = vpop.f32.mrf.mxu0
      %v1336 = vadd.f32 0.0, %v1335
      %v1337 = vpop.f32.mrf.mxu0
      %v1338 = vadd.f32 0.0, %v1337
      %1339 = vmatmul.bf16.gmra.mxu0 %v1243
      %v1340 = vpop.f32.mrf.mxu0
      %v1341 = vadd.f32 0.0, %v1340
      %v1342 = vpop.f32.mrf.mxu0
      %v1343 = vadd.f32 0.0, %v1342
      %1344 = vmatmul.bf16.gmra.mxu0 %v1246
      %v1345 = vpop.f32.mrf.mxu0
      %v1346 = vadd.f32 0.0, %v1345
      %v1347 = vpop.f32.mrf.mxu0
      %v1348 = vadd.f32 0.0, %v1347
      %1349 = vdwg.mxu0
      %v1350 = vadd.f32 %v995, %v1261
      %v1351 = vadd.f32 %v996, %v1263
      %v1352 = vadd.f32 %v997, %v1266
      %v1353 = vadd.f32 %v998, %v1268
      %v1354 = vadd.f32 %v999, %v1271
      %v1355 = vadd.f32 %v1000, %v1273
      %v1356 = vadd.f32 %v1001, %v1276
      %v1357 = vadd.f32 %v1002, %v1278
      %v1358 = vadd.f32 %v1003, %v1281
      %v1359 = vadd.f32 %v1004, %v1283
      %v1360 = vadd.f32 %v1005, %v1286
      %v1361 = vadd.f32 %v1006, %v1288
      %v1362 = vadd.f32 %v1007, %v1291
      %v1363 = vadd.f32 %v1008, %v1293
      %v1364 = vadd.f32 %v1009, %v1296
      %v1365 = vadd.f32 %v1010, %v1298
      %v1366 = vadd.f32 %v1011, %v1301
      %v1367 = vadd.f32 %v1012, %v1303
      %v1368 = vadd.f32 %v1013, %v1306
      %v1369 = vadd.f32 %v1014, %v1308
      %v1370 = vadd.f32 %v1015, %v1311
      %v1371 = vadd.f32 %v1016, %v1313
      %v1372 = vadd.f32 %v1017, %v1316
      %v1373 = vadd.f32 %v1018, %v1318
      %v1374 = vadd.f32 %v1019, %v1321
      %v1375 = vadd.f32 %v1020, %v1323
      %v1376 = vadd.f32 %v1021, %v1326
      %v1377 = vadd.f32 %v1022, %v1328
      %v1378 = vadd.f32 %v1023, %v1331
      %v1379 = vadd.f32 %v1024, %v1333
      %v1380 = vadd.f32 %v1025, %v1336
      %v1381 = vadd.f32 %v1026, %v1338
      %v1382 = vadd.f32 %v1027, %v1341
      %v1383 = vadd.f32 %v1028, %v1343
      %v1384 = vadd.f32 %v1029, %v1346
      %v1385 = vadd.f32 %v1030, %v1348
      %v1386 = vld [vmem:[%s206 + $0x8] sm:$0xe]
      %v1387 = vld [vmem:[%s206 + $0xc] sm:$0xf]
      %v1388 = vld [vmem:[%s206 + $0x10] sm:$0xf]
      %v1389 = vld [vmem:[%s206 + $0x14] sm:$0xf]
      %v1390 = vld [vmem:[%s206 + $0x18] sm:$0xf]
      %v1391 = vld [vmem:[%s206 + $0x1c] sm:$0xf]
      %v1392 = vld [vmem:[%s206 + $0x20] sm:$0xf]
      %v1393 = vld [vmem:[%s206 + $0x24] sm:$0xf]
      %v1394 = vld [vmem:[%s206 + $0x28] sm:$0xf]
      %v1395 = vld [vmem:[%s206 + $0x2c] sm:$0xf]
      %v1396 = vld [vmem:[%s206 + $0x30] sm:$0xf]
      %v1397 = vld [vmem:[%s206 + $0x34] sm:$0xf]
      %v1398 = vld [vmem:[%s206 + $0x38] sm:$0xf]
      %v1399 = vld [vmem:[%s206 + $0x3c] sm:$0xf]
      %v1400 = vld [vmem:[%s206 + $0x40] sm:$0xf]
      %v1401 = vld [vmem:[%s206 + $0x44] sm:$0xf]
      %v1402 = vld [vmem:[%s206 + $0x48] sm:$0xf]
      %v1403 = vld [vmem:[%s206 + $0x4c] sm:$0xf]
      %v1404 = vld [vmem:[%s206 + $0x50] sm:$0xf]
      %v1405 = vld [vmem:[%s206 + $0x54] sm:$0xf]
      %v1406 = vld [vmem:[%s206 + $0x58] sm:$0xf]
      %v1407 = vld [vmem:[%s206 + $0x5c] sm:$0xf]
      %v1408 = vld [vmem:[%s206 + $0x60] sm:$0xf]
      %v1409 = vld [vmem:[%s206 + $0x64] sm:$0xf]
      %v1410 = vld [vmem:[%s206 + $0x68] sm:$0xf]
      %v1411 = vld [vmem:[%s206 + $0x6c] sm:$0xf]
      %v1412 = vld [vmem:[%s206 + $0x70] sm:$0xf]
      %v1413 = vld [vmem:[%s206 + $0x74] sm:$0xf]
      %v1414 = vld [vmem:[%s206 + $0x78] sm:$0xf]
      %v1415 = vld [vmem:[%s206 + $0x7c] sm:$0xf]
      %v1416 = vld [vmem:[%s206 + $0x80] sm:$0xf]
      %v1417 = vld [vmem:[%s206 + $0x84] sm:$0xf]
      %v1418 = vld [vmem:[%s206 + $0x88] sm:$0xf]
      %v1419 = vld [vmem:[%s206 + $0x8c] sm:$0xf]
      %v1420 = vld [vmem:[%s206 + $0x90] sm:$0xf]
      %v1421 = vld [vmem:[%s206 + $0x94] sm:$0xf]
      %v1422 = vld [vmem:[%s206 + $0x98] sm:$0x1]
      %s1423 = scalar_lea.vmem %s210, 8
      %v1424 = vld [vmem:[%s1423] sm:$0x3]
      %v1462 = vunpack.c.l.b16 %v1386
      %v1463 = vunpack.c.l.b16 %v1387
      %v1464 = vunpack.c.l.b16 %v1388
      %v1465 = vunpack.c.l.b16 %v1389
      %v1466 = vunpack.c.l.b16 %v1390
      %v1467 = vunpack.c.l.b16 %v1391
      %v1468 = vunpack.c.l.b16 %v1392
      %v1469 = vunpack.c.l.b16 %v1393
      %v1470 = vunpack.c.l.b16 %v1394
      %v1471 = vunpack.c.l.b16 %v1395
      %v1472 = vunpack.c.l.b16 %v1396
      %v1473 = vunpack.c.l.b16 %v1397
      %v1474 = vunpack.c.l.b16 %v1398
      %v1475 = vunpack.c.l.b16 %v1399
      %v1476 = vunpack.c.l.b16 %v1400
      %v1477 = vunpack.c.l.b16 %v1401
      %v1478 = vunpack.c.l.b16 %v1402
      %v1479 = vunpack.c.l.b16 %v1403
      %v1480 = vunpack.c.l.b16 %v1404
      %v1481 = vunpack.c.l.b16 %v1405
      %v1482 = vunpack.c.l.b16 %v1406
      %v1483 = vunpack.c.l.b16 %v1407
      %v1484 = vunpack.c.l.b16 %v1408
      %v1485 = vunpack.c.l.b16 %v1409
      %v1486 = vunpack.c.l.b16 %v1410
      %v1487 = vunpack.c.l.b16 %v1411
      %v1488 = vunpack.c.l.b16 %v1412
      %v1489 = vunpack.c.l.b16 %v1413
      %v1490 = vunpack.c.l.b16 %v1414
      %v1491 = vunpack.c.l.b16 %v1415
      %v1492 = vunpack.c.l.b16 %v1416
      %v1493 = vunpack.c.l.b16 %v1417
      %v1494 = vunpack.c.l.b16 %v1418
      %v1495 = vunpack.c.l.b16 %v1419
      %v1496 = vunpack.c.l.b16 %v1420
      %v1497 = vunpack.c.l.b16 %v1421
      %v1498 = vunpack.c.l.b16 %v1422
      %v1499 = vpack.c.b16 %v1463, %v1462
      %v1500 = vpack.c.b16 %v1465, %v1464
      %v1501 = vpack.c.b16 %v1467, %v1466
      %v1502 = vpack.c.b16 %v1469, %v1468
      %v1503 = vpack.c.b16 %v1471, %v1470
      %v1504 = vpack.c.b16 %v1473, %v1472
      %v1505 = vpack.c.b16 %v1475, %v1474
      %v1506 = vpack.c.b16 %v1477, %v1476
      %v1507 = vpack.c.b16 %v1479, %v1478
      %v1508 = vpack.c.b16 %v1481, %v1480
      %v1509 = vpack.c.b16 %v1483, %v1482
      %v1510 = vpack.c.b16 %v1485, %v1484
      %v1511 = vpack.c.b16 %v1487, %v1486
      %v1512 = vpack.c.b16 %v1489, %v1488
      %v1513 = vpack.c.b16 %v1491, %v1490
      %v1514 = vpack.c.b16 %v1493, %v1492
      %v1515 = vpack.c.b16 %v1495, %v1494
      %v1516 = vpack.c.b16 %v1497, %v1496
      %v1517 = vpack.c.b16 %v1498, %v1498
      %vm1518 = vsmask.f32 6400
      %v1520 = vshrl.u32 %v1499, 16
      %v1522 = vrot.slane %v1520, 1
      %v1523 = vshll.u32 %v1499, 16
      %v1525 = vrot.slane %v1523, 2
      %v1526 = vor.u32 %v1522, %v1525
      %v1528 = vshrl.u32 %v1500, 16
      %v1530 = vrot.slane %v1528, 1
      %v1531 = vshll.u32 %v1500, 16
      %v1533 = vrot.slane %v1531, 2
      %v1534 = vor.u32 %v1530, %v1533
      %v1535 = vsel %vm1518, %v1526, %v1534
      %v1537 = vshrl.u32 %v1501, 16
      %v1539 = vrot.slane %v1537, 1
      %v1540 = vshll.u32 %v1501, 16
      %v1542 = vrot.slane %v1540, 2
      %v1543 = vor.u32 %v1539, %v1542
      %v1544 = vsel %vm1518, %v1534, %v1543
      %v1546 = vshrl.u32 %v1502, 16
      %v1548 = vrot.slane %v1546, 1
      %v1549 = vshll.u32 %v1502, 16
      %v1551 = vrot.slane %v1549, 2
      %v1552 = vor.u32 %v1548, %v1551
      %v1553 = vsel %vm1518, %v1543, %v1552
      %v1555 = vshrl.u32 %v1503, 16
      %v1557 = vrot.slane %v1555, 1
      %v1558 = vshll.u32 %v1503, 16
      %v1560 = vrot.slane %v1558, 2
      %v1561 = vor.u32 %v1557, %v1560
      %v1562 = vsel %vm1518, %v1552, %v1561
      %v1564 = vshrl.u32 %v1504, 16
      %v1566 = vrot.slane %v1564, 1
      %v1567 = vshll.u32 %v1504, 16
      %v1569 = vrot.slane %v1567, 2
      %v1570 = vor.u32 %v1566, %v1569
      %v1571 = vsel %vm1518, %v1561, %v1570
      %v1573 = vshrl.u32 %v1505, 16
      %v1575 = vrot.slane %v1573, 1
      %v1576 = vshll.u32 %v1505, 16
      %v1578 = vrot.slane %v1576, 2
      %v1579 = vor.u32 %v1575, %v1578
      %v1580 = vsel %vm1518, %v1570, %v1579
      %v1582 = vshrl.u32 %v1506, 16
      %v1584 = vrot.slane %v1582, 1
      %v1585 = vshll.u32 %v1506, 16
      %v1587 = vrot.slane %v1585, 2
      %v1588 = vor.u32 %v1584, %v1587
      %v1589 = vsel %vm1518, %v1579, %v1588
      %v1591 = vshrl.u32 %v1507, 16
      %v1593 = vrot.slane %v1591, 1
      %v1594 = vshll.u32 %v1507, 16
      %v1596 = vrot.slane %v1594, 2
      %v1597 = vor.u32 %v1593, %v1596
      %v1598 = vsel %vm1518, %v1588, %v1597
      %v1600 = vshrl.u32 %v1508, 16
      %v1602 = vrot.slane %v1600, 1
      %v1603 = vshll.u32 %v1508, 16
      %v1605 = vrot.slane %v1603, 2
      %v1606 = vor.u32 %v1602, %v1605
      %v1607 = vsel %vm1518, %v1597, %v1606
      %v1609 = vshrl.u32 %v1509, 16
      %v1611 = vrot.slane %v1609, 1
      %v1612 = vshll.u32 %v1509, 16
      %v1614 = vrot.slane %v1612, 2
      %v1615 = vor.u32 %v1611, %v1614
      %v1616 = vsel %vm1518, %v1606, %v1615
      %v1618 = vshrl.u32 %v1510, 16
      %v1620 = vrot.slane %v1618, 1
      %v1621 = vshll.u32 %v1510, 16
      %v1623 = vrot.slane %v1621, 2
      %v1624 = vor.u32 %v1620, %v1623
      %v1625 = vsel %vm1518, %v1615, %v1624
      %v1627 = vshrl.u32 %v1511, 16
      %v1629 = vrot.slane %v1627, 1
      %v1630 = vshll.u32 %v1511, 16
      %v1632 = vrot.slane %v1630, 2
      %v1633 = vor.u32 %v1629, %v1632
      %v1634 = vsel %vm1518, %v1624, %v1633
      %v1636 = vshrl.u32 %v1512, 16
      %v1638 = vrot.slane %v1636, 1
      %v1639 = vshll.u32 %v1512, 16
      %v1641 = vrot.slane %v1639, 2
      %v1642 = vor.u32 %v1638, %v1641
      %v1643 = vsel %vm1518, %v1633, %v1642
      %v1645 = vshrl.u32 %v1513, 16
      %v1647 = vrot.slane %v1645, 1
      %v1648 = vshll.u32 %v1513, 16
      %v1650 = vrot.slane %v1648, 2
      %v1651 = vor.u32 %v1647, %v1650
      %v1652 = vsel %vm1518, %v1642, %v1651
      %v1654 = vshrl.u32 %v1514, 16
      %v1656 = vrot.slane %v1654, 1
      %v1657 = vshll.u32 %v1514, 16
      %v1659 = vrot.slane %v1657, 2
      %v1660 = vor.u32 %v1656, %v1659
      %v1661 = vsel %vm1518, %v1651, %v1660
      %v1663 = vshrl.u32 %v1515, 16
      %v1665 = vrot.slane %v1663, 1
      %v1666 = vshll.u32 %v1515, 16
      %v1668 = vrot.slane %v1666, 2
      %v1669 = vor.u32 %v1665, %v1668
      %v1670 = vsel %vm1518, %v1660, %v1669
      %v1672 = vshrl.u32 %v1516, 16
      %v1674 = vrot.slane %v1672, 1
      %v1675 = vshll.u32 %v1516, 16
      %v1677 = vrot.slane %v1675, 2
      %v1678 = vor.u32 %v1674, %v1677
      %v1679 = vsel %vm1518, %v1669, %v1678
      %v1681 = vshll.u32 %v1517, 16
      %v1683 = vrot.slane %v1681, 2
      %v1684 = vsel %vm1518, %v1678, %v1683
      %v1686 = vsel %vm497, %v1535, 0
      %v1689 = vsel %vm497, %v1544, 0
      %v1692 = vsel %vm497, %v1553, 0
      %v1695 = vsel %vm497, %v1562, 0
      %v1698 = vsel %vm497, %v1571, 0
      %v1701 = vsel %vm497, %v1580, 0
      %v1704 = vsel %vm497, %v1589, 0
      %v1707 = vsel %vm497, %v1598, 0
      %v1710 = vsel %vm497, %v1607, 0
      %v1713 = vsel %vm497, %v1616, 0
      %v1716 = vsel %vm497, %v1625, 0
      %v1719 = vsel %vm497, %v1634, 0
      %v1722 = vsel %vm497, %v1643, 0
      %v1725 = vsel %vm497, %v1652, 0
      %v1728 = vsel %vm497, %v1661, 0
      %v1731 = vsel %vm497, %v1670, 0
      %v1734 = vsel %vm497, %v1679, 0
      %v1737 = vsel %vm497, %v1684, 0
      %v1740 = vsel %vm552, %v1424, 0
      %1742 = vmatpush.bf16.msra.mxu0 0
      %1743 = vmatpush.bf16.msra.mxu0 0
      %1744 = vmatpush.bf16.msra.mxu0 0
      %1745 = vmatpush.bf16.msra.mxu0 0
      %1746 = vmatpush.bf16.msra.mxu0 0
      %1747 = vmatpush.bf16.msra.mxu0 0
      %1748 = vmatpush.bf16.msra.mxu0 0
      %1749 = vmatpush.bf16.msra.mxu0 %v1740
      %1750 = vmatmul.bf16.gmra.mxu0 %v1686
      %v1751 = vpop.f32.mrf.mxu0
      %v1752 = vadd.f32 0.0, %v1751
      %v1753 = vpop.f32.mrf.mxu0
      %v1754 = vadd.f32 0.0, %v1753
      %1755 = vmatmul.bf16.gmra.mxu0 %v1689
      %v1756 = vpop.f32.mrf.mxu0
      %v1757 = vadd.f32 0.0, %v1756
      %v1758 = vpop.f32.mrf.mxu0
      %v1759 = vadd.f32 0.0, %v1758
      %1760 = vmatmul.bf16.gmra.mxu0 %v1692
      %v1761 = vpop.f32.mrf.mxu0
      %v1762 = vadd.f32 0.0, %v1761
      %v1763 = vpop.f32.mrf.mxu0
      %v1764 = vadd.f32 0.0, %v1763
      %1765 = vmatmul.bf16.gmra.mxu0 %v1695
      %v1766 = vpop.f32.mrf.mxu0
      %v1767 = vadd.f32 0.0, %v1766
      %v1768 = vpop.f32.mrf.mxu0
      %v1769 = vadd.f32 0.0, %v1768
      %1770 = vmatmul.bf16.gmra.mxu0 %v1698
      %v1771 = vpop.f32.mrf.mxu0
      %v1772 = vadd.f32 0.0, %v1771
      %v1773 = vpop.f32.mrf.mxu0
      %v1774 = vadd.f32 0.0, %v1773
      %1775 = vmatmul.bf16.gmra.mxu0 %v1701
      %v1776 = vpop.f32.mrf.mxu0
      %v1777 = vadd.f32 0.0, %v1776
      %v1778 = vpop.f32.mrf.mxu0
      %v1779 = vadd.f32 0.0, %v1778
      %1780 = vmatmul.bf16.gmra.mxu0 %v1704
      %v1781 = vpop.f32.mrf.mxu0
      %v1782 = vadd.f32 0.0, %v1781
      %v1783 = vpop.f32.mrf.mxu0
      %v1784 = vadd.f32 0.0, %v1783
      %1785 = vmatmul.bf16.gmra.mxu0 %v1707
      %v1786 = vpop.f32.mrf.mxu0
      %v1787 = vadd.f32 0.0, %v1786
      %v1788 = vpop.f32.mrf.mxu0
      %v1789 = vadd.f32 0.0, %v1788
      %1790 = vmatmul.bf16.gmra.mxu0 %v1710
      %v1791 = vpop.f32.mrf.mxu0
      %v1792 = vadd.f32 0.0, %v1791
      %v1793 = vpop.f32.mrf.mxu0
      %v1794 = vadd.f32 0.0, %v1793
      %1795 = vmatmul.bf16.gmra.mxu0 %v1713
      %v1796 = vpop.f32.mrf.mxu0
      %v1797 = vadd.f32 0.0, %v1796
      %v1798 = vpop.f32.mrf.mxu0
      %v1799 = vadd.f32 0.0, %v1798
      %1800 = vmatmul.bf16.gmra.mxu0 %v1716
      %v1801 = vpop.f32.mrf.mxu0
      %v1802 = vadd.f32 0.0, %v1801
      %v1803 = vpop.f32.mrf.mxu0
      %v1804 = vadd.f32 0.0, %v1803
      %1805 = vmatmul.bf16.gmra.mxu0 %v1719
      %v1806 = vpop.f32.mrf.mxu0
      %v1807 = vadd.f32 0.0, %v1806
      %v1808 = vpop.f32.mrf.mxu0
      %v1809 = vadd.f32 0.0, %v1808
      %1810 = vmatmul.bf16.gmra.mxu0 %v1722
      %v1811 = vpop.f32.mrf.mxu0
      %v1812 = vadd.f32 0.0, %v1811
      %v1813 = vpop.f32.mrf.mxu0
      %v1814 = vadd.f32 0.0, %v1813
      %1815 = vmatmul.bf16.gmra.mxu0 %v1725
      %v1816 = vpop.f32.mrf.mxu0
      %v1817 = vadd.f32 0.0, %v1816
      %v1818 = vpop.f32.mrf.mxu0
      %v1819 = vadd.f32 0.0, %v1818
      %1820 = vmatmul.bf16.gmra.mxu0 %v1728
      %v1821 = vpop.f32.mrf.mxu0
      %v1822 = vadd.f32 0.0, %v1821
      %v1823 = vpop.f32.mrf.mxu0
      %v1824 = vadd.f32 0.0, %v1823
      %1825 = vmatmul.bf16.gmra.mxu0 %v1731
      %v1826 = vpop.f32.mrf.mxu0
      %v1827 = vadd.f32 0.0, %v1826
      %v1828 = vpop.f32.mrf.mxu0
      %v1829 = vadd.f32 0.0, %v1828
      %1830 = vmatmul.bf16.gmra.mxu0 %v1734
      %v1831 = vpop.f32.mrf.mxu0
      %v1832 = vadd.f32 0.0, %v1831
      %v1833 = vpop.f32.mrf.mxu0
      %v1834 = vadd.f32 0.0, %v1833
      %1835 = vmatmul.bf16.gmra.mxu0 %v1737
      %v1836 = vpop.f32.mrf.mxu0
      %v1837 = vadd.f32 0.0, %v1836
      %v1838 = vpop.f32.mrf.mxu0
      %v1839 = vadd.f32 0.0, %v1838
      %1840 = vdwg.mxu0
      %v1841 = vadd.f32 %v1350, %v1752
      %v1842 = vadd.f32 %v1351, %v1754
      %v1843 = vadd.f32 %v1352, %v1757
      %v1844 = vadd.f32 %v1353, %v1759
      %v1845 = vadd.f32 %v1354, %v1762
      %v1846 = vadd.f32 %v1355, %v1764
      %v1847 = vadd.f32 %v1356, %v1767
      %v1848 = vadd.f32 %v1357, %v1769
      %v1849 = vadd.f32 %v1358, %v1772
      %v1850 = vadd.f32 %v1359, %v1774
      %v1851 = vadd.f32 %v1360, %v1777
      %v1852 = vadd.f32 %v1361, %v1779
      %v1853 = vadd.f32 %v1362, %v1782
      %v1854 = vadd.f32 %v1363, %v1784
      %v1855 = vadd.f32 %v1364, %v1787
      %v1856 = vadd.f32 %v1365, %v1789
      %v1857 = vadd.f32 %v1366, %v1792
      %v1858 = vadd.f32 %v1367, %v1794
      %v1859 = vadd.f32 %v1368, %v1797
      %v1860 = vadd.f32 %v1369, %v1799
      %v1861 = vadd.f32 %v1370, %v1802
      %v1862 = vadd.f32 %v1371, %v1804
      %v1863 = vadd.f32 %v1372, %v1807
      %v1864 = vadd.f32 %v1373, %v1809
      %v1865 = vadd.f32 %v1374, %v1812
      %v1866 = vadd.f32 %v1375, %v1814
      %v1867 = vadd.f32 %v1376, %v1817
      %v1868 = vadd.f32 %v1377, %v1819
      %v1869 = vadd.f32 %v1378, %v1822
      %v1870 = vadd.f32 %v1379, %v1824
      %v1871 = vadd.f32 %v1380, %v1827
      %v1872 = vadd.f32 %v1381, %v1829
      %v1873 = vadd.f32 %v1382, %v1832
      %v1874 = vadd.f32 %v1383, %v1834
      %v1875 = vadd.f32 %v1384, %v1837
      %v1876 = vadd.f32 %v1385, %v1839
      %v1877 = vld [vmem:[%s206 + $0x8] sm:$0xc]
      %s1878 = scalar_lea.vmem %s210, 10
      %v1879 = vld [vmem:[%s1878] sm:$0x3]
      %v1881 = vunpack.c.l.b16 %v1877
      %v1882 = vpack.c.b16 %v1463, %v1881
      %vm1883 = vcmask 1045504
      %v1884 = vrot.slane %v1882, 2
      %v1885 = vrot.slane %v1500, 2
      %v1886 = vsel %vm1883, %v1884, %v1885
      %v1887 = vrot.slane %v1501, 2
      %v1888 = vsel %vm1883, %v1885, %v1887
      %v1889 = vrot.slane %v1502, 2
      %v1890 = vsel %vm1883, %v1887, %v1889
      %v1891 = vrot.slane %v1503, 2
      %v1892 = vsel %vm1883, %v1889, %v1891
      %v1893 = vrot.slane %v1504, 2
      %v1894 = vsel %vm1883, %v1891, %v1893
      %v1895 = vrot.slane %v1505, 2
      %v1896 = vsel %vm1883, %v1893, %v1895
      %v1897 = vrot.slane %v1506, 2
      %v1898 = vsel %vm1883, %v1895, %v1897
      %v1899 = vrot.slane %v1507, 2
      %v1900 = vsel %vm1883, %v1897, %v1899
      %v1901 = vrot.slane %v1508, 2
      %v1902 = vsel %vm1883, %v1899, %v1901
      %v1903 = vrot.slane %v1509, 2
      %v1904 = vsel %vm1883, %v1901, %v1903
      %v1905 = vrot.slane %v1510, 2
      %v1906 = vsel %vm1883, %v1903, %v1905
      %v1907 = vrot.slane %v1511, 2
      %v1908 = vsel %vm1883, %v1905, %v1907
      %v1909 = vrot.slane %v1512, 2
      %v1910 = vsel %vm1883, %v1907, %v1909
      %v1911 = vrot.slane %v1513, 2
      %v1912 = vsel %vm1883, %v1909, %v1911
      %v1913 = vrot.slane %v1514, 2
      %v1914 = vsel %vm1883, %v1911, %v1913
      %v1915 = vrot.slane %v1515, 2
      %v1916 = vsel %vm1883, %v1913, %v1915
      %v1917 = vrot.slane %v1516, 2
      %v1918 = vsel %vm1883, %v1915, %v1917
      %v1919 = vrot.slane %v1517, 2
      %v1920 = vsel %vm1883, %v1917, %v1919
      %v1922 = vsel %vm497, %v1886, 0
      %v1925 = vsel %vm497, %v1888, 0
      %v1928 = vsel %vm497, %v1890, 0
      %v1931 = vsel %vm497, %v1892, 0
      %v1934 = vsel %vm497, %v1894, 0
      %v1937 = vsel %vm497, %v1896, 0
      %v1940 = vsel %vm497, %v1898, 0
      %v1943 = vsel %vm497, %v1900, 0
      %v1946 = vsel %vm497, %v1902, 0
      %v1949 = vsel %vm497, %v1904, 0
      %v1952 = vsel %vm497, %v1906, 0
      %v1955 = vsel %vm497, %v1908, 0
      %v1958 = vsel %vm497, %v1910, 0
      %v1961 = vsel %vm497, %v1912, 0
      %v1964 = vsel %vm497, %v1914, 0
      %v1967 = vsel %vm497, %v1916, 0
      %v1970 = vsel %vm497, %v1918, 0
      %v1973 = vsel %vm497, %v1920, 0
      %v1976 = vsel %vm552, %v1879, 0
      %1978 = vmatpush.bf16.msra.mxu0 0
      %1979 = vmatpush.bf16.msra.mxu0 0
      %1980 = vmatpush.bf16.msra.mxu0 0
      %1981 = vmatpush.bf16.msra.mxu0 0
      %1982 = vmatpush.bf16.msra.mxu0 0
      %1983 = vmatpush.bf16.msra.mxu0 0
      %1984 = vmatpush.bf16.msra.mxu0 0
      %1985 = vmatpush.bf16.msra.mxu0 %v1976
      %1986 = vmatmul.bf16.gmra.mxu0 %v1922
      %v1987 = vpop.f32.mrf.mxu0
      %v1988 = vadd.f32 0.0, %v1987
      %v1989 = vpop.f32.mrf.mxu0
      %v1990 = vadd.f32 0.0, %v1989
      %1991 = vmatmul.bf16.gmra.mxu0 %v1925
      %v1992 = vpop.f32.mrf.mxu0
      %v1993 = vadd.f32 0.0, %v1992
      %v1994 = vpop.f32.mrf.mxu0
      %v1995 = vadd.f32 0.0, %v1994
      %1996 = vmatmul.bf16.gmra.mxu0 %v1928
      %v1997 = vpop.f32.mrf.mxu0
      %v1998 = vadd.f32 0.0, %v1997
      %v1999 = vpop.f32.mrf.mxu0
      %v2000 = vadd.f32 0.0, %v1999
      %2001 = vmatmul.bf16.gmra.mxu0 %v1931
      %v2002 = vpop.f32.mrf.mxu0
      %v2003 = vadd.f32 0.0, %v2002
      %v2004 = vpop.f32.mrf.mxu0
      %v2005 = vadd.f32 0.0, %v2004
      %2006 = vmatmul.bf16.gmra.mxu0 %v1934
      %v2007 = vpop.f32.mrf.mxu0
      %v2008 = vadd.f32 0.0, %v2007
      %v2009 = vpop.f32.mrf.mxu0
      %v2010 = vadd.f32 0.0, %v2009
      %2011 = vmatmul.bf16.gmra.mxu0 %v1937
      %v2012 = vpop.f32.mrf.mxu0
      %v2013 = vadd.f32 0.0, %v2012
      %v2014 = vpop.f32.mrf.mxu0
      %v2015 = vadd.f32 0.0, %v2014
      %2016 = vmatmul.bf16.gmra.mxu0 %v1940
      %v2017 = vpop.f32.mrf.mxu0
      %v2018 = vadd.f32 0.0, %v2017
      %v2019 = vpop.f32.mrf.mxu0
      %v2020 = vadd.f32 0.0, %v2019
      %2021 = vmatmul.bf16.gmra.mxu0 %v1943
      %v2022 = vpop.f32.mrf.mxu0
      %v2023 = vadd.f32 0.0, %v2022
      %v2024 = vpop.f32.mrf.mxu0
      %v2025 = vadd.f32 0.0, %v2024
      %2026 = vmatmul.bf16.gmra.mxu0 %v1946
      %v2027 = vpop.f32.mrf.mxu0
      %v2028 = vadd.f32 0.0, %v2027
      %v2029 = vpop.f32.mrf.mxu0
      %v2030 = vadd.f32 0.0, %v2029
      %2031 = vmatmul.bf16.gmra.mxu0 %v1949
      %v2032 = vpop.f32.mrf.mxu0
      %v2033 = vadd.f32 0.0, %v2032
      %v2034 = vpop.f32.mrf.mxu0
      %v2035 = vadd.f32 0.0, %v2034
      %2036 = vmatmul.bf16.gmra.mxu0 %v1952
      %v2037 = vpop.f32.mrf.mxu0
      %v2038 = vadd.f32 0.0, %v2037
      %v2039 = vpop.f32.mrf.mxu0
      %v2040 = vadd.f32 0.0, %v2039
      %2041 = vmatmul.bf16.gmra.mxu0 %v1955
      %v2042 = vpop.f32.mrf.mxu0
      %v2043 = vadd.f32 0.0, %v2042
      %v2044 = vpop.f32.mrf.mxu0
      %v2045 = vadd.f32 0.0, %v2044
      %2046 = vmatmul.bf16.gmra.mxu0 %v1958
      %v2047 = vpop.f32.mrf.mxu0
      %v2048 = vadd.f32 0.0, %v2047
      %v2049 = vpop.f32.mrf.mxu0
      %v2050 = vadd.f32 0.0, %v2049
      %2051 = vmatmul.bf16.gmra.mxu0 %v1961
      %v2052 = vpop.f32.mrf.mxu0
      %v2053 = vadd.f32 0.0, %v2052
      %v2054 = vpop.f32.mrf.mxu0
      %v2055 = vadd.f32 0.0, %v2054
      %2056 = vmatmul.bf16.gmra.mxu0 %v1964
      %v2057 = vpop.f32.mrf.mxu0
      %v2058 = vadd.f32 0.0, %v2057
      %v2059 = vpop.f32.mrf.mxu0
      %v2060 = vadd.f32 0.0, %v2059
      %2061 = vmatmul.bf16.gmra.mxu0 %v1967
      %v2062 = vpop.f32.mrf.mxu0
      %v2063 = vadd.f32 0.0, %v2062
      %v2064 = vpop.f32.mrf.mxu0
      %v2065 = vadd.f32 0.0, %v2064
      %2066 = vmatmul.bf16.gmra.mxu0 %v1970
      %v2067 = vpop.f32.mrf.mxu0
      %v2068 = vadd.f32 0.0, %v2067
      %v2069 = vpop.f32.mrf.mxu0
      %v2070 = vadd.f32 0.0, %v2069
      %2071 = vmatmul.bf16.gmra.mxu0 %v1973
      %v2072 = vpop.f32.mrf.mxu0
      %v2073 = vadd.f32 0.0, %v2072
      %v2074 = vpop.f32.mrf.mxu0
      %v2075 = vadd.f32 0.0, %v2074
      %2076 = vdwg.mxu0
      %v2077 = vadd.f32 %v1841, %v1988
      %v2078 = vadd.f32 %v1842, %v1990
      %v2079 = vadd.f32 %v1843, %v1993
      %v2080 = vadd.f32 %v1844, %v1995
      %v2081 = vadd.f32 %v1845, %v1998
      %v2082 = vadd.f32 %v1846, %v2000
      %v2083 = vadd.f32 %v1847, %v2003
      %v2084 = vadd.f32 %v1848, %v2005
      %v2085 = vadd.f32 %v1849, %v2008
      %v2086 = vadd.f32 %v1850, %v2010
      %v2087 = vadd.f32 %v1851, %v2013
      %v2088 = vadd.f32 %v1852, %v2015
      %v2089 = vadd.f32 %v1853, %v2018
      %v2090 = vadd.f32 %v1854, %v2020
      %v2091 = vadd.f32 %v1855, %v2023
      %v2092 = vadd.f32 %v1856, %v2025
      %v2093 = vadd.f32 %v1857, %v2028
      %v2094 = vadd.f32 %v1858, %v2030
      %v2095 = vadd.f32 %v1859, %v2033
      %v2096 = vadd.f32 %v1860, %v2035
      %v2097 = vadd.f32 %v1861, %v2038
      %v2098 = vadd.f32 %v1862, %v2040
      %v2099 = vadd.f32 %v1863, %v2043
      %v2100 = vadd.f32 %v1864, %v2045
      %v2101 = vadd.f32 %v1865, %v2048
      %v2102 = vadd.f32 %v1866, %v2050
      %v2103 = vadd.f32 %v1867, %v2053
      %v2104 = vadd.f32 %v1868, %v2055
      %v2105 = vadd.f32 %v1869, %v2058
      %v2106 = vadd.f32 %v1870, %v2060
      %v2107 = vadd.f32 %v1871, %v2063
      %v2108 = vadd.f32 %v1872, %v2065
      %v2109 = vadd.f32 %v1873, %v2068
      %v2110 = vadd.f32 %v1874, %v2070
      %v2111 = vadd.f32 %v1875, %v2073
      %v2112 = vadd.f32 %v1876, %v2075
      %v2113 = vld [vmem:[%s206 + $0x10] sm:$0xc]
      %v2114 = vld [vmem:[%s206 + $0x14] sm:$0xf]
      %v2115 = vld [vmem:[%s206 + $0x18] sm:$0xf]
      %v2116 = vld [vmem:[%s206 + $0x1c] sm:$0xf]
      %v2117 = vld [vmem:[%s206 + $0x20] sm:$0xf]
      %v2118 = vld [vmem:[%s206 + $0x24] sm:$0xf]
      %v2119 = vld [vmem:[%s206 + $0x28] sm:$0xf]
      %v2120 = vld [vmem:[%s206 + $0x2c] sm:$0xf]
      %v2121 = vld [vmem:[%s206 + $0x30] sm:$0xf]
      %v2122 = vld [vmem:[%s206 + $0x34] sm:$0xf]
      %v2123 = vld [vmem:[%s206 + $0x38] sm:$0xf]
      %v2124 = vld [vmem:[%s206 + $0x3c] sm:$0xf]
      %v2125 = vld [vmem:[%s206 + $0x40] sm:$0xf]
      %v2126 = vld [vmem:[%s206 + $0x44] sm:$0xf]
      %v2127 = vld [vmem:[%s206 + $0x48] sm:$0xf]
      %v2128 = vld [vmem:[%s206 + $0x4c] sm:$0xf]
      %v2129 = vld [vmem:[%s206 + $0x50] sm:$0xf]
      %v2130 = vld [vmem:[%s206 + $0x54] sm:$0xf]
      %v2131 = vld [vmem:[%s206 + $0x58] sm:$0xf]
      %v2132 = vld [vmem:[%s206 + $0x5c] sm:$0xf]
      %v2133 = vld [vmem:[%s206 + $0x60] sm:$0xf]
      %v2134 = vld [vmem:[%s206 + $0x64] sm:$0xf]
      %v2135 = vld [vmem:[%s206 + $0x68] sm:$0xf]
      %v2136 = vld [vmem:[%s206 + $0x6c] sm:$0xf]
      %v2137 = vld [vmem:[%s206 + $0x70] sm:$0xf]
      %v2138 = vld [vmem:[%s206 + $0x74] sm:$0xf]
      %v2139 = vld [vmem:[%s206 + $0x78] sm:$0xf]
      %v2140 = vld [vmem:[%s206 + $0x7c] sm:$0xf]
      %v2141 = vld [vmem:[%s206 + $0x80] sm:$0xf]
      %v2142 = vld [vmem:[%s206 + $0x84] sm:$0xf]
      %v2143 = vld [vmem:[%s206 + $0x88] sm:$0xf]
      %v2144 = vld [vmem:[%s206 + $0x8c] sm:$0xf]
      %v2145 = vld [vmem:[%s206 + $0x90] sm:$0xf]
      %v2146 = vld [vmem:[%s206 + $0x94] sm:$0xf]
      %v2147 = vld [vmem:[%s206 + $0x98] sm:$0xf]
      %v2148 = vld [vmem:[%s206 + $0x9c] sm:$0xf]
      %v2149 = vld [vmem:[%s206 + $0xa0] sm:$0x1]
      %s2150 = scalar_lea.vmem %s210, 12
      %v2151 = vld [vmem:[%s2150] sm:$0x3]
      %v2189 = vunpack.c.l.b16 %v2113
      %v2190 = vunpack.c.l.b16 %v2114
      %v2191 = vunpack.c.l.b16 %v2115
      %v2192 = vunpack.c.l.b16 %v2116
      %v2193 = vunpack.c.l.b16 %v2117
      %v2194 = vunpack.c.l.b16 %v2118
      %v2195 = vunpack.c.l.b16 %v2119
      %v2196 = vunpack.c.l.b16 %v2120
      %v2197 = vunpack.c.l.b16 %v2121
      %v2198 = vunpack.c.l.b16 %v2122
      %v2199 = vunpack.c.l.b16 %v2123
      %v2200 = vunpack.c.l.b16 %v2124
      %v2201 = vunpack.c.l.b16 %v2125
      %v2202 = vunpack.c.l.b16 %v2126
      %v2203 = vunpack.c.l.b16 %v2127
      %v2204 = vunpack.c.l.b16 %v2128
      %v2205 = vunpack.c.l.b16 %v2129
      %v2206 = vunpack.c.l.b16 %v2130
      %v2207 = vunpack.c.l.b16 %v2131
      %v2208 = vunpack.c.l.b16 %v2132
      %v2209 = vunpack.c.l.b16 %v2133
      %v2210 = vunpack.c.l.b16 %v2134
      %v2211 = vunpack.c.l.b16 %v2135
      %v2212 = vunpack.c.l.b16 %v2136
      %v2213 = vunpack.c.l.b16 %v2137
      %v2214 = vunpack.c.l.b16 %v2138
      %v2215 = vunpack.c.l.b16 %v2139
      %v2216 = vunpack.c.l.b16 %v2140
      %v2217 = vunpack.c.l.b16 %v2141
      %v2218 = vunpack.c.l.b16 %v2142
      %v2219 = vunpack.c.l.b16 %v2143
      %v2220 = vunpack.c.l.b16 %v2144
      %v2221 = vunpack.c.l.b16 %v2145
      %v2222 = vunpack.c.l.b16 %v2146
      %v2223 = vunpack.c.l.b16 %v2147
      %v2224 = vunpack.c.l.b16 %v2148
      %v2225 = vunpack.c.l.b16 %v2149
      %v2226 = vpack.c.b16 %v2190, %v2189
      %v2227 = vpack.c.b16 %v2192, %v2191
      %v2228 = vpack.c.b16 %v2194, %v2193
      %v2229 = vpack.c.b16 %v2196, %v2195
      %v2230 = vpack.c.b16 %v2198, %v2197
      %v2231 = vpack.c.b16 %v2200, %v2199
      %v2232 = vpack.c.b16 %v2202, %v2201
      %v2233 = vpack.c.b16 %v2204, %v2203
      %v2234 = vpack.c.b16 %v2206, %v2205
      %v2235 = vpack.c.b16 %v2208, %v2207
      %v2236 = vpack.c.b16 %v2210, %v2209
      %v2237 = vpack.c.b16 %v2212, %v2211
      %v2238 = vpack.c.b16 %v2214, %v2213
      %v2239 = vpack.c.b16 %v2216, %v2215
      %v2240 = vpack.c.b16 %v2218, %v2217
      %v2241 = vpack.c.b16 %v2220, %v2219
      %v2242 = vpack.c.b16 %v2222, %v2221
      %v2243 = vpack.c.b16 %v2224, %v2223
      %v2244 = vpack.c.b16 %v2225, %v2225
      %v2245 = vrot.slane %v2226, 2
      %v2246 = vrot.slane %v2227, 2
      %v2247 = vsel %vm1883, %v2245, %v2246
      %v2248 = vrot.slane %v2228, 2
      %v2249 = vsel %vm1883, %v2246, %v2248
      %v2250 = vrot.slane %v2229, 2
      %v2251 = vsel %vm1883, %v2248, %v2250
      %v2252 = vrot.slane %v2230, 2
      %v2253 = vsel %vm1883, %v2250, %v2252
      %v2254 = vrot.slane %v2231, 2
      %v2255 = vsel %vm1883, %v2252, %v2254
      %v2256 = vrot.slane %v2232, 2
      %v2257 = vsel %vm1883, %v2254, %v2256
      %v2258 = vrot.slane %v2233, 2
      %v2259 = vsel %vm1883, %v2256, %v2258
      %v2260 = vrot.slane %v2234, 2
      %v2261 = vsel %vm1883, %v2258, %v2260
      %v2262 = vrot.slane %v2235, 2
      %v2263 = vsel %vm1883, %v2260, %v2262
      %v2264 = vrot.slane %v2236, 2
      %v2265 = vsel %vm1883, %v2262, %v2264
      %v2266 = vrot.slane %v2237, 2
      %v2267 = vsel %vm1883, %v2264, %v2266
      %v2268 = vrot.slane %v2238, 2
      %v2269 = vsel %vm1883, %v2266, %v2268
      %v2270 = vrot.slane %v2239, 2
      %v2271 = vsel %vm1883, %v2268, %v2270
      %v2272 = vrot.slane %v2240, 2
      %v2273 = vsel %vm1883, %v2270, %v2272
      %v2274 = vrot.slane %v2241, 2
      %v2275 = vsel %vm1883, %v2272, %v2274
      %v2276 = vrot.slane %v2242, 2
      %v2277 = vsel %vm1883, %v2274, %v2276
      %v2278 = vrot.slane %v2243, 2
      %v2279 = vsel %vm1883, %v2276, %v2278
      %v2280 = vrot.slane %v2244, 2
      %v2281 = vsel %vm1883, %v2278, %v2280
      %v2283 = vsel %vm497, %v2247, 0
      %v2286 = vsel %vm497, %v2249, 0
      %v2289 = vsel %vm497, %v2251, 0
      %v2292 = vsel %vm497, %v2253, 0
      %v2295 = vsel %vm497, %v2255, 0
      %v2298 = vsel %vm497, %v2257, 0
      %v2301 = vsel %vm497, %v2259, 0
      %v2304 = vsel %vm497, %v2261, 0
      %v2307 = vsel %vm497, %v2263, 0
      %v2310 = vsel %vm497, %v2265, 0
      %v2313 = vsel %vm497, %v2267, 0
      %v2316 = vsel %vm497, %v2269, 0
      %v2319 = vsel %vm497, %v2271, 0
      %v2322 = vsel %vm497, %v2273, 0
      %v2325 = vsel %vm497, %v2275, 0
      %v2328 = vsel %vm497, %v2277, 0
      %v2331 = vsel %vm497, %v2279, 0
      %v2334 = vsel %vm497, %v2281, 0
      %v2337 = vsel %vm552, %v2151, 0
      %2339 = vmatpush.bf16.msra.mxu0 0
      %2340 = vmatpush.bf16.msra.mxu0 0
      %2341 = vmatpush.bf16.msra.mxu0 0
      %2342 = vmatpush.bf16.msra.mxu0 0
      %2343 = vmatpush.bf16.msra.mxu0 0
      %2344 = vmatpush.bf16.msra.mxu0 0
      %2345 = vmatpush.bf16.msra.mxu0 0
      %2346 = vmatpush.bf16.msra.mxu0 %v2337
      %2347 = vmatmul.bf16.gmra.mxu0 %v2283
      %v2348 = vpop.f32.mrf.mxu0
      %v2349 = vadd.f32 0.0, %v2348
      %v2350 = vpop.f32.mrf.mxu0
      %v2351 = vadd.f32 0.0, %v2350
      %2352 = vmatmul.bf16.gmra.mxu0 %v2286
      %v2353 = vpop.f32.mrf.mxu0
      %v2354 = vadd.f32 0.0, %v2353
      %v2355 = vpop.f32.mrf.mxu0
      %v2356 = vadd.f32 0.0, %v2355
      %2357 = vmatmul.bf16.gmra.mxu0 %v2289
      %v2358 = vpop.f32.mrf.mxu0
      %v2359 = vadd.f32 0.0, %v2358
      %v2360 = vpop.f32.mrf.mxu0
      %v2361 = vadd.f32 0.0, %v2360
      %2362 = vmatmul.bf16.gmra.mxu0 %v2292
      %v2363 = vpop.f32.mrf.mxu0
      %v2364 = vadd.f32 0.0, %v2363
      %v2365 = vpop.f32.mrf.mxu0
      %v2366 = vadd.f32 0.0, %v2365
      %2367 = vmatmul.bf16.gmra.mxu0 %v2295
      %v2368 = vpop.f32.mrf.mxu0
      %v2369 = vadd.f32 0.0, %v2368
      %v2370 = vpop.f32.mrf.mxu0
      %v2371 = vadd.f32 0.0, %v2370
      %2372 = vmatmul.bf16.gmra.mxu0 %v2298
      %v2373 = vpop.f32.mrf.mxu0
      %v2374 = vadd.f32 0.0, %v2373
      %v2375 = vpop.f32.mrf.mxu0
      %v2376 = vadd.f32 0.0, %v2375
      %2377 = vmatmul.bf16.gmra.mxu0 %v2301
      %v2378 = vpop.f32.mrf.mxu0
      %v2379 = vadd.f32 0.0, %v2378
      %v2380 = vpop.f32.mrf.mxu0
      %v2381 = vadd.f32 0.0, %v2380
      %2382 = vmatmul.bf16.gmra.mxu0 %v2304
      %v2383 = vpop.f32.mrf.mxu0
      %v2384 = vadd.f32 0.0, %v2383
      %v2385 = vpop.f32.mrf.mxu0
      %v2386 = vadd.f32 0.0, %v2385
      %2387 = vmatmul.bf16.gmra.mxu0 %v2307
      %v2388 = vpop.f32.mrf.mxu0
      %v2389 = vadd.f32 0.0, %v2388
      %v2390 = vpop.f32.mrf.mxu0
      %v2391 = vadd.f32 0.0, %v2390
      %2392 = vmatmul.bf16.gmra.mxu0 %v2310
      %v2393 = vpop.f32.mrf.mxu0
      %v2394 = vadd.f32 0.0, %v2393
      %v2395 = vpop.f32.mrf.mxu0
      %v2396 = vadd.f32 0.0, %v2395
      %2397 = vmatmul.bf16.gmra.mxu0 %v2313
      %v2398 = vpop.f32.mrf.mxu0
      %v2399 = vadd.f32 0.0, %v2398
      %v2400 = vpop.f32.mrf.mxu0
      %v2401 = vadd.f32 0.0, %v2400
      %2402 = vmatmul.bf16.gmra.mxu0 %v2316
      %v2403 = vpop.f32.mrf.mxu0
      %v2404 = vadd.f32 0.0, %v2403
      %v2405 = vpop.f32.mrf.mxu0
      %v2406 = vadd.f32 0.0, %v2405
      %2407 = vmatmul.bf16.gmra.mxu0 %v2319
      %v2408 = vpop.f32.mrf.mxu0
      %v2409 = vadd.f32 0.0, %v2408
      %v2410 = vpop.f32.mrf.mxu0
      %v2411 = vadd.f32 0.0, %v2410
      %2412 = vmatmul.bf16.gmra.mxu0 %v2322
      %v2413 = vpop.f32.mrf.mxu0
      %v2414 = vadd.f32 0.0, %v2413
      %v2415 = vpop.f32.mrf.mxu0
      %v2416 = vadd.f32 0.0, %v2415
      %2417 = vmatmul.bf16.gmra.mxu0 %v2325
      %v2418 = vpop.f32.mrf.mxu0
      %v2419 = vadd.f32 0.0, %v2418
      %v2420 = vpop.f32.mrf.mxu0
      %v2421 = vadd.f32 0.0, %v2420
      %2422 = vmatmul.bf16.gmra.mxu0 %v2328
      %v2423 = vpop.f32.mrf.mxu0
      %v2424 = vadd.f32 0.0, %v2423
      %v2425 = vpop.f32.mrf.mxu0
      %v2426 = vadd.f32 0.0, %v2425
      %2427 = vmatmul.bf16.gmra.mxu0 %v2331
      %v2428 = vpop.f32.mrf.mxu0
      %v2429 = vadd.f32 0.0, %v2428
      %v2430 = vpop.f32.mrf.mxu0
      %v2431 = vadd.f32 0.0, %v2430
      %2432 = vmatmul.bf16.gmra.mxu0 %v2334
      %v2433 = vpop.f32.mrf.mxu0
      %v2434 = vadd.f32 0.0, %v2433
      %v2435 = vpop.f32.mrf.mxu0
      %v2436 = vadd.f32 0.0, %v2435
      %2437 = vdwg.mxu0
      %v2438 = vadd.f32 %v2077, %v2349
      %v2439 = vadd.f32 %v2078, %v2351
      %v2440 = vadd.f32 %v2079, %v2354
      %v2441 = vadd.f32 %v2080, %v2356
      %v2442 = vadd.f32 %v2081, %v2359
      %v2443 = vadd.f32 %v2082, %v2361
      %v2444 = vadd.f32 %v2083, %v2364
      %v2445 = vadd.f32 %v2084, %v2366
      %v2446 = vadd.f32 %v2085, %v2369
      %v2447 = vadd.f32 %v2086, %v2371
      %v2448 = vadd.f32 %v2087, %v2374
      %v2449 = vadd.f32 %v2088, %v2376
      %v2450 = vadd.f32 %v2089, %v2379
      %v2451 = vadd.f32 %v2090, %v2381
      %v2452 = vadd.f32 %v2091, %v2384
      %v2453 = vadd.f32 %v2092, %v2386
      %v2454 = vadd.f32 %v2093, %v2389
      %v2455 = vadd.f32 %v2094, %v2391
      %v2456 = vadd.f32 %v2095, %v2394
      %v2457 = vadd.f32 %v2096, %v2396
      %v2458 = vadd.f32 %v2097, %v2399
      %v2459 = vadd.f32 %v2098, %v2401
      %v2460 = vadd.f32 %v2099, %v2404
      %v2461 = vadd.f32 %v2100, %v2406
      %v2462 = vadd.f32 %v2101, %v2409
      %v2463 = vadd.f32 %v2102, %v2411
      %v2464 = vadd.f32 %v2103, %v2414
      %v2465 = vadd.f32 %v2104, %v2416
      %v2466 = vadd.f32 %v2105, %v2419
      %v2467 = vadd.f32 %v2106, %v2421
      %v2468 = vadd.f32 %v2107, %v2424
      %v2469 = vadd.f32 %v2108, %v2426
      %v2470 = vadd.f32 %v2109, %v2429
      %v2471 = vadd.f32 %v2110, %v2431
      %v2472 = vadd.f32 %v2111, %v2434
      %v2473 = vadd.f32 %v2112, %v2436
      %v2474 = vld [vmem:[%s206 + $0xa0] sm:$0x3]
      %s2475 = scalar_lea.vmem %s210, 14
      %v2476 = vld [vmem:[%s2475] sm:$0x3]
      %v2478 = vunpack.c.l.b16 %v2474
      %v2479 = vpack.c.b16 %v2478, %v2478
      %vm2480 = vsmask.f32 5376
      %v2482 = vshrl.u32 %v2226, 16
      %v2484 = vrot.slane %v2482, 2
      %v2485 = vshll.u32 %v2226, 16
      %v2487 = vrot.slane %v2485, 3
      %v2488 = vor.u32 %v2484, %v2487
      %v2490 = vshrl.u32 %v2227, 16
      %v2492 = vrot.slane %v2490, 2
      %v2493 = vshll.u32 %v2227, 16
      %v2495 = vrot.slane %v2493, 3
      %v2496 = vor.u32 %v2492, %v2495
      %v2497 = vsel %vm2480, %v2488, %v2496
      %v2499 = vshrl.u32 %v2228, 16
      %v2501 = vrot.slane %v2499, 2
      %v2502 = vshll.u32 %v2228, 16
      %v2504 = vrot.slane %v2502, 3
      %v2505 = vor.u32 %v2501, %v2504
      %v2506 = vsel %vm2480, %v2496, %v2505
      %v2508 = vshrl.u32 %v2229, 16
      %v2510 = vrot.slane %v2508, 2
      %v2511 = vshll.u32 %v2229, 16
      %v2513 = vrot.slane %v2511, 3
      %v2514 = vor.u32 %v2510, %v2513
      %v2515 = vsel %vm2480, %v2505, %v2514
      %v2517 = vshrl.u32 %v2230, 16
      %v2519 = vrot.slane %v2517, 2
      %v2520 = vshll.u32 %v2230, 16
      %v2522 = vrot.slane %v2520, 3
      %v2523 = vor.u32 %v2519, %v2522
      %v2524 = vsel %vm2480, %v2514, %v2523
      %v2526 = vshrl.u32 %v2231, 16
      %v2528 = vrot.slane %v2526, 2
      %v2529 = vshll.u32 %v2231, 16
      %v2531 = vrot.slane %v2529, 3
      %v2532 = vor.u32 %v2528, %v2531
      %v2533 = vsel %vm2480, %v2523, %v2532
      %v2535 = vshrl.u32 %v2232, 16
      %v2537 = vrot.slane %v2535, 2
      %v2538 = vshll.u32 %v2232, 16
      %v2540 = vrot.slane %v2538, 3
      %v2541 = vor.u32 %v2537, %v2540
      %v2542 = vsel %vm2480, %v2532, %v2541
      %v2544 = vshrl.u32 %v2233, 16
      %v2546 = vrot.slane %v2544, 2
      %v2547 = vshll.u32 %v2233, 16
      %v2549 = vrot.slane %v2547, 3
      %v2550 = vor.u32 %v2546, %v2549
      %v2551 = vsel %vm2480, %v2541, %v2550
      %v2553 = vshrl.u32 %v2234, 16
      %v2555 = vrot.slane %v2553, 2
      %v2556 = vshll.u32 %v2234, 16
      %v2558 = vrot.slane %v2556, 3
      %v2559 = vor.u32 %v2555, %v2558
      %v2560 = vsel %vm2480, %v2550, %v2559
      %v2562 = vshrl.u32 %v2235, 16
      %v2564 = vrot.slane %v2562, 2
      %v2565 = vshll.u32 %v2235, 16
      %v2567 = vrot.slane %v2565, 3
      %v2568 = vor.u32 %v2564, %v2567
      %v2569 = vsel %vm2480, %v2559, %v2568
      %v2571 = vshrl.u32 %v2236, 16
      %v2573 = vrot.slane %v2571, 2
      %v2574 = vshll.u32 %v2236, 16
      %v2576 = vrot.slane %v2574, 3
      %v2577 = vor.u32 %v2573, %v2576
      %v2578 = vsel %vm2480, %v2568, %v2577
      %v2580 = vshrl.u32 %v2237, 16
      %v2582 = vrot.slane %v2580, 2
      %v2583 = vshll.u32 %v2237, 16
      %v2585 = vrot.slane %v2583, 3
      %v2586 = vor.u32 %v2582, %v2585
      %v2587 = vsel %vm2480, %v2577, %v2586
      %v2589 = vshrl.u32 %v2238, 16
      %v2591 = vrot.slane %v2589, 2
      %v2592 = vshll.u32 %v2238, 16
      %v2594 = vrot.slane %v2592, 3
      %v2595 = vor.u32 %v2591, %v2594
      %v2596 = vsel %vm2480, %v2586, %v2595
      %v2598 = vshrl.u32 %v2239, 16
      %v2600 = vrot.slane %v2598, 2
      %v2601 = vshll.u32 %v2239, 16
      %v2603 = vrot.slane %v2601, 3
      %v2604 = vor.u32 %v2600, %v2603
      %v2605 = vsel %vm2480, %v2595, %v2604
      %v2607 = vshrl.u32 %v2240, 16
      %v2609 = vrot.slane %v2607, 2
      %v2610 = vshll.u32 %v2240, 16
      %v2612 = vrot.slane %v2610, 3
      %v2613 = vor.u32 %v2609, %v2612
      %v2614 = vsel %vm2480, %v2604, %v2613
      %v2616 = vshrl.u32 %v2241, 16
      %v2618 = vrot.slane %v2616, 2
      %v2619 = vshll.u32 %v2241, 16
      %v2621 = vrot.slane %v2619, 3
      %v2622 = vor.u32 %v2618, %v2621
      %v2623 = vsel %vm2480, %v2613, %v2622
      %v2625 = vshrl.u32 %v2242, 16
      %v2627 = vrot.slane %v2625, 2
      %v2628 = vshll.u32 %v2242, 16
      %v2630 = vrot.slane %v2628, 3
      %v2631 = vor.u32 %v2627, %v2630
      %v2632 = vsel %vm2480, %v2622, %v2631
      %v2634 = vshrl.u32 %v2243, 16
      %v2636 = vrot.slane %v2634, 2
      %v2637 = vshll.u32 %v2243, 16
      %v2639 = vrot.slane %v2637, 3
      %v2640 = vor.u32 %v2636, %v2639
      %v2641 = vsel %vm2480, %v2631, %v2640
      %v2643 = vshrl.u32 %v2479, 16
      %v2645 = vrot.slane %v2643, 2
      %v2646 = vshll.u32 %v2479, 16
      %v2648 = vrot.slane %v2646, 3
      %v2649 = vor.u32 %v2645, %v2648
      %v2650 = vsel %vm2480, %v2640, %v2649
      %v2652 = vsel %vm497, %v2497, 0
      %v2655 = vsel %vm497, %v2506, 0
      %v2658 = vsel %vm497, %v2515, 0
      %v2661 = vsel %vm497, %v2524, 0
      %v2664 = vsel %vm497, %v2533, 0
      %v2667 = vsel %vm497, %v2542, 0
      %v2670 = vsel %vm497, %v2551, 0
      %v2673 = vsel %vm497, %v2560, 0
      %v2676 = vsel %vm497, %v2569, 0
      %v2679 = vsel %vm497, %v2578, 0
      %v2682 = vsel %vm497, %v2587, 0
      %v2685 = vsel %vm497, %v2596, 0
      %v2688 = vsel %vm497, %v2605, 0
      %v2691 = vsel %vm497, %v2614, 0
      %v2694 = vsel %vm497, %v2623, 0
      %v2697 = vsel %vm497, %v2632, 0
      %v2700 = vsel %vm497, %v2641, 0
      %v2703 = vsel %vm497, %v2650, 0
      %v2706 = vsel %vm552, %v2476, 0
      %2708 = vmatpush.bf16.msra.mxu0 0
      %2709 = vmatpush.bf16.msra.mxu0 0
      %2710 = vmatpush.bf16.msra.mxu0 0
      %2711 = vmatpush.bf16.msra.mxu0 0
      %2712 = vmatpush.bf16.msra.mxu0 0
      %2713 = vmatpush.bf16.msra.mxu0 0
      %2714 = vmatpush.bf16.msra.mxu0 0
      %2715 = vmatpush.bf16.msra.mxu0 %v2706
      %2716 = vmatmul.bf16.gmra.mxu0 %v2652
      %v2717 = vpop.f32.mrf.mxu0
      %v2718 = vadd.f32 0.0, %v2717
      %v2719 = vpop.f32.mrf.mxu0
      %v2720 = vadd.f32 0.0, %v2719
      %2721 = vmatmul.bf16.gmra.mxu0 %v2655
      %v2722 = vpop.f32.mrf.mxu0
      %v2723 = vadd.f32 0.0, %v2722
      %v2724 = vpop.f32.mrf.mxu0
      %v2725 = vadd.f32 0.0, %v2724
      %2726 = vmatmul.bf16.gmra.mxu0 %v2658
      %v2727 = vpop.f32.mrf.mxu0
      %v2728 = vadd.f32 0.0, %v2727
      %v2729 = vpop.f32.mrf.mxu0
      %v2730 = vadd.f32 0.0, %v2729
      %2731 = vmatmul.bf16.gmra.mxu0 %v2661
      %v2732 = vpop.f32.mrf.mxu0
      %v2733 = vadd.f32 0.0, %v2732
      %v2734 = vpop.f32.mrf.mxu0
      %v2735 = vadd.f32 0.0, %v2734
      %2736 = vmatmul.bf16.gmra.mxu0 %v2664
      %v2737 = vpop.f32.mrf.mxu0
      %v2738 = vadd.f32 0.0, %v2737
      %v2739 = vpop.f32.mrf.mxu0
      %v2740 = vadd.f32 0.0, %v2739
      %2741 = vmatmul.bf16.gmra.mxu0 %v2667
      %v2742 = vpop.f32.mrf.mxu0
      %v2743 = vadd.f32 0.0, %v2742
      %v2744 = vpop.f32.mrf.mxu0
      %v2745 = vadd.f32 0.0, %v2744
      %2746 = vmatmul.bf16.gmra.mxu0 %v2670
      %v2747 = vpop.f32.mrf.mxu0
      %v2748 = vadd.f32 0.0, %v2747
      %v2749 = vpop.f32.mrf.mxu0
      %v2750 = vadd.f32 0.0, %v2749
      %2751 = vmatmul.bf16.gmra.mxu0 %v2673
      %v2752 = vpop.f32.mrf.mxu0
      %v2753 = vadd.f32 0.0, %v2752
      %v2754 = vpop.f32.mrf.mxu0
      %v2755 = vadd.f32 0.0, %v2754
      %2756 = vmatmul.bf16.gmra.mxu0 %v2676
      %v2757 = vpop.f32.mrf.mxu0
      %v2758 = vadd.f32 0.0, %v2757
      %v2759 = vpop.f32.mrf.mxu0
      %v2760 = vadd.f32 0.0, %v2759
      %2761 = vmatmul.bf16.gmra.mxu0 %v2679
      %v2762 = vpop.f32.mrf.mxu0
      %v2763 = vadd.f32 0.0, %v2762
      %v2764 = vpop.f32.mrf.mxu0
      %v2765 = vadd.f32 0.0, %v2764
      %2766 = vmatmul.bf16.gmra.mxu0 %v2682
      %v2767 = vpop.f32.mrf.mxu0
      %v2768 = vadd.f32 0.0, %v2767
      %v2769 = vpop.f32.mrf.mxu0
      %v2770 = vadd.f32 0.0, %v2769
      %2771 = vmatmul.bf16.gmra.mxu0 %v2685
      %v2772 = vpop.f32.mrf.mxu0
      %v2773 = vadd.f32 0.0, %v2772
      %v2774 = vpop.f32.mrf.mxu0
      %v2775 = vadd.f32 0.0, %v2774
      %2776 = vmatmul.bf16.gmra.mxu0 %v2688
      %v2777 = vpop.f32.mrf.mxu0
      %v2778 = vadd.f32 0.0, %v2777
      %v2779 = vpop.f32.mrf.mxu0
      %v2780 = vadd.f32 0.0, %v2779
      %2781 = vmatmul.bf16.gmra.mxu0 %v2691
      %v2782 = vpop.f32.mrf.mxu0
      %v2783 = vadd.f32 0.0, %v2782
      %v2784 = vpop.f32.mrf.mxu0
      %v2785 = vadd.f32 0.0, %v2784
      %2786 = vmatmul.bf16.gmra.mxu0 %v2694
      %v2787 = vpop.f32.mrf.mxu0
      %v2788 = vadd.f32 0.0, %v2787
      %v2789 = vpop.f32.mrf.mxu0
      %v2790 = vadd.f32 0.0, %v2789
      %2791 = vmatmul.bf16.gmra.mxu0 %v2697
      %v2792 = vpop.f32.mrf.mxu0
      %v2793 = vadd.f32 0.0, %v2792
      %v2794 = vpop.f32.mrf.mxu0
      %v2795 = vadd.f32 0.0, %v2794
      %2796 = vmatmul.bf16.gmra.mxu0 %v2700
      %v2797 = vpop.f32.mrf.mxu0
      %v2798 = vadd.f32 0.0, %v2797
      %v2799 = vpop.f32.mrf.mxu0
      %v2800 = vadd.f32 0.0, %v2799
      %2801 = vmatmul.bf16.gmra.mxu0 %v2703
      %v2802 = vpop.f32.mrf.mxu0
      %v2803 = vadd.f32 0.0, %v2802
      %v2804 = vpop.f32.mrf.mxu0
      %v2805 = vadd.f32 0.0, %v2804
      %2806 = vdwg.mxu0
      %v2807 = vadd.f32 %v2438, %v2718
      %v2808 = vadd.f32 %v2439, %v2720
      %v2809 = vadd.f32 %v2440, %v2723
      %v2810 = vadd.f32 %v2441, %v2725
      %v2811 = vadd.f32 %v2442, %v2728
      %v2812 = vadd.f32 %v2443, %v2730
      %v2813 = vadd.f32 %v2444, %v2733
      %v2814 = vadd.f32 %v2445, %v2735
      %v2815 = vadd.f32 %v2446, %v2738
      %v2816 = vadd.f32 %v2447, %v2740
      %v2817 = vadd.f32 %v2448, %v2743
      %v2818 = vadd.f32 %v2449, %v2745
      %v2819 = vadd.f32 %v2450, %v2748
      %v2820 = vadd.f32 %v2451, %v2750
      %v2821 = vadd.f32 %v2452, %v2753
      %v2822 = vadd.f32 %v2453, %v2755
      %v2823 = vadd.f32 %v2454, %v2758
      %v2824 = vadd.f32 %v2455, %v2760
      %v2825 = vadd.f32 %v2456, %v2763
      %v2826 = vadd.f32 %v2457, %v2765
      %v2827 = vadd.f32 %v2458, %v2768
      %v2828 = vadd.f32 %v2459, %v2770
      %v2829 = vadd.f32 %v2460, %v2773
      %v2830 = vadd.f32 %v2461, %v2775
      %v2831 = vadd.f32 %v2462, %v2778
      %v2832 = vadd.f32 %v2463, %v2780
      %v2833 = vadd.f32 %v2464, %v2783
      %v2834 = vadd.f32 %v2465, %v2785
      %v2835 = vadd.f32 %v2466, %v2788
      %v2836 = vadd.f32 %v2467, %v2790
      %v2837 = vadd.f32 %v2468, %v2793
      %v2838 = vadd.f32 %v2469, %v2795
      %v2839 = vadd.f32 %v2470, %v2798
      %v2840 = vadd.f32 %v2471, %v2800
      %v2841 = vadd.f32 %v2472, %v2803
      %v2842 = vadd.f32 %v2473, %v2805
      %v2843 = vld [vmem:[%s206 + $0x10] sm:$0x8]
      %s2844 = scalar_lea.vmem %s210, 16
      %v2845 = vld [vmem:[%s2844] sm:$0x3]
      %v2847 = vunpack.c.l.b16 %v2843
      %v2848 = vpack.c.b16 %v2190, %v2847
      %vm2849 = vcmask 1044480
      %v2850 = vrot.slane %v2848, 3
      %v2851 = vrot.slane %v2227, 3
      %v2852 = vsel %vm2849, %v2850, %v2851
      %v2853 = vrot.slane %v2228, 3
      %v2854 = vsel %vm2849, %v2851, %v2853
      %v2855 = vrot.slane %v2229, 3
      %v2856 = vsel %vm2849, %v2853, %v2855
      %v2857 = vrot.slane %v2230, 3
      %v2858 = vsel %vm2849, %v2855, %v2857
      %v2859 = vrot.slane %v2231, 3
      %v2860 = vsel %vm2849, %v2857, %v2859
      %v2861 = vrot.slane %v2232, 3
      %v2862 = vsel %vm2849, %v2859, %v2861
      %v2863 = vrot.slane %v2233, 3
      %v2864 = vsel %vm2849, %v2861, %v2863
      %v2865 = vrot.slane %v2234, 3
      %v2866 = vsel %vm2849, %v2863, %v2865
      %v2867 = vrot.slane %v2235, 3
      %v2868 = vsel %vm2849, %v2865, %v2867
      %v2869 = vrot.slane %v2236, 3
      %v2870 = vsel %vm2849, %v2867, %v2869
      %v2871 = vrot.slane %v2237, 3
      %v2872 = vsel %vm2849, %v2869, %v2871
      %v2873 = vrot.slane %v2238, 3
      %v2874 = vsel %vm2849, %v2871, %v2873
      %v2875 = vrot.slane %v2239, 3
      %v2876 = vsel %vm2849, %v2873, %v2875
      %v2877 = vrot.slane %v2240, 3
      %v2878 = vsel %vm2849, %v2875, %v2877
      %v2879 = vrot.slane %v2241, 3
      %v2880 = vsel %vm2849, %v2877, %v2879
      %v2881 = vrot.slane %v2242, 3
      %v2882 = vsel %vm2849, %v2879, %v2881
      %v2883 = vrot.slane %v2243, 3
      %v2884 = vsel %vm2849, %v2881, %v2883
      %v2885 = vrot.slane %v2479, 3
      %v2886 = vsel %vm2849, %v2883, %v2885
      %v2888 = vsel %vm497, %v2852, 0
      %v2891 = vsel %vm497, %v2854, 0
      %v2894 = vsel %vm497, %v2856, 0
      %v2897 = vsel %vm497, %v2858, 0
      %v2900 = vsel %vm497, %v2860, 0
      %v2903 = vsel %vm497, %v2862, 0
      %v2906 = vsel %vm497, %v2864, 0
      %v2909 = vsel %vm497, %v2866, 0
      %v2912 = vsel %vm497, %v2868, 0
      %v2915 = vsel %vm497, %v2870, 0
      %v2918 = vsel %vm497, %v2872, 0
      %v2921 = vsel %vm497, %v2874, 0
      %v2924 = vsel %vm497, %v2876, 0
      %v2927 = vsel %vm497, %v2878, 0
      %v2930 = vsel %vm497, %v2880, 0
      %v2933 = vsel %vm497, %v2882, 0
      %v2936 = vsel %vm497, %v2884, 0
      %v2939 = vsel %vm497, %v2886, 0
      %v2942 = vsel %vm552, %v2845, 0
      %2944 = vmatpush.bf16.msra.mxu0 0
      %2945 = vmatpush.bf16.msra.mxu0 0
      %2946 = vmatpush.bf16.msra.mxu0 0
      %2947 = vmatpush.bf16.msra.mxu0 0
      %2948 = vmatpush.bf16.msra.mxu0 0
      %2949 = vmatpush.bf16.msra.mxu0 0
      %2950 = vmatpush.bf16.msra.mxu0 0
      %2951 = vmatpush.bf16.msra.mxu0 %v2942
      %2952 = vmatmul.bf16.gmra.mxu0 %v2888
      %v2953 = vpop.f32.mrf.mxu0
      %v2954 = vadd.f32 0.0, %v2953
      %v2955 = vpop.f32.mrf.mxu0
      %v2956 = vadd.f32 0.0, %v2955
      %2957 = vmatmul.bf16.gmra.mxu0 %v2891
      %v2958 = vpop.f32.mrf.mxu0
      %v2959 = vadd.f32 0.0, %v2958
      %v2960 = vpop.f32.mrf.mxu0
      %v2961 = vadd.f32 0.0, %v2960
      %2962 = vmatmul.bf16.gmra.mxu0 %v2894
      %v2963 = vpop.f32.mrf.mxu0
      %v2964 = vadd.f32 0.0, %v2963
      %v2965 = vpop.f32.mrf.mxu0
      %v2966 = vadd.f32 0.0, %v2965
      %2967 = vmatmul.bf16.gmra.mxu0 %v2897
      %v2968 = vpop.f32.mrf.mxu0
      %v2969 = vadd.f32 0.0, %v2968
      %v2970 = vpop.f32.mrf.mxu0
      %v2971 = vadd.f32 0.0, %v2970
      %2972 = vmatmul.bf16.gmra.mxu0 %v2900
      %v2973 = vpop.f32.mrf.mxu0
      %v2974 = vadd.f32 0.0, %v2973
      %v2975 = vpop.f32.mrf.mxu0
      %v2976 = vadd.f32 0.0, %v2975
      %2977 = vmatmul.bf16.gmra.mxu0 %v2903
      %v2978 = vpop.f32.mrf.mxu0
      %v2979 = vadd.f32 0.0, %v2978
      %v2980 = vpop.f32.mrf.mxu0
      %v2981 = vadd.f32 0.0, %v2980
      %2982 = vmatmul.bf16.gmra.mxu0 %v2906
      %v2983 = vpop.f32.mrf.mxu0
      %v2984 = vadd.f32 0.0, %v2983
      %v2985 = vpop.f32.mrf.mxu0
      %v2986 = vadd.f32 0.0, %v2985
      %2987 = vmatmul.bf16.gmra.mxu0 %v2909
      %v2988 = vpop.f32.mrf.mxu0
      %v2989 = vadd.f32 0.0, %v2988
      %v2990 = vpop.f32.mrf.mxu0
      %v2991 = vadd.f32 0.0, %v2990
      %2992 = vmatmul.bf16.gmra.mxu0 %v2912
      %v2993 = vpop.f32.mrf.mxu0
      %v2994 = vadd.f32 0.0, %v2993
      %v2995 = vpop.f32.mrf.mxu0
      %v2996 = vadd.f32 0.0, %v2995
      %2997 = vmatmul.bf16.gmra.mxu0 %v2915
      %v2998 = vpop.f32.mrf.mxu0
      %v2999 = vadd.f32 0.0, %v2998
      %v3000 = vpop.f32.mrf.mxu0
      %v3001 = vadd.f32 0.0, %v3000
      %3002 = vmatmul.bf16.gmra.mxu0 %v2918
      %v3003 = vpop.f32.mrf.mxu0
      %v3004 = vadd.f32 0.0, %v3003
      %v3005 = vpop.f32.mrf.mxu0
      %v3006 = vadd.f32 0.0, %v3005
      %3007 = vmatmul.bf16.gmra.mxu0 %v2921
      %v3008 = vpop.f32.mrf.mxu0
      %v3009 = vadd.f32 0.0, %v3008
      %v3010 = vpop.f32.mrf.mxu0
      %v3011 = vadd.f32 0.0, %v3010
      %3012 = vmatmul.bf16.gmra.mxu0 %v2924
      %v3013 = vpop.f32.mrf.mxu0
      %v3014 = vadd.f32 0.0, %v3013
      %v3015 = vpop.f32.mrf.mxu0
      %v3016 = vadd.f32 0.0, %v3015
      %3017 = vmatmul.bf16.gmra.mxu0 %v2927
      %v3018 = vpop.f32.mrf.mxu0
      %v3019 = vadd.f32 0.0, %v3018
      %v3020 = vpop.f32.mrf.mxu0
      %v3021 = vadd.f32 0.0, %v3020
      %3022 = vmatmul.bf16.gmra.mxu0 %v2930
      %v3023 = vpop.f32.mrf.mxu0
      %v3024 = vadd.f32 0.0, %v3023
      %v3025 = vpop.f32.mrf.mxu0
      %v3026 = vadd.f32 0.0, %v3025
      %3027 = vmatmul.bf16.gmra.mxu0 %v2933
      %v3028 = vpop.f32.mrf.mxu0
      %v3029 = vadd.f32 0.0, %v3028
      %v3030 = vpop.f32.mrf.mxu0
      %v3031 = vadd.f32 0.0, %v3030
      %3032 = vmatmul.bf16.gmra.mxu0 %v2936
      %v3033 = vpop.f32.mrf.mxu0
      %v3034 = vadd.f32 0.0, %v3033
      %v3035 = vpop.f32.mrf.mxu0
      %v3036 = vadd.f32 0.0, %v3035
      %3037 = vmatmul.bf16.gmra.mxu0 %v2939
      %v3038 = vpop.f32.mrf.mxu0
      %v3039 = vadd.f32 0.0, %v3038
      %v3040 = vpop.f32.mrf.mxu0
      %v3041 = vadd.f32 0.0, %v3040
      %3042 = vdwg.mxu0
      %v3043 = vadd.f32 %v2807, %v2954
      %v3044 = vadd.f32 %v2808, %v2956
      %v3045 = vadd.f32 %v2809, %v2959
      %v3046 = vadd.f32 %v2810, %v2961
      %v3047 = vadd.f32 %v2811, %v2964
      %v3048 = vadd.f32 %v2812, %v2966
      %v3049 = vadd.f32 %v2813, %v2969
      %v3050 = vadd.f32 %v2814, %v2971
      %v3051 = vadd.f32 %v2815, %v2974
      %v3052 = vadd.f32 %v2816, %v2976
      %v3053 = vadd.f32 %v2817, %v2979
      %v3054 = vadd.f32 %v2818, %v2981
      %v3055 = vadd.f32 %v2819, %v2984
      %v3056 = vadd.f32 %v2820, %v2986
      %v3057 = vadd.f32 %v2821, %v2989
      %v3058 = vadd.f32 %v2822, %v2991
      %v3059 = vadd.f32 %v2823, %v2994
      %v3060 = vadd.f32 %v2824, %v2996
      %v3061 = vadd.f32 %v2825, %v2999
      %v3062 = vadd.f32 %v2826, %v3001
      %v3063 = vadd.f32 %v2827, %v3004
      %v3064 = vadd.f32 %v2828, %v3006
      %v3065 = vadd.f32 %v2829, %v3009
      %v3066 = vadd.f32 %v2830, %v3011
      %v3067 = vadd.f32 %v2831, %v3014
      %v3068 = vadd.f32 %v2832, %v3016
      %v3069 = vadd.f32 %v2833, %v3019
      %v3070 = vadd.f32 %v2834, %v3021
      %v3071 = vadd.f32 %v2835, %v3024
      %v3072 = vadd.f32 %v2836, %v3026
      %v3073 = vadd.f32 %v2837, %v3029
      %v3074 = vadd.f32 %v2838, %v3031
      %v3075 = vadd.f32 %v2839, %v3034
      %v3076 = vadd.f32 %v2840, %v3036
      %v3077 = vadd.f32 %v2841, %v3039
      %v3078 = vadd.f32 %v2842, %v3041
      %v3079 = vld [vmem:[%s213] sm:$0x1]
      %v3081 = vperm.slane %v3079, 0
      %v3083 = vadd.f32 %v3043, %v3081
      %v3084 = vadd.f32 %v3044, %v3081
      %v3085 = vadd.f32 %v3045, %v3081
      %v3086 = vadd.f32 %v3046, %v3081
      %v3087 = vadd.f32 %v3047, %v3081
      %v3088 = vadd.f32 %v3048, %v3081
      %v3089 = vadd.f32 %v3049, %v3081
      %v3090 = vadd.f32 %v3050, %v3081
      %v3091 = vadd.f32 %v3051, %v3081
      %v3092 = vadd.f32 %v3052, %v3081
      %v3093 = vadd.f32 %v3053, %v3081
      %v3094 = vadd.f32 %v3054, %v3081
      %v3095 = vadd.f32 %v3055, %v3081
      %v3096 = vadd.f32 %v3056, %v3081
      %v3097 = vadd.f32 %v3057, %v3081
      %v3098 = vadd.f32 %v3058, %v3081
      %v3099 = vadd.f32 %v3059, %v3081
      %v3100 = vadd.f32 %v3060, %v3081
      %v3101 = vadd.f32 %v3061, %v3081
      %v3102 = vadd.f32 %v3062, %v3081
      %v3103 = vadd.f32 %v3063, %v3081
      %v3104 = vadd.f32 %v3064, %v3081
      %v3105 = vadd.f32 %v3065, %v3081
      %v3106 = vadd.f32 %v3066, %v3081
      %v3107 = vadd.f32 %v3067, %v3081
      %v3108 = vadd.f32 %v3068, %v3081
      %v3109 = vadd.f32 %v3069, %v3081
      %v3110 = vadd.f32 %v3070, %v3081
      %v3111 = vadd.f32 %v3071, %v3081
      %v3112 = vadd.f32 %v3072, %v3081
      %v3113 = vadd.f32 %v3073, %v3081
      %v3114 = vadd.f32 %v3074, %v3081
      %v3115 = vadd.f32 %v3075, %v3081
      %v3116 = vadd.f32 %v3076, %v3081
      %v3117 = vadd.f32 %v3077, %v3081
      %v3118 = vadd.f32 %v3078, %v3081
      %v3119 = vmax.f32 %v3083, 0.0
      %v3120 = vmax.f32 %v3084, 0.0
      %v3121 = vmax.f32 %v3085, 0.0
      %v3122 = vmax.f32 %v3086, 0.0
      %v3123 = vmax.f32 %v3087, 0.0
      %v3124 = vmax.f32 %v3088, 0.0
      %v3125 = vmax.f32 %v3089, 0.0
      %v3126 = vmax.f32 %v3090, 0.0
      %v3127 = vmax.f32 %v3091, 0.0
      %v3128 = vmax.f32 %v3092, 0.0
      %v3129 = vmax.f32 %v3093, 0.0
      %v3130 = vmax.f32 %v3094, 0.0
      %v3131 = vmax.f32 %v3095, 0.0
      %v3132 = vmax.f32 %v3096, 0.0
      %v3133 = vmax.f32 %v3097, 0.0
      %v3134 = vmax.f32 %v3098, 0.0
      %v3135 = vmax.f32 %v3099, 0.0
      %v3136 = vmax.f32 %v3100, 0.0
      %v3137 = vmax.f32 %v3101, 0.0
      %v3138 = vmax.f32 %v3102, 0.0
      %v3139 = vmax.f32 %v3103, 0.0
      %v3140 = vmax.f32 %v3104, 0.0
      %v3141 = vmax.f32 %v3105, 0.0
      %v3142 = vmax.f32 %v3106, 0.0
      %v3143 = vmax.f32 %v3107, 0.0
      %v3144 = vmax.f32 %v3108, 0.0
      %v3145 = vmax.f32 %v3109, 0.0
      %v3146 = vmax.f32 %v3110, 0.0
      %v3147 = vmax.f32 %v3111, 0.0
      %v3148 = vmax.f32 %v3112, 0.0
      %v3149 = vmax.f32 %v3113, 0.0
      %v3150 = vmax.f32 %v3114, 0.0
      %v3151 = vmax.f32 %v3115, 0.0
      %v3152 = vmax.f32 %v3116, 0.0
      %v3153 = vmax.f32 %v3117, 0.0
      %v3154 = vmax.f32 %v3118, 0.0
      %v3155 = vpack.c.bf16 %v3119, %v3119
      %v3156 = vpack.c.bf16 %v3120, %v3120
      %v3157 = vpack.c.bf16 %v3121, %v3121
      %v3158 = vpack.c.bf16 %v3122, %v3122
      %v3159 = vpack.c.bf16 %v3123, %v3123
      %v3160 = vpack.c.bf16 %v3124, %v3124
      %v3161 = vpack.c.bf16 %v3125, %v3125
      %v3162 = vpack.c.bf16 %v3126, %v3126
      %v3163 = vpack.c.bf16 %v3127, %v3127
      %v3164 = vpack.c.bf16 %v3128, %v3128
      %v3165 = vpack.c.bf16 %v3129, %v3129
      %v3166 = vpack.c.bf16 %v3130, %v3130
      %v3167 = vpack.c.bf16 %v3131, %v3131
      %v3168 = vpack.c.bf16 %v3132, %v3132
      %v3169 = vpack.c.bf16 %v3133, %v3133
      %v3170 = vpack.c.bf16 %v3134, %v3134
      %v3171 = vpack.c.bf16 %v3135, %v3135
      %v3172 = vpack.c.bf16 %v3136, %v3136
      %v3173 = vpack.c.bf16 %v3137, %v3137
      %v3174 = vpack.c.bf16 %v3138, %v3138
      %v3175 = vpack.c.bf16 %v3139, %v3139
      %v3176 = vpack.c.bf16 %v3140, %v3140
      %v3177 = vpack.c.bf16 %v3141, %v3141
      %v3178 = vpack.c.bf16 %v3142, %v3142
      %v3179 = vpack.c.bf16 %v3143, %v3143
      %v3180 = vpack.c.bf16 %v3144, %v3144
      %v3181 = vpack.c.bf16 %v3145, %v3145
      %v3182 = vpack.c.bf16 %v3146, %v3146
      %v3183 = vpack.c.bf16 %v3147, %v3147
      %v3184 = vpack.c.bf16 %v3148, %v3148
      %v3185 = vpack.c.bf16 %v3149, %v3149
      %v3186 = vpack.c.bf16 %v3150, %v3150
      %v3187 = vpack.c.bf16 %v3151, %v3151
      %v3188 = vpack.c.bf16 %v3152, %v3152
      %v3189 = vpack.c.bf16 %v3153, %v3153
      %v3190 = vpack.c.bf16 %v3154, %v3154
      %vm3191 = vcmask 27648
      %3192 = vst.msk [vmem:[%s221] sm:$0xf] %vm3191, %v3155
      %3193 = vst.msk [vmem:[%s221 + $0x4] sm:$0xf] %vm3191, %v3156
      %3194 = vst.msk [vmem:[%s221 + $0x8] sm:$0xf] %vm3191, %v3157
      %3195 = vst.msk [vmem:[%s221 + $0xc] sm:$0xf] %vm3191, %v3158
      %3196 = vst.msk [vmem:[%s221 + $0x10] sm:$0xf] %vm3191, %v3159
      %3197 = vst.msk [vmem:[%s221 + $0x14] sm:$0xf] %vm3191, %v3160
      %3198 = vst.msk [vmem:[%s221 + $0x18] sm:$0xf] %vm3191, %v3161
      %3199 = vst.msk [vmem:[%s221 + $0x1c] sm:$0xf] %vm3191, %v3162
      %3200 = vst.msk [vmem:[%s221 + $0x20] sm:$0xf] %vm3191, %v3163
      %3201 = vst.msk [vmem:[%s221 + $0x24] sm:$0xf] %vm3191, %v3164
      %3202 = vst.msk [vmem:[%s221 + $0x28] sm:$0xf] %vm3191, %v3165
      %3203 = vst.msk [vmem:[%s221 + $0x2c] sm:$0xf] %vm3191, %v3166
      %3204 = vst.msk [vmem:[%s221 + $0x30] sm:$0xf] %vm3191, %v3167
      %3205 = vst.msk [vmem:[%s221 + $0x34] sm:$0xf] %vm3191, %v3168
      %3206 = vst.msk [vmem:[%s221 + $0x38] sm:$0xf] %vm3191, %v3169
      %3207 = vst.msk [vmem:[%s221 + $0x3c] sm:$0xf] %vm3191, %v3170
      %3208 = vst.msk [vmem:[%s221 + $0x40] sm:$0xf] %vm3191, %v3171
      %3209 = vst.msk [vmem:[%s221 + $0x44] sm:$0xf] %vm3191, %v3172
      %3210 = vst.msk [vmem:[%s221 + $0x48] sm:$0xf] %vm3191, %v3173
      %3211 = vst.msk [vmem:[%s221 + $0x4c] sm:$0xf] %vm3191, %v3174
      %3212 = vst.msk [vmem:[%s221 + $0x50] sm:$0xf] %vm3191, %v3175
      %3213 = vst.msk [vmem:[%s221 + $0x54] sm:$0xf] %vm3191, %v3176
      %3214 = vst.msk [vmem:[%s221 + $0x58] sm:$0xf] %vm3191, %v3177
      %3215 = vst.msk [vmem:[%s221 + $0x5c] sm:$0xf] %vm3191, %v3178
      %3216 = vst.msk [vmem:[%s221 + $0x60] sm:$0xf] %vm3191, %v3179
      %3217 = vst.msk [vmem:[%s221 + $0x64] sm:$0xf] %vm3191, %v3180
      %3218 = vst.msk [vmem:[%s221 + $0x68] sm:$0xf] %vm3191, %v3181
      %3219 = vst.msk [vmem:[%s221 + $0x6c] sm:$0xf] %vm3191, %v3182
      %3220 = vst.msk [vmem:[%s221 + $0x70] sm:$0xf] %vm3191, %v3183
      %3221 = vst.msk [vmem:[%s221 + $0x74] sm:$0xf] %vm3191, %v3184
      %3222 = vst.msk [vmem:[%s221 + $0x78] sm:$0xf] %vm3191, %v3185
      %3223 = vst.msk [vmem:[%s221 + $0x7c] sm:$0xf] %vm3191, %v3186
      %3224 = vst.msk [vmem:[%s221 + $0x80] sm:$0xf] %vm3191, %v3187
      %3225 = vst.msk [vmem:[%s221 + $0x84] sm:$0xf] %vm3191, %v3188
      %3226 = vst.msk [vmem:[%s221 + $0x88] sm:$0xf] %vm3191, %v3189
      %vm3227 = vcmask 26624
      %3228 = vst.msk [vmem:[%s221 + $0x8c] sm:$0x7] %vm3227, %v3190
      %p3229 = scmp.lt.s32.totalorder %s18, 1
      %s3230 = scalar_select %p3229, %s18, 1
      %p3231 = scmp.lt.s32.totalorder %s19, 0
      %s3232 = scalar_select %p3231, %s19, 0
      %s3233 = smul.addr %s3230, 36
      %s3234 = sadd.s32 %s3232, %s3233
      %s3235 = smul.addr %s3234, 4
      %s3236 = scalar_lea.vmem %s3, %s3235
      // Predicated region
      $region33: #{bottleneck_forward.4} parent=31 // pred_check
        %p3237 = pneg %p124
      $region34: #{bottleneck_forward.4} parent=31 // pred_check_branch
        %3239 = sbr.rel (%p3237) target = $region36
      $region35: #{bottleneck_forward.4} parent=31 // pred_region
        _
      $region36: #{bottleneck_forward.4} parent=31 // pred_fallthru
        _
    $region32: #{bottleneck_forward.4} parent=5 // pred_fallthru
      _
    %p3240 = scmp.le.s32.totalorder 2, %s9
    // Predicated region
    $region37: #{bottleneck_forward.4} parent=5 // pred_check
      %p3241 = pneg %p3240
    $region38: #{bottleneck_forward.4} parent=5 // pred_check_branch
      %3243 = sbr.rel (%p3241) target = $region40
    $region39: #{bottleneck_forward.4} parent=5 // pred_region
      %s3244 = ssub.s32 %s9, 2
      // Predicated region
      $region41: #{bottleneck_forward.4} parent=39 // pred_check
        %p3245 = pneg %p130
      $region42: #{bottleneck_forward.4} parent=39 // pred_check_branch
        %3247 = sbr.rel (%p3245) target = $region44
      $region43: #{bottleneck_forward.4} parent=39 // pred_region
        %p3248 = scmp.lt.s32.totalorder %s20, 1
        %s3249 = scalar_select %p3248, %s20, 1
        %p3250 = scmp.lt.s32.totalorder %s21, 0
        %s3251 = scalar_select %p3250, %s21, 0
        %s3252 = smul.addr %s3249, 36
        %s3253 = sadd.s32 %s3251, %s3252
        %s3254 = smul.addr %s3253, 4
        %s3255 = scalar_lea.vmem %s3, %s3254
      $region44: #{bottleneck_forward.4} parent=39 // pred_fallthru
        _
    $region40: #{bottleneck_forward.4} parent=5 // pred_fallthru
      _
  $region6: #{bottleneck_forward.4} parent=0 // loop_footer
    %s13 = sadd.s32 1, %s9
  $region7: #{bottleneck_forward.4} parent=0 // loop_footer_branch
    %8 = sbr.rel target = $region3
  $region8: #{bottleneck_forward.4} parent=0 // loop_exit
    _

</llo_original>
